<compile_context>
chip_gen: v7x
topology: tpu7x:2x2x1
jax: 0.10.0
libtpu: 0.0.40
codegen_flags: <defaults>
</compile_context>

<pallas_src>
import functools
import math

import jax
import jax.numpy as jnp
from jax.experimental import pallas as pl
from jax.experimental.pallas import tpu as pltpu


# --------------------------- in-kernel math helpers -------------------------- #

def _ln_rows(x, g, b, eps):
    """Row-wise LayerNorm over the last dim (f32 statistics)."""
    m = jnp.mean(x, axis=-1, keepdims=True)
    var = jnp.mean(jnp.square(x - m), axis=-1, keepdims=True)
    return (x - m) * jax.lax.rsqrt(var + eps) * g + b


def _gelu(x):
    c = math.sqrt(2.0 / math.pi)
    return 0.5 * x * (1.0 + jnp.tanh(c * (x + 0.044715 * x * x * x)))


# ----------------------- fused transformer-layer kernel ---------------------- #

def _layer_kernel(bias_ref, x_ref, wqkv_ref, bqkv_ref, wo_ref, bo_ref,
                  ln1g_ref, ln1b_ref, w1_ref, b1_ref, w2_ref, b2_ref,
                  ln2g_ref, ln2b_ref, *rest,
                  S, D, nH, Dh, eps, apply_input_ln, fuse_classifier):
    # Optional trailing refs (static flags decide the signature per layer).
    idx = 0
    if apply_input_ln:
        lnin_g_ref, lnin_b_ref = rest[idx], rest[idx + 1]
        idx += 2
    if fuse_classifier:
        cw1_ref, cb1_ref, cw2_ref, cb2_ref = rest[idx:idx + 4]
        idx += 4
    o_ref = rest[idx]

    b = pl.program_id(0)
    mm = jnp.bfloat16
    scale = 1.0 / math.sqrt(Dh)

    # x_ref already IS the per-batch (S, D) tile (streamed by BlockSpec).
    x = x_ref[...].astype(jnp.float32)
    if apply_input_ln:                                         # embedding LN (layer 0)
        x = _ln_rows(x, lnin_g_ref[...], lnin_b_ref[...], eps)

    bias_b = bias_ref[pl.ds(b, 1), :]                          # [1, S] additive mask

    # Fused QKV projection: one wide-N matmul, bf16 operands, f32 accumulation.
    qkv = jnp.dot(x.astype(mm), wqkv_ref[...],
                  preferred_element_type=jnp.float32) + bqkv_ref[...]   # [S, 3D]

    heads = []
    for h in range(nH):                                        # static, small nH
        q = qkv[:, h * Dh:(h + 1) * Dh]
        k = qkv[:, D + h * Dh:D + (h + 1) * Dh]
        v = qkv[:, 2 * D + h * Dh:2 * D + (h + 1) * Dh]
        s = jax.lax.dot_general(q.astype(mm), k.astype(mm),
                                (((1,), (1,)), ((), ())),
                                preferred_element_type=jnp.float32)     # [S, S]
        s = s * scale + bias_b
        m = jnp.max(s, axis=-1, keepdims=True)
        p = jnp.exp(s - m)
        denom = jnp.sum(p, axis=-1, keepdims=True)
        a = jnp.dot(p.astype(mm), v.astype(mm),
                    preferred_element_type=jnp.float32)                 # [S, Dh]
        # Normalize the [S, Dh] output instead of the [S, S] probs (fewer VALU
        # multiplies); reciprocal rides the free EUP slot.
        heads.append(a * pl.reciprocal(denom, approx=True))
    attn = jnp.concatenate(heads, axis=-1)                      # [S, D]

    # Single wide output projection + residual + LN1, FFN + residual + LN2.
    ctx = jnp.dot(attn.astype(mm), wo_ref[...],
                  preferred_element_type=jnp.float32) + bo_ref[...]
    y1 = _ln_rows(x + ctx, ln1g_ref[...], ln1b_ref[...], eps)

    hmid = _gelu(jnp.dot(y1.astype(mm), w1_ref[...],
                         preferred_element_type=jnp.float32) + b1_ref[...])
    hout = jnp.dot(hmid.astype(mm), w2_ref[...],
                   preferred_element_type=jnp.float32) + b2_ref[...]
    y2 = _ln_rows(y1 + hout, ln2g_ref[...], ln2b_ref[...], eps)

    if fuse_classifier:
        # CLS row -> Linear -> ReLU -> Linear; only logits leave VMEM.
        cls = y2[0:1, :]                                         # [1, D]
        hcls = jnp.maximum(
            jnp.dot(cls.astype(mm), cw1_ref[...],
                    preferred_element_type=jnp.float32) + cb1_ref[...], 0.0)
        logits = jnp.dot(hcls.astype(mm), cw2_ref[...],
                         preferred_element_type=jnp.float32) + cb2_ref[...]
        o_ref[pl.ds(b, 1), :] = logits.astype(o_ref.dtype)
    else:
        o_ref[...] = y2.astype(o_ref.dtype)


def _resident(shape):
    """Full-array block, constant index -> stays VMEM-resident across the grid."""
    zeros = (0,) * len(shape)
    return pl.BlockSpec(shape, lambda b, _z=zeros: _z)


def transformer_layer(x, bias, kl, *, B, S, nH, Dh, input_ln=None, classifier=None):
    """One fused transformer layer (optionally + embedding LN and/or classifier)."""
    D = nH * Dh
    args = [bias, x, kl["wqkv"], kl["bqkv"], kl["wo"], kl["bo"],
            kl["ln1_g"], kl["ln1_b"], kl["w1"], kl["b1"], kl["w2"], kl["b2"],
            kl["ln2_g"], kl["ln2_b"]]
    in_specs = ([_resident(bias.shape),
                 pl.BlockSpec((S, D), lambda b: (b, 0))]      # x streamed per batch
                + [_resident(a.shape) for a in args[2:]])

    if input_ln is not None:
        args += list(input_ln)
        in_specs += [_resident(a.shape) for a in input_ln]
    if classifier is not None:
        args += list(classifier)
        in_specs += [_resident(a.shape) for a in classifier]
        d_out = classifier[3].shape[-1]
        out_shape = jax.ShapeDtypeStruct((B, d_out), jnp.float32)
        out_spec = _resident((B, d_out))
        semantics = ("arbitrary",)   # shared logits block across grid steps
    else:
        out_shape = jax.ShapeDtypeStruct((B * S, D), x.dtype)
        out_spec = pl.BlockSpec((S, D), lambda b: (b, 0))
        semantics = ("parallel",)    # independent per-batch tiles -> megacore

    kernel = functools.partial(
        _layer_kernel, S=S, D=D, nH=nH, Dh=Dh, eps=1e-12,
        apply_input_ln=input_ln is not None,
        fuse_classifier=classifier is not None)

    return pl.pallas_call(
        kernel,
        out_shape=out_shape,
        grid=(B,),
        in_specs=in_specs,
        out_specs=out_spec,
        compiler_params=pltpu.CompilerParams(
            dimension_semantics=semantics,
            vmem_limit_bytes=32 * 1024 * 1024),
    )(*args)


# --------------------------- parameters & forward --------------------------- #

def init_params(key, *, vocab=100, max_pos=16, D=32, nH=2, ffn=64,
                n_layers=2, H=16, D_out=2):
    ks = iter(jax.random.split(key, 64))

    def w(shape, scale=0.02):
        return (scale * jax.random.normal(next(ks), shape)).astype(jnp.float32)

    params = {
        "num_heads": nH,
        "word_emb": w((vocab, D)),
        "pos_emb": w((max_pos, D)),
        "emb_ln_g": jnp.ones((D,), jnp.float32),
        "emb_ln_b": jnp.zeros((D,), jnp.float32),
        "layers": [],
        "cls_w1": w((D, H)),
        "cls_b1": jnp.zeros((H,), jnp.float32),
        "cls_w2": w((H, D_out)),
        "cls_b2": jnp.zeros((D_out,), jnp.float32),
    }
    for _ in range(n_layers):
        params["layers"].append({
            "wq": w((D, D)), "bq": jnp.zeros((D,), jnp.float32),
            "wk": w((D, D)), "bk": jnp.zeros((D,), jnp.float32),
            "wv": w((D, D)), "bv": jnp.zeros((D,), jnp.float32),
            "wo": w((D, D)), "bo": jnp.zeros((D,), jnp.float32),
            "ln1_g": jnp.ones((D,), jnp.float32), "ln1_b": jnp.zeros((D,), jnp.float32),
            "w1": w((D, ffn)), "b1": jnp.zeros((ffn,), jnp.float32),
            "w2": w((ffn, D)), "b2": jnp.zeros((D,), jnp.float32),
            "ln2_g": jnp.ones((D,), jnp.float32), "ln2_b": jnp.zeros((D,), jnp.float32),
        })
    return params


def prepare_kernel_params(params, mm_dtype=jnp.bfloat16):
    """One-time conversion into kernel-ready layout: fused QKV weight, bf16
    matmul weights, (1, N)-shaped f32 biases / LayerNorm params."""
    D = params["word_emb"].shape[1]
    f32 = jnp.float32

    def row(v):
        return v.reshape(1, -1).astype(f32)

    prep = {
        "num_heads": params["num_heads"],
        "word_emb": params["word_emb"].astype(f32),
        "pos_emb": params["pos_emb"].astype(f32),
        "emb_ln": (row(params["emb_ln_g"]), row(params["emb_ln_b"])),
        "cls": (params["cls_w1"].astype(mm_dtype), row(params["cls_b1"]),
                params["cls_w2"].astype(mm_dtype), row(params["cls_b2"])),
        "layers": [],
    }
    for l in params["layers"]:
        prep["layers"].append({
            "wqkv": jnp.concatenate([l["wq"], l["wk"], l["wv"]], axis=1).astype(mm_dtype),
            "bqkv": jnp.concatenate([l["bq"], l["bk"], l["bv"]]).reshape(1, 3 * D).astype(f32),
            "wo": l["wo"].astype(mm_dtype), "bo": row(l["bo"]),
            "ln1_g": row(l["ln1_g"]), "ln1_b": row(l["ln1_b"]),
            "w1": l["w1"].astype(mm_dtype), "b1": row(l["b1"]),
            "w2": l["w2"].astype(mm_dtype), "b2": row(l["b2"]),
            "ln2_g": row(l["ln2_g"]), "ln2_b": row(l["ln2_b"]),
        })
    return prep


def bert_classifier_forward(prep, input_ids, attention_mask):
    B, S = input_ids.shape
    D = prep["word_emb"].shape[1]
    nH = prep["num_heads"]
    Dh = D // nH

    # Embedding gather + positional add (XLA glue); the embedding LayerNorm is
    # fused into layer 0's kernel.
    x = (prep["word_emb"][input_ids]
         + prep["pos_emb"][None, :S, :]).reshape(B * S, D).astype(jnp.float32)

    # Additive attention bias (0 keep / -1e9 masked), computed once per forward.
    bias = jnp.where(attention_mask > 0, 0.0, -1e9).astype(jnp.float32)   # [B, S]

    n_layers = len(prep["layers"])
    for li, kl in enumerate(prep["layers"]):
        x = transformer_layer(
            x, bias, kl, B=B, S=S, nH=nH, Dh=Dh,
            input_ln=prep["emb_ln"] if li == 0 else None,
            classifier=prep["cls"] if li == n_layers - 1 else None)
    return x  # [B, D_out] logits (classifier head fused into the last layer)


# ---------------------------- pure-JAX reference ---------------------------- #

def _ref_forward(params, input_ids, attention_mask, mm_dtype=jnp.float32):
    B, S = input_ids.shape
    D = params["word_emb"].shape[1]
    nH = params["num_heads"]
    Dh = D // nH

    def mdot(a, b):
        return jnp.dot(a.astype(mm_dtype), b.astype(mm_dtype),
                       preferred_element_type=jnp.float32)

    def ln(x, g, b, eps=1e-12):
        m = x.mean(-1, keepdims=True)
        var = ((x - m) ** 2).mean(-1, keepdims=True)
        return (x - m) / jnp.sqrt(var + eps) * g + b

    def gelu(x):
        c = math.sqrt(2.0 / math.pi)
        return 0.5 * x * (1.0 + jnp.tanh(c * (x + 0.044715 * x ** 3)))

    x = params["word_emb"][input_ids] + params["pos_emb"][None, :S, :]
    x = ln(x, params["emb_ln_g"], params["emb_ln_b"])
    bias = jnp.where(attention_mask[:, None, None, :] > 0, 0.0, -1e9)
    for l in params["layers"]:
        q = (mdot(x, l["wq"]) + l["bq"]).reshape(B, S, nH, Dh).transpose(0, 2, 1, 3)
        k = (mdot(x, l["wk"]) + l["bk"]).reshape(B, S, nH, Dh).transpose(0, 2, 1, 3)
        v = (mdot(x, l["wv"]) + l["bv"]).reshape(B, S, nH, Dh).transpose(0, 2, 1, 3)
        s = jnp.einsum("bhqd,bhkd->bhqk", q.astype(mm_dtype), k.astype(mm_dtype),
                       preferred_element_type=jnp.float32) / math.sqrt(Dh) + bias
        p = jax.nn.softmax(s, axis=-1)
        a = jnp.einsum("bhqk,bhkd->bhqd", p.astype(mm_dtype), v.astype(mm_dtype),
                       preferred_element_type=jnp.float32)
        a = a.transpose(0, 2, 1, 3).reshape(B, S, D)
        x = ln(x + (mdot(a, l["wo"]) + l["bo"]), l["ln1_g"], l["ln1_b"])
        h = mdot(gelu(mdot(x, l["w1"]) + l["b1"]), l["w2"]) + l["b2"]
        x = ln(x + h, l["ln2_g"], l["ln2_b"])
    cls = x[:, 0, :]
    h = jnp.maximum(mdot(cls, params["cls_w1"]) + params["cls_b1"], 0.0)
    return mdot(h, params["cls_w2"]) + params["cls_b2"]


# ----------------------------------- main ----------------------------------- #

if __name__ == "__main__":
    B, S = 2, 8          # batch_size, max_length
    VOCAB = 100

    key = jax.random.PRNGKey(0)
    kp, ki = jax.random.split(key)
    params = init_params(kp, vocab=VOCAB, max_pos=16, D=32, nH=2, ffn=64,
                         n_layers=2, H=16, D_out=2)
    prep = prepare_kernel_params(params)          # one-time weight layout prep

    input_ids = jax.random.randint(ki, (B, S), 0, VOCAB, dtype=jnp.int32)
    attention_mask = jnp.array([[1, 1, 1, 1, 1, 1, 1, 1],
                                [1, 1, 1, 1, 1, 1, 0, 0]], dtype=jnp.int32)

    fwd = jax.jit(lambda ids, mask: bert_classifier_forward(prep, ids, mask))
    logits = jax.block_until_ready(fwd(input_ids, attention_mask))

    assert logits.shape == (B, 2), logits.shape
    assert bool(jnp.all(jnp.isfinite(logits)))

    # Tight check vs. a reference with matched bf16 matmul operands; loose
    # sanity check vs. the pure-f32 reference.
    ref_bf16 = _ref_forward(params, input_ids, attention_mask, mm_dtype=jnp.bfloat16)
    ref_f32 = _ref_forward(params, input_ids, attention_mask, mm_dtype=jnp.float32)
    assert bool(jnp.allclose(logits, ref_bf16, atol=2e-3, rtol=2e-2)), (logits, ref_bf16)
    assert bool(jnp.allclose(logits, ref_f32, atol=1e-2, rtol=1e-1)), (logits, ref_f32)

    print("KERNEL_OK")
</pallas_src>

<mosaic_0001>
module attributes {stable_mosaic.version = 11 : i64} {
  func.func @_layer_kernel(%arg0: i32, %arg1: memref<2x8xf32, #tpu.memory_space<vmem>>, %arg2: memref<8x32xf32, #tpu.memory_space<vmem>>, %arg3: memref<32x96xbf16, #tpu.memory_space<vmem>>, %arg4: memref<1x96xf32, #tpu.memory_space<vmem>>, %arg5: memref<32x32xbf16, #tpu.memory_space<vmem>>, %arg6: memref<1x32xf32, #tpu.memory_space<vmem>>, %arg7: memref<1x32xf32, #tpu.memory_space<vmem>>, %arg8: memref<1x32xf32, #tpu.memory_space<vmem>>, %arg9: memref<32x64xbf16, #tpu.memory_space<vmem>>, %arg10: memref<1x64xf32, #tpu.memory_space<vmem>>, %arg11: memref<64x32xbf16, #tpu.memory_space<vmem>>, %arg12: memref<1x32xf32, #tpu.memory_space<vmem>>, %arg13: memref<1x32xf32, #tpu.memory_space<vmem>>, %arg14: memref<1x32xf32, #tpu.memory_space<vmem>>, %arg15: memref<1x32xf32, #tpu.memory_space<vmem>>, %arg16: memref<1x32xf32, #tpu.memory_space<vmem>>, %arg17: memref<8x32xf32, #tpu.memory_space<vmem>>) attributes {dimension_semantics = [#tpu.dimension_semantics<parallel>], iteration_bounds = array<i64: 2>, scalar_prefetch = 0 : i64, scratch_operands = 0 : i64, tpu.core_type = #tpu.core_type<tc>, window_params = [{pipeline_mode = #tpu.pipeline_mode<synchronous>, transform_indices = @transform_0, window_bounds = array<i64: 2, 8>}, {transform_indices = @transform_1, window_bounds = array<i64: 8, 32>}, {pipeline_mode = #tpu.pipeline_mode<synchronous>, transform_indices = @transform_2, window_bounds = array<i64: 32, 96>}, {pipeline_mode = #tpu.pipeline_mode<synchronous>, transform_indices = @transform_3, window_bounds = array<i64: 1, 96>}, {pipeline_mode = #tpu.pipeline_mode<synchronous>, transform_indices = @transform_4, window_bounds = array<i64: 32, 32>}, {pipeline_mode = #tpu.pipeline_mode<synchronous>, transform_indices = @transform_5, window_bounds = array<i64: 1, 32>}, {pipeline_mode = #tpu.pipeline_mode<synchronous>, transform_indices = @transform_6, window_bounds = array<i64: 1, 32>}, {pipeline_mode = #tpu.pipeline_mode<synchronous>, transform_indices = @transform_7, window_bounds = array<i64: 1, 32>}, {pipeline_mode = #tpu.pipeline_mode<synchronous>, transform_indices = @transform_8, window_bounds = array<i64: 32, 64>}, {pipeline_mode = #tpu.pipeline_mode<synchronous>, transform_indices = @transform_9, window_bounds = array<i64: 1, 64>}, {pipeline_mode = #tpu.pipeline_mode<synchronous>, transform_indices = @transform_10, window_bounds = array<i64: 64, 32>}, {pipeline_mode = #tpu.pipeline_mode<synchronous>, transform_indices = @transform_11, window_bounds = array<i64: 1, 32>}, {pipeline_mode = #tpu.pipeline_mode<synchronous>, transform_indices = @transform_12, window_bounds = array<i64: 1, 32>}, {pipeline_mode = #tpu.pipeline_mode<synchronous>, transform_indices = @transform_13, window_bounds = array<i64: 1, 32>}, {pipeline_mode = #tpu.pipeline_mode<synchronous>, transform_indices = @transform_14, window_bounds = array<i64: 1, 32>}, {pipeline_mode = #tpu.pipeline_mode<synchronous>, transform_indices = @transform_15, window_bounds = array<i64: 1, 32>}, {transform_indices = @transform_16, window_bounds = array<i64: 8, 32>}]} {
    %c0 = arith.constant 0 : index
    %c0_0 = arith.constant 0 : index
    %0 = vector.load %arg2[%c0, %c0_0] : memref<8x32xf32, #tpu.memory_space<vmem>>, vector<8x32xf32>
    %c0_1 = arith.constant 0 : index
    %c0_2 = arith.constant 0 : index
    %1 = vector.load %arg15[%c0_1, %c0_2] : memref<1x32xf32, #tpu.memory_space<vmem>>, vector<1x32xf32>
    %c0_3 = arith.constant 0 : index
    %c0_4 = arith.constant 0 : index
    %2 = vector.load %arg16[%c0_3, %c0_4] : memref<1x32xf32, #tpu.memory_space<vmem>>, vector<1x32xf32>
    %cst = arith.constant dense<0.000000e+00> : vector<8xf32>
    %3 = vector.multi_reduction <add>, %0, %cst [1] : vector<8x32xf32> to vector<8xf32>
    %4 = vector.shape_cast %3 : vector<8xf32> to vector<8x1xf32>
    %cst_5 = arith.constant 3.200000e+01 : f32
    %5 = vector.broadcast %cst_5 : f32 to vector<8x1xf32>
    %6 = arith.divf %4, %5 : vector<8x1xf32>
    %7 = vector.broadcast %6 : vector<8x1xf32> to vector<8x32xf32>
    %8 = arith.subf %0, %7 : vector<8x32xf32>
    %9 = arith.mulf %8, %8 : vector<8x32xf32>
    %cst_6 = arith.constant dense<0.000000e+00> : vector<8xf32>
    %10 = vector.multi_reduction <add>, %9, %cst_6 [1] : vector<8x32xf32> to vector<8xf32>
    %11 = vector.shape_cast %10 : vector<8xf32> to vector<8x1xf32>
    %cst_7 = arith.constant 3.200000e+01 : f32
    %12 = vector.broadcast %cst_7 : f32 to vector<8x1xf32>
    %13 = arith.divf %11, %12 : vector<8x1xf32>
    %14 = vector.broadcast %6 : vector<8x1xf32> to vector<8x32xf32>
    %15 = arith.subf %0, %14 : vector<8x32xf32>
    %cst_8 = arith.constant 9.99999996E-13 : f32
    %16 = vector.broadcast %cst_8 : f32 to vector<8x1xf32>
    %17 = arith.addf %13, %16 : vector<8x1xf32>
    %18 = math.rsqrt %17 : vector<8x1xf32>
    %19 = vector.broadcast %18 : vector<8x1xf32> to vector<8x32xf32>
    %20 = arith.mulf %15, %19 : vector<8x32xf32>
    %21 = vector.broadcast %1 : vector<1x32xf32> to vector<8x32xf32>
    %22 = arith.mulf %20, %21 : vector<8x32xf32>
    %23 = vector.broadcast %2 : vector<1x32xf32> to vector<8x32xf32>
    %24 = arith.addf %22, %23 : vector<8x32xf32>
    %25 = arith.index_cast %arg0 : i32 to index
    %c0_9 = arith.constant 0 : index
    %26 = vector.load %arg1[%25, %c0_9] : memref<2x8xf32, #tpu.memory_space<vmem>>, vector<1x8xf32>
    %27 = arith.truncf %24 : vector<8x32xf32> to vector<8x32xbf16>
    %c0_10 = arith.constant 0 : index
    %c0_11 = arith.constant 0 : index
    %28 = vector.load %arg3[%c0_10, %c0_11] : memref<32x96xbf16, #tpu.memory_space<vmem>>, vector<32x96xbf16>
    %cst_12 = arith.constant dense<0.000000e+00> : vector<8x96xf32>
    %29 = tpu.matmul %27, %28, %cst_12 {dimension_numbers = #tpu.dot_dimension_numbers<[1], [0], [0], [1], [0, 0, 1, 1], [], []>} : vector<8x32xbf16>, vector<32x96xbf16>, vector<8x96xf32> -> vector<8x96xf32>
    %c0_13 = arith.constant 0 : index
    %c0_14 = arith.constant 0 : index
    %30 = vector.load %arg4[%c0_13, %c0_14] : memref<1x96xf32, #tpu.memory_space<vmem>>, vector<1x96xf32>
    %31 = vector.broadcast %30 : vector<1x96xf32> to vector<8x96xf32>
    %32 = arith.addf %29, %31 : vector<8x96xf32>
    %33 = vector.extract_strided_slice %32 {offsets = [0, 0], sizes = [8, 16], strides = [1, 1]} : vector<8x96xf32> to vector<8x16xf32>
    %34 = vector.extract_strided_slice %32 {offsets = [0, 32], sizes = [8, 16], strides = [1, 1]} : vector<8x96xf32> to vector<8x16xf32>
    %35 = vector.extract_strided_slice %32 {offsets = [0, 64], sizes = [8, 16], strides = [1, 1]} : vector<8x96xf32> to vector<8x16xf32>
    %36 = arith.truncf %33 : vector<8x16xf32> to vector<8x16xbf16>
    %37 = arith.truncf %34 : vector<8x16xf32> to vector<8x16xbf16>
    %cst_15 = arith.constant dense<0.000000e+00> : vector<8x8xf32>
    %38 = tpu.matmul %36, %37, %cst_15 {dimension_numbers = #tpu.dot_dimension_numbers<[1], [1], [0], [0], [0, 0, 1, 0], [], []>} : vector<8x16xbf16>, vector<8x16xbf16>, vector<8x8xf32> -> vector<8x8xf32>
    %cst_16 = arith.constant 2.500000e-01 : f32
    %39 = vector.broadcast %cst_16 : f32 to vector<8x8xf32>
    %40 = arith.mulf %38, %39 : vector<8x8xf32>
    %41 = vector.broadcast %26 : vector<1x8xf32> to vector<8x8xf32>
    %42 = arith.addf %40, %41 : vector<8x8xf32>
    %cst_17 = arith.constant dense<0xFF800000> : vector<8xf32>
    %43 = vector.multi_reduction <maximumf>, %42, %cst_17 [1] : vector<8x8xf32> to vector<8xf32>
    %44 = vector.shape_cast %43 : vector<8xf32> to vector<8x1xf32>
    %45 = vector.broadcast %44 : vector<8x1xf32> to vector<8x8xf32>
    %46 = arith.subf %42, %45 : vector<8x8xf32>
    %47 = math.exp %46 : vector<8x8xf32>
    %cst_18 = arith.constant dense<0.000000e+00> : vector<8xf32>
    %48 = vector.multi_reduction <add>, %47, %cst_18 [1] : vector<8x8xf32> to vector<8xf32>
    %49 = vector.shape_cast %48 : vector<8xf32> to vector<8x1xf32>
    %50 = arith.truncf %47 : vector<8x8xf32> to vector<8x8xbf16>
    %51 = arith.truncf %35 : vector<8x16xf32> to vector<8x16xbf16>
    %cst_19 = arith.constant dense<0.000000e+00> : vector<8x16xf32>
    %52 = tpu.matmul %50, %51, %cst_19 {dimension_numbers = #tpu.dot_dimension_numbers<[1], [0], [0], [1], [0, 0, 1, 1], [], []>} : vector<8x8xbf16>, vector<8x16xbf16>, vector<8x16xf32> -> vector<8x16xf32>
    %53 = tpu.reciprocal %49 {approx = true} : vector<8x1xf32> -> vector<8x1xf32>
    %54 = vector.broadcast %53 : vector<8x1xf32> to vector<8x16xf32>
    %55 = arith.mulf %52, %54 : vector<8x16xf32>
    %56 = vector.extract_strided_slice %32 {offsets = [0, 16], sizes = [8, 16], strides = [1, 1]} : vector<8x96xf32> to vector<8x16xf32>
    %57 = vector.extract_strided_slice %32 {offsets = [0, 48], sizes = [8, 16], strides = [1, 1]} : vector<8x96xf32> to vector<8x16xf32>
    %58 = vector.extract_strided_slice %32 {offsets = [0, 80], sizes = [8, 16], strides = [1, 1]} : vector<8x96xf32> to vector<8x16xf32>
    %59 = arith.truncf %56 : vector<8x16xf32> to vector<8x16xbf16>
    %60 = arith.truncf %57 : vector<8x16xf32> to vector<8x16xbf16>
    %cst_20 = arith.constant dense<0.000000e+00> : vector<8x8xf32>
    %61 = tpu.matmul %59, %60, %cst_20 {dimension_numbers = #tpu.dot_dimension_numbers<[1], [1], [0], [0], [0, 0, 1, 0], [], []>} : vector<8x16xbf16>, vector<8x16xbf16>, vector<8x8xf32> -> vector<8x8xf32>
    %cst_21 = arith.constant 2.500000e-01 : f32
    %62 = vector.broadcast %cst_21 : f32 to vector<8x8xf32>
    %63 = arith.mulf %61, %62 : vector<8x8xf32>
    %64 = vector.broadcast %26 : vector<1x8xf32> to vector<8x8xf32>
    %65 = arith.addf %63, %64 : vector<8x8xf32>
    %cst_22 = arith.constant dense<0xFF800000> : vector<8xf32>
    %66 = vector.multi_reduction <maximumf>, %65, %cst_22 [1] : vector<8x8xf32> to vector<8xf32>
    %67 = vector.shape_cast %66 : vector<8xf32> to vector<8x1xf32>
    %68 = vector.broadcast %67 : vector<8x1xf32> to vector<8x8xf32>
    %69 = arith.subf %65, %68 : vector<8x8xf32>
    %70 = math.exp %69 : vector<8x8xf32>
    %cst_23 = arith.constant dense<0.000000e+00> : vector<8xf32>
    %71 = vector.multi_reduction <add>, %70, %cst_23 [1] : vector<8x8xf32> to vector<8xf32>
    %72 = vector.shape_cast %71 : vector<8xf32> to vector<8x1xf32>
    %73 = arith.truncf %70 : vector<8x8xf32> to vector<8x8xbf16>
    %74 = arith.truncf %58 : vector<8x16xf32> to vector<8x16xbf16>
    %cst_24 = arith.constant dense<0.000000e+00> : vector<8x16xf32>
    %75 = tpu.matmul %73, %74, %cst_24 {dimension_numbers = #tpu.dot_dimension_numbers<[1], [0], [0], [1], [0, 0, 1, 1], [], []>} : vector<8x8xbf16>, vector<8x16xbf16>, vector<8x16xf32> -> vector<8x16xf32>
    %76 = tpu.reciprocal %72 {approx = true} : vector<8x1xf32> -> vector<8x1xf32>
    %77 = vector.broadcast %76 : vector<8x1xf32> to vector<8x16xf32>
    %78 = arith.mulf %75, %77 : vector<8x16xf32>
    %79 = tpu.concatenate %55, %78 in 1 : vector<8x16xf32>, vector<8x16xf32> -> vector<8x32xf32>
    %80 = arith.truncf %79 : vector<8x32xf32> to vector<8x32xbf16>
    %c0_25 = arith.constant 0 : index
    %c0_26 = arith.constant 0 : index
    %81 = vector.load %arg5[%c0_25, %c0_26] : memref<32x32xbf16, #tpu.memory_space<vmem>>, vector<32x32xbf16>
    %cst_27 = arith.constant dense<0.000000e+00> : vector<8x32xf32>
    %82 = tpu.matmul %80, %81, %cst_27 {dimension_numbers = #tpu.dot_dimension_numbers<[1], [0], [0], [1], [0, 0, 1, 1], [], []>} : vector<8x32xbf16>, vector<32x32xbf16>, vector<8x32xf32> -> vector<8x32xf32>
    %c0_28 = arith.constant 0 : index
    %c0_29 = arith.constant 0 : index
    %83 = vector.load %arg6[%c0_28, %c0_29] : memref<1x32xf32, #tpu.memory_space<vmem>>, vector<1x32xf32>
    %84 = vector.broadcast %83 : vector<1x32xf32> to vector<8x32xf32>
    %85 = arith.addf %82, %84 : vector<8x32xf32>
    %86 = arith.addf %24, %85 : vector<8x32xf32>
    %c0_30 = arith.constant 0 : index
    %c0_31 = arith.constant 0 : index
    %87 = vector.load %arg7[%c0_30, %c0_31] : memref<1x32xf32, #tpu.memory_space<vmem>>, vector<1x32xf32>
    %c0_32 = arith.constant 0 : index
    %c0_33 = arith.constant 0 : index
    %88 = vector.load %arg8[%c0_32, %c0_33] : memref<1x32xf32, #tpu.memory_space<vmem>>, vector<1x32xf32>
    %cst_34 = arith.constant dense<0.000000e+00> : vector<8xf32>
    %89 = vector.multi_reduction <add>, %86, %cst_34 [1] : vector<8x32xf32> to vector<8xf32>
    %90 = vector.shape_cast %89 : vector<8xf32> to vector<8x1xf32>
    %cst_35 = arith.constant 3.200000e+01 : f32
    %91 = vector.broadcast %cst_35 : f32 to vector<8x1xf32>
    %92 = arith.divf %90, %91 : vector<8x1xf32>
    %93 = vector.broadcast %92 : vector<8x1xf32> to vector<8x32xf32>
    %94 = arith.subf %86, %93 : vector<8x32xf32>
    %95 = arith.mulf %94, %94 : vector<8x32xf32>
    %cst_36 = arith.constant dense<0.000000e+00> : vector<8xf32>
    %96 = vector.multi_reduction <add>, %95, %cst_36 [1] : vector<8x32xf32> to vector<8xf32>
    %97 = vector.shape_cast %96 : vector<8xf32> to vector<8x1xf32>
    %cst_37 = arith.constant 3.200000e+01 : f32
    %98 = vector.broadcast %cst_37 : f32 to vector<8x1xf32>
    %99 = arith.divf %97, %98 : vector<8x1xf32>
    %100 = vector.broadcast %92 : vector<8x1xf32> to vector<8x32xf32>
    %101 = arith.subf %86, %100 : vector<8x32xf32>
    %cst_38 = arith.constant 9.99999996E-13 : f32
    %102 = vector.broadcast %cst_38 : f32 to vector<8x1xf32>
    %103 = arith.addf %99, %102 : vector<8x1xf32>
    %104 = math.rsqrt %103 : vector<8x1xf32>
    %105 = vector.broadcast %104 : vector<8x1xf32> to vector<8x32xf32>
    %106 = arith.mulf %101, %105 : vector<8x32xf32>
    %107 = vector.broadcast %87 : vector<1x32xf32> to vector<8x32xf32>
    %108 = arith.mulf %106, %107 : vector<8x32xf32>
    %109 = vector.broadcast %88 : vector<1x32xf32> to vector<8x32xf32>
    %110 = arith.addf %108, %109 : vector<8x32xf32>
    %111 = arith.truncf %110 : vector<8x32xf32> to vector<8x32xbf16>
    %c0_39 = arith.constant 0 : index
    %c0_40 = arith.constant 0 : index
    %112 = vector.load %arg9[%c0_39, %c0_40] : memref<32x64xbf16, #tpu.memory_space<vmem>>, vector<32x64xbf16>
    %cst_41 = arith.constant dense<0.000000e+00> : vector<8x64xf32>
    %113 = tpu.matmul %111, %112, %cst_41 {dimension_numbers = #tpu.dot_dimension_numbers<[1], [0], [0], [1], [0, 0, 1, 1], [], []>} : vector<8x32xbf16>, vector<32x64xbf16>, vector<8x64xf32> -> vector<8x64xf32>
    %c0_42 = arith.constant 0 : index
    %c0_43 = arith.constant 0 : index
    %114 = vector.load %arg10[%c0_42, %c0_43] : memref<1x64xf32, #tpu.memory_space<vmem>>, vector<1x64xf32>
    %115 = vector.broadcast %114 : vector<1x64xf32> to vector<8x64xf32>
    %116 = arith.addf %113, %115 : vector<8x64xf32>
    %cst_44 = arith.constant 5.000000e-01 : f32
    %117 = vector.broadcast %cst_44 : f32 to vector<8x64xf32>
    %118 = arith.mulf %117, %116 : vector<8x64xf32>
    %cst_45 = arith.constant 4.471500e-02 : f32
    %119 = vector.broadcast %cst_45 : f32 to vector<8x64xf32>
    %120 = arith.mulf %119, %116 : vector<8x64xf32>
    %121 = arith.mulf %120, %116 : vector<8x64xf32>
    %122 = arith.mulf %121, %116 : vector<8x64xf32>
    %123 = arith.addf %116, %122 : vector<8x64xf32>
    %cst_46 = arith.constant 0.797884583 : f32
    %124 = vector.broadcast %cst_46 : f32 to vector<8x64xf32>
    %125 = arith.mulf %124, %123 : vector<8x64xf32>
    %126 = math.tanh %125 : vector<8x64xf32>
    %cst_47 = arith.constant 1.000000e+00 : f32
    %127 = vector.broadcast %cst_47 : f32 to vector<8x64xf32>
    %128 = arith.addf %127, %126 : vector<8x64xf32>
    %129 = arith.mulf %118, %128 : vector<8x64xf32>
    %130 = arith.truncf %129 : vector<8x64xf32> to vector<8x64xbf16>
    %c0_48 = arith.constant 0 : index
    %c0_49 = arith.constant 0 : index
    %131 = vector.load %arg11[%c0_48, %c0_49] : memref<64x32xbf16, #tpu.memory_space<vmem>>, vector<64x32xbf16>
    %cst_50 = arith.constant dense<0.000000e+00> : vector<8x32xf32>
    %132 = tpu.matmul %130, %131, %cst_50 {dimension_numbers = #tpu.dot_dimension_numbers<[1], [0], [0], [1], [0, 0, 1, 1], [], []>} : vector<8x64xbf16>, vector<64x32xbf16>, vector<8x32xf32> -> vector<8x32xf32>
    %c0_51 = arith.constant 0 : index
    %c0_52 = arith.constant 0 : index
    %133 = vector.load %arg12[%c0_51, %c0_52] : memref<1x32xf32, #tpu.memory_space<vmem>>, vector<1x32xf32>
    %134 = vector.broadcast %133 : vector<1x32xf32> to vector<8x32xf32>
    %135 = arith.addf %132, %134 : vector<8x32xf32>
    %136 = arith.addf %110, %135 : vector<8x32xf32>
    %c0_53 = arith.constant 0 : index
    %c0_54 = arith.constant 0 : index
    %137 = vector.load %arg13[%c0_53, %c0_54] : memref<1x32xf32, #tpu.memory_space<vmem>>, vector<1x32xf32>
    %c0_55 = arith.constant 0 : index
    %c0_56 = arith.constant 0 : index
    %138 = vector.load %arg14[%c0_55, %c0_56] : memref<1x32xf32, #tpu.memory_space<vmem>>, vector<1x32xf32>
    %cst_57 = arith.constant dense<0.000000e+00> : vector<8xf32>
    %139 = vector.multi_reduction <add>, %136, %cst_57 [1] : vector<8x32xf32> to vector<8xf32>
    %140 = vector.shape_cast %139 : vector<8xf32> to vector<8x1xf32>
    %cst_58 = arith.constant 3.200000e+01 : f32
    %141 = vector.broadcast %cst_58 : f32 to vector<8x1xf32>
    %142 = arith.divf %140, %141 : vector<8x1xf32>
    %143 = vector.broadcast %142 : vector<8x1xf32> to vector<8x32xf32>
    %144 = arith.subf %136, %143 : vector<8x32xf32>
    %145 = arith.mulf %144, %144 : vector<8x32xf32>
    %cst_59 = arith.constant dense<0.000000e+00> : vector<8xf32>
    %146 = vector.multi_reduction <add>, %145, %cst_59 [1] : vector<8x32xf32> to vector<8xf32>
    %147 = vector.shape_cast %146 : vector<8xf32> to vector<8x1xf32>
    %cst_60 = arith.constant 3.200000e+01 : f32
    %148 = vector.broadcast %cst_60 : f32 to vector<8x1xf32>
    %149 = arith.divf %147, %148 : vector<8x1xf32>
    %150 = vector.broadcast %142 : vector<8x1xf32> to vector<8x32xf32>
    %151 = arith.subf %136, %150 : vector<8x32xf32>
    %cst_61 = arith.constant 9.99999996E-13 : f32
    %152 = vector.broadcast %cst_61 : f32 to vector<8x1xf32>
    %153 = arith.addf %149, %152 : vector<8x1xf32>
    %154 = math.rsqrt %153 : vector<8x1xf32>
    %155 = vector.broadcast %154 : vector<8x1xf32> to vector<8x32xf32>
    %156 = arith.mulf %151, %155 : vector<8x32xf32>
    %157 = vector.broadcast %137 : vector<1x32xf32> to vector<8x32xf32>
    %158 = arith.mulf %156, %157 : vector<8x32xf32>
    %159 = vector.broadcast %138 : vector<1x32xf32> to vector<8x32xf32>
    %160 = arith.addf %158, %159 : vector<8x32xf32>
    %c0_62 = arith.constant 0 : index
    %c0_63 = arith.constant 0 : index
    %161 = vector.load %arg17[%c0_62, %c0_63] : memref<8x32xf32, #tpu.memory_space<vmem>>, vector<8x32xf32>
    tpu.vector_store %arg17[%c0_62, %c0_63], %160 {strides = array<i32>} : memref<8x32xf32, #tpu.memory_space<vmem>>, vector<8x32xf32>,
    return
  }
  func.func @transform_0(%arg0: i32) -> (i32, i32) {
    %c0_i32 = arith.constant 0 : i32
    %c0_i32_0 = arith.constant 0 : i32
    %c0_i32_1 = arith.constant 0 : i32
    return %c0_i32, %c0_i32_0 : i32, i32
  }
  func.func @transform_1(%arg0: i32) -> (i32, i32) {
    %c0_i32 = arith.constant 0 : i32
    %c0_i32_0 = arith.constant 0 : i32
    return %arg0, %c0_i32 : i32, i32
  }
  func.func @transform_2(%arg0: i32) -> (i32, i32) {
    %c0_i32 = arith.constant 0 : i32
    %c0_i32_0 = arith.constant 0 : i32
    %c0_i32_1 = arith.constant 0 : i32
    return %c0_i32, %c0_i32_0 : i32, i32
  }
  func.func @transform_3(%arg0: i32) -> (i32, i32) {
    %c0_i32 = arith.constant 0 : i32
    %c0_i32_0 = arith.constant 0 : i32
    %c0_i32_1 = arith.constant 0 : i32
    return %c0_i32, %c0_i32_0 : i32, i32
  }
  func.func @transform_4(%arg0: i32) -> (i32, i32) {
    %c0_i32 = arith.constant 0 : i32
    %c0_i32_0 = arith.constant 0 : i32
    %c0_i32_1 = arith.constant 0 : i32
    return %c0_i32, %c0_i32_0 : i32, i32
  }
  func.func @transform_5(%arg0: i32) -> (i32, i32) {
    %c0_i32 = arith.constant 0 : i32
    %c0_i32_0 = arith.constant 0 : i32
    %c0_i32_1 = arith.constant 0 : i32
    return %c0_i32, %c0_i32_0 : i32, i32
  }
  func.func @transform_6(%arg0: i32) -> (i32, i32) {
    %c0_i32 = arith.constant 0 : i32
    %c0_i32_0 = arith.constant 0 : i32
    %c0_i32_1 = arith.constant 0 : i32
    return %c0_i32, %c0_i32_0 : i32, i32
  }
  func.func @transform_7(%arg0: i32) -> (i32, i32) {
    %c0_i32 = arith.constant 0 : i32
    %c0_i32_0 = arith.constant 0 : i32
    %c0_i32_1 = arith.constant 0 : i32
    return %c0_i32, %c0_i32_0 : i32, i32
  }
  func.func @transform_8(%arg0: i32) -> (i32, i32) {
    %c0_i32 = arith.constant 0 : i32
    %c0_i32_0 = arith.constant 0 : i32
    %c0_i32_1 = arith.constant 0 : i32
    return %c0_i32, %c0_i32_0 : i32, i32
  }
  func.func @transform_9(%arg0: i32) -> (i32, i32) {
    %c0_i32 = arith.constant 0 : i32
    %c0_i32_0 = arith.constant 0 : i32
    %c0_i32_1 = arith.constant 0 : i32
    return %c0_i32, %c0_i32_0 : i32, i32
  }
  func.func @transform_10(%arg0: i32) -> (i32, i32) {
    %c0_i32 = arith.constant 0 : i32
    %c0_i32_0 = arith.constant 0 : i32
    %c0_i32_1 = arith.constant 0 : i32
    return %c0_i32, %c0_i32_0 : i32, i32
  }
  func.func @transform_11(%arg0: i32) -> (i32, i32) {
    %c0_i32 = arith.constant 0 : i32
    %c0_i32_0 = arith.constant 0 : i32
    %c0_i32_1 = arith.constant 0 : i32
    return %c0_i32, %c0_i32_0 : i32, i32
  }
  func.func @transform_12(%arg0: i32) -> (i32, i32) {
    %c0_i32 = arith.constant 0 : i32
    %c0_i32_0 = arith.constant 0 : i32
    %c0_i32_1 = arith.constant 0 : i32
    return %c0_i32, %c0_i32_0 : i32, i32
  }
  func.func @transform_13(%arg0: i32) -> (i32, i32) {
    %c0_i32 = arith.constant 0 : i32
    %c0_i32_0 = arith.constant 0 : i32
    %c0_i32_1 = arith.constant 0 : i32
    return %c0_i32, %c0_i32_0 : i32, i32
  }
  func.func @transform_14(%arg0: i32) -> (i32, i32) {
    %c0_i32 = arith.constant 0 : i32
    %c0_i32_0 = arith.constant 0 : i32
    %c0_i32_1 = arith.constant 0 : i32
    return %c0_i32, %c0_i32_0 : i32, i32
  }
  func.func @transform_15(%arg0: i32) -> (i32, i32) {
    %c0_i32 = arith.constant 0 : i32
    %c0_i32_0 = arith.constant 0 : i32
    %c0_i32_1 = arith.constant 0 : i32
    return %c0_i32, %c0_i32_0 : i32, i32
  }
  func.func @transform_16(%arg0: i32) -> (i32, i32) {
    %c0_i32 = arith.constant 0 : i32
    %c0_i32_0 = arith.constant 0 : i32
    return %arg0, %c0_i32 : i32, i32
  }
}

module attributes {stable_mosaic.version = 11 : i64} {
  func.func @_layer_kernel(%arg0: i32, %arg1: memref<2x8xf32, #tpu.memory_space<vmem>>, %arg2: memref<8x32xf32, #tpu.memory_space<vmem>>, %arg3: memref<32x96xbf16, #tpu.memory_space<vmem>>, %arg4: memref<1x96xf32, #tpu.memory_space<vmem>>, %arg5: memref<32x32xbf16, #tpu.memory_space<vmem>>, %arg6: memref<1x32xf32, #tpu.memory_space<vmem>>, %arg7: memref<1x32xf32, #tpu.memory_space<vmem>>, %arg8: memref<1x32xf32, #tpu.memory_space<vmem>>, %arg9: memref<32x64xbf16, #tpu.memory_space<vmem>>, %arg10: memref<1x64xf32, #tpu.memory_space<vmem>>, %arg11: memref<64x32xbf16, #tpu.memory_space<vmem>>, %arg12: memref<1x32xf32, #tpu.memory_space<vmem>>, %arg13: memref<1x32xf32, #tpu.memory_space<vmem>>, %arg14: memref<1x32xf32, #tpu.memory_space<vmem>>, %arg15: memref<32x16xbf16, #tpu.memory_space<vmem>>, %arg16: memref<1x16xf32, #tpu.memory_space<vmem>>, %arg17: memref<16x2xbf16, #tpu.memory_space<vmem>>, %arg18: memref<1x2xf32, #tpu.memory_space<vmem>>, %arg19: memref<2x2xf32, #tpu.memory_space<vmem>>) attributes {dimension_semantics = [#tpu.dimension_semantics<arbitrary>], iteration_bounds = array<i64: 2>, scalar_prefetch = 0 : i64, scratch_operands = 0 : i64, tpu.core_type = #tpu.core_type<tc>, window_params = [{pipeline_mode = #tpu.pipeline_mode<synchronous>, transform_indices = @transform_0, window_bounds = array<i64: 2, 8>}, {transform_indices = @transform_1, window_bounds = array<i64: 8, 32>}, {pipeline_mode = #tpu.pipeline_mode<synchronous>, transform_indices = @transform_2, window_bounds = array<i64: 32, 96>}, {pipeline_mode = #tpu.pipeline_mode<synchronous>, transform_indices = @transform_3, window_bounds = array<i64: 1, 96>}, {pipeline_mode = #tpu.pipeline_mode<synchronous>, transform_indices = @transform_4, window_bounds = array<i64: 32, 32>}, {pipeline_mode = #tpu.pipeline_mode<synchronous>, transform_indices = @transform_5, window_bounds = array<i64: 1, 32>}, {pipeline_mode = #tpu.pipeline_mode<synchronous>, transform_indices = @transform_6, window_bounds = array<i64: 1, 32>}, {pipeline_mode = #tpu.pipeline_mode<synchronous>, transform_indices = @transform_7, window_bounds = array<i64: 1, 32>}, {pipeline_mode = #tpu.pipeline_mode<synchronous>, transform_indices = @transform_8, window_bounds = array<i64: 32, 64>}, {pipeline_mode = #tpu.pipeline_mode<synchronous>, transform_indices = @transform_9, window_bounds = array<i64: 1, 64>}, {pipeline_mode = #tpu.pipeline_mode<synchronous>, transform_indices = @transform_10, window_bounds = array<i64: 64, 32>}, {pipeline_mode = #tpu.pipeline_mode<synchronous>, transform_indices = @transform_11, window_bounds = array<i64: 1, 32>}, {pipeline_mode = #tpu.pipeline_mode<synchronous>, transform_indices = @transform_12, window_bounds = array<i64: 1, 32>}, {pipeline_mode = #tpu.pipeline_mode<synchronous>, transform_indices = @transform_13, window_bounds = array<i64: 1, 32>}, {pipeline_mode = #tpu.pipeline_mode<synchronous>, transform_indices = @transform_14, window_bounds = array<i64: 32, 16>}, {pipeline_mode = #tpu.pipeline_mode<synchronous>, transform_indices = @transform_15, window_bounds = array<i64: 1, 16>}, {pipeline_mode = #tpu.pipeline_mode<synchronous>, transform_indices = @transform_16, window_bounds = array<i64: 16, 2>}, {pipeline_mode = #tpu.pipeline_mode<synchronous>, transform_indices = @transform_17, window_bounds = array<i64: 1, 2>}, {pipeline_mode = #tpu.pipeline_mode<synchronous>, transform_indices = @transform_18, window_bounds = array<i64: 2, 2>}]} {
    %c0 = arith.constant 0 : index
    %c0_0 = arith.constant 0 : index
    %0 = vector.load %arg2[%c0, %c0_0] : memref<8x32xf32, #tpu.memory_space<vmem>>, vector<8x32xf32>
    %1 = arith.index_cast %arg0 : i32 to index
    %c0_1 = arith.constant 0 : index
    %2 = vector.load %arg1[%1, %c0_1] : memref<2x8xf32, #tpu.memory_space<vmem>>, vector<1x8xf32>
    %3 = arith.truncf %0 : vector<8x32xf32> to vector<8x32xbf16>
    %c0_2 = arith.constant 0 : index
    %c0_3 = arith.constant 0 : index
    %4 = vector.load %arg3[%c0_2, %c0_3] : memref<32x96xbf16, #tpu.memory_space<vmem>>, vector<32x96xbf16>
    %cst = arith.constant dense<0.000000e+00> : vector<8x96xf32>
    %5 = tpu.matmul %3, %4, %cst {dimension_numbers = #tpu.dot_dimension_numbers<[1], [0], [0], [1], [0, 0, 1, 1], [], []>} : vector<8x32xbf16>, vector<32x96xbf16>, vector<8x96xf32> -> vector<8x96xf32>
    %c0_4 = arith.constant 0 : index
    %c0_5 = arith.constant 0 : index
    %6 = vector.load %arg4[%c0_4, %c0_5] : memref<1x96xf32, #tpu.memory_space<vmem>>, vector<1x96xf32>
    %7 = vector.broadcast %6 : vector<1x96xf32> to vector<8x96xf32>
    %8 = arith.addf %5, %7 : vector<8x96xf32>
    %9 = vector.extract_strided_slice %8 {offsets = [0, 0], sizes = [8, 16], strides = [1, 1]} : vector<8x96xf32> to vector<8x16xf32>
    %10 = vector.extract_strided_slice %8 {offsets = [0, 32], sizes = [8, 16], strides = [1, 1]} : vector<8x96xf32> to vector<8x16xf32>
    %11 = vector.extract_strided_slice %8 {offsets = [0, 64], sizes = [8, 16], strides = [1, 1]} : vector<8x96xf32> to vector<8x16xf32>
    %12 = arith.truncf %9 : vector<8x16xf32> to vector<8x16xbf16>
    %13 = arith.truncf %10 : vector<8x16xf32> to vector<8x16xbf16>
    %cst_6 = arith.constant dense<0.000000e+00> : vector<8x8xf32>
    %14 = tpu.matmul %12, %13, %cst_6 {dimension_numbers = #tpu.dot_dimension_numbers<[1], [1], [0], [0], [0, 0, 1, 0], [], []>} : vector<8x16xbf16>, vector<8x16xbf16>, vector<8x8xf32> -> vector<8x8xf32>
    %cst_7 = arith.constant 2.500000e-01 : f32
    %15 = vector.broadcast %cst_7 : f32 to vector<8x8xf32>
    %16 = arith.mulf %14, %15 : vector<8x8xf32>
    %17 = vector.broadcast %2 : vector<1x8xf32> to vector<8x8xf32>
    %18 = arith.addf %16, %17 : vector<8x8xf32>
    %cst_8 = arith.constant dense<0xFF800000> : vector<8xf32>
    %19 = vector.multi_reduction <maximumf>, %18, %cst_8 [1] : vector<8x8xf32> to vector<8xf32>
    %20 = vector.shape_cast %19 : vector<8xf32> to vector<8x1xf32>
    %21 = vector.broadcast %20 : vector<8x1xf32> to vector<8x8xf32>
    %22 = arith.subf %18, %21 : vector<8x8xf32>
    %23 = math.exp %22 : vector<8x8xf32>
    %cst_9 = arith.constant dense<0.000000e+00> : vector<8xf32>
    %24 = vector.multi_reduction <add>, %23, %cst_9 [1] : vector<8x8xf32> to vector<8xf32>
    %25 = vector.shape_cast %24 : vector<8xf32> to vector<8x1xf32>
    %26 = arith.truncf %23 : vector<8x8xf32> to vector<8x8xbf16>
    %27 = arith.truncf %11 : vector<8x16xf32> to vector<8x16xbf16>
    %cst_10 = arith.constant dense<0.000000e+00> : vector<8x16xf32>
    %28 = tpu.matmul %26, %27, %cst_10 {dimension_numbers = #tpu.dot_dimension_numbers<[1], [0], [0], [1], [0, 0, 1, 1], [], []>} : vector<8x8xbf16>, vector<8x16xbf16>, vector<8x16xf32> -> vector<8x16xf32>
    %29 = tpu.reciprocal %25 {approx = true} : vector<8x1xf32> -> vector<8x1xf32>
    %30 = vector.broadcast %29 : vector<8x1xf32> to vector<8x16xf32>
    %31 = arith.mulf %28, %30 : vector<8x16xf32>
    %32 = vector.extract_strided_slice %8 {offsets = [0, 16], sizes = [8, 16], strides = [1, 1]} : vector<8x96xf32> to vector<8x16xf32>
    %33 = vector.extract_strided_slice %8 {offsets = [0, 48], sizes = [8, 16], strides = [1, 1]} : vector<8x96xf32> to vector<8x16xf32>
    %34 = vector.extract_strided_slice %8 {offsets = [0, 80], sizes = [8, 16], strides = [1, 1]} : vector<8x96xf32> to vector<8x16xf32>
    %35 = arith.truncf %32 : vector<8x16xf32> to vector<8x16xbf16>
    %36 = arith.truncf %33 : vector<8x16xf32> to vector<8x16xbf16>
    %cst_11 = arith.constant dense<0.000000e+00> : vector<8x8xf32>
    %37 = tpu.matmul %35, %36, %cst_11 {dimension_numbers = #tpu.dot_dimension_numbers<[1], [1], [0], [0], [0, 0, 1, 0], [], []>} : vector<8x16xbf16>, vector<8x16xbf16>, vector<8x8xf32> -> vector<8x8xf32>
    %cst_12 = arith.constant 2.500000e-01 : f32
    %38 = vector.broadcast %cst_12 : f32 to vector<8x8xf32>
    %39 = arith.mulf %37, %38 : vector<8x8xf32>
    %40 = vector.broadcast %2 : vector<1x8xf32> to vector<8x8xf32>
    %41 = arith.addf %39, %40 : vector<8x8xf32>
    %cst_13 = arith.constant dense<0xFF800000> : vector<8xf32>
    %42 = vector.multi_reduction <maximumf>, %41, %cst_13 [1] : vector<8x8xf32> to vector<8xf32>
    %43 = vector.shape_cast %42 : vector<8xf32> to vector<8x1xf32>
    %44 = vector.broadcast %43 : vector<8x1xf32> to vector<8x8xf32>
    %45 = arith.subf %41, %44 : vector<8x8xf32>
    %46 = math.exp %45 : vector<8x8xf32>
    %cst_14 = arith.constant dense<0.000000e+00> : vector<8xf32>
    %47 = vector.multi_reduction <add>, %46, %cst_14 [1] : vector<8x8xf32> to vector<8xf32>
    %48 = vector.shape_cast %47 : vector<8xf32> to vector<8x1xf32>
    %49 = arith.truncf %46 : vector<8x8xf32> to vector<8x8xbf16>
    %50 = arith.truncf %34 : vector<8x16xf32> to vector<8x16xbf16>
    %cst_15 = arith.constant dense<0.000000e+00> : vector<8x16xf32>
    %51 = tpu.matmul %49, %50, %cst_15 {dimension_numbers = #tpu.dot_dimension_numbers<[1], [0], [0], [1], [0, 0, 1, 1], [], []>} : vector<8x8xbf16>, vector<8x16xbf16>, vector<8x16xf32> -> vector<8x16xf32>
    %52 = tpu.reciprocal %48 {approx = true} : vector<8x1xf32> -> vector<8x1xf32>
    %53 = vector.broadcast %52 : vector<8x1xf32> to vector<8x16xf32>
    %54 = arith.mulf %51, %53 : vector<8x16xf32>
    %55 = tpu.concatenate %31, %54 in 1 : vector<8x16xf32>, vector<8x16xf32> -> vector<8x32xf32>
    %56 = arith.truncf %55 : vector<8x32xf32> to vector<8x32xbf16>
    %c0_16 = arith.constant 0 : index
    %c0_17 = arith.constant 0 : index
    %57 = vector.load %arg5[%c0_16, %c0_17] : memref<32x32xbf16, #tpu.memory_space<vmem>>, vector<32x32xbf16>
    %cst_18 = arith.constant dense<0.000000e+00> : vector<8x32xf32>
    %58 = tpu.matmul %56, %57, %cst_18 {dimension_numbers = #tpu.dot_dimension_numbers<[1], [0], [0], [1], [0, 0, 1, 1], [], []>} : vector<8x32xbf16>, vector<32x32xbf16>, vector<8x32xf32> -> vector<8x32xf32>
    %c0_19 = arith.constant 0 : index
    %c0_20 = arith.constant 0 : index
    %59 = vector.load %arg6[%c0_19, %c0_20] : memref<1x32xf32, #tpu.memory_space<vmem>>, vector<1x32xf32>
    %60 = vector.broadcast %59 : vector<1x32xf32> to vector<8x32xf32>
    %61 = arith.addf %58, %60 : vector<8x32xf32>
    %62 = arith.addf %0, %61 : vector<8x32xf32>
    %c0_21 = arith.constant 0 : index
    %c0_22 = arith.constant 0 : index
    %63 = vector.load %arg7[%c0_21, %c0_22] : memref<1x32xf32, #tpu.memory_space<vmem>>, vector<1x32xf32>
    %c0_23 = arith.constant 0 : index
    %c0_24 = arith.constant 0 : index
    %64 = vector.load %arg8[%c0_23, %c0_24] : memref<1x32xf32, #tpu.memory_space<vmem>>, vector<1x32xf32>
    %cst_25 = arith.constant dense<0.000000e+00> : vector<8xf32>
    %65 = vector.multi_reduction <add>, %62, %cst_25 [1] : vector<8x32xf32> to vector<8xf32>
    %66 = vector.shape_cast %65 : vector<8xf32> to vector<8x1xf32>
    %cst_26 = arith.constant 3.200000e+01 : f32
    %67 = vector.broadcast %cst_26 : f32 to vector<8x1xf32>
    %68 = arith.divf %66, %67 : vector<8x1xf32>
    %69 = vector.broadcast %68 : vector<8x1xf32> to vector<8x32xf32>
    %70 = arith.subf %62, %69 : vector<8x32xf32>
    %71 = arith.mulf %70, %70 : vector<8x32xf32>
    %cst_27 = arith.constant dense<0.000000e+00> : vector<8xf32>
    %72 = vector.multi_reduction <add>, %71, %cst_27 [1] : vector<8x32xf32> to vector<8xf32>
    %73 = vector.shape_cast %72 : vector<8xf32> to vector<8x1xf32>
    %cst_28 = arith.constant 3.200000e+01 : f32
    %74 = vector.broadcast %cst_28 : f32 to vector<8x1xf32>
    %75 = arith.divf %73, %74 : vector<8x1xf32>
    %76 = vector.broadcast %68 : vector<8x1xf32> to vector<8x32xf32>
    %77 = arith.subf %62, %76 : vector<8x32xf32>
    %cst_29 = arith.constant 9.99999996E-13 : f32
    %78 = vector.broadcast %cst_29 : f32 to vector<8x1xf32>
    %79 = arith.addf %75, %78 : vector<8x1xf32>
    %80 = math.rsqrt %79 : vector<8x1xf32>
    %81 = vector.broadcast %80 : vector<8x1xf32> to vector<8x32xf32>
    %82 = arith.mulf %77, %81 : vector<8x32xf32>
    %83 = vector.broadcast %63 : vector<1x32xf32> to vector<8x32xf32>
    %84 = arith.mulf %82, %83 : vector<8x32xf32>
    %85 = vector.broadcast %64 : vector<1x32xf32> to vector<8x32xf32>
    %86 = arith.addf %84, %85 : vector<8x32xf32>
    %87 = arith.truncf %86 : vector<8x32xf32> to vector<8x32xbf16>
    %c0_30 = arith.constant 0 : index
    %c0_31 = arith.constant 0 : index
    %88 = vector.load %arg9[%c0_30, %c0_31] : memref<32x64xbf16, #tpu.memory_space<vmem>>, vector<32x64xbf16>
    %cst_32 = arith.constant dense<0.000000e+00> : vector<8x64xf32>
    %89 = tpu.matmul %87, %88, %cst_32 {dimension_numbers = #tpu.dot_dimension_numbers<[1], [0], [0], [1], [0, 0, 1, 1], [], []>} : vector<8x32xbf16>, vector<32x64xbf16>, vector<8x64xf32> -> vector<8x64xf32>
    %c0_33 = arith.constant 0 : index
    %c0_34 = arith.constant 0 : index
    %90 = vector.load %arg10[%c0_33, %c0_34] : memref<1x64xf32, #tpu.memory_space<vmem>>, vector<1x64xf32>
    %91 = vector.broadcast %90 : vector<1x64xf32> to vector<8x64xf32>
    %92 = arith.addf %89, %91 : vector<8x64xf32>
    %cst_35 = arith.constant 5.000000e-01 : f32
    %93 = vector.broadcast %cst_35 : f32 to vector<8x64xf32>
    %94 = arith.mulf %93, %92 : vector<8x64xf32>
    %cst_36 = arith.constant 4.471500e-02 : f32
    %95 = vector.broadcast %cst_36 : f32 to vector<8x64xf32>
    %96 = arith.mulf %95, %92 : vector<8x64xf32>
    %97 = arith.mulf %96, %92 : vector<8x64xf32>
    %98 = arith.mulf %97, %92 : vector<8x64xf32>
    %99 = arith.addf %92, %98 : vector<8x64xf32>
    %cst_37 = arith.constant 0.797884583 : f32
    %100 = vector.broadcast %cst_37 : f32 to vector<8x64xf32>
    %101 = arith.mulf %100, %99 : vector<8x64xf32>
    %102 = math.tanh %101 : vector<8x64xf32>
    %cst_38 = arith.constant 1.000000e+00 : f32
    %103 = vector.broadcast %cst_38 : f32 to vector<8x64xf32>
    %104 = arith.addf %103, %102 : vector<8x64xf32>
    %105 = arith.mulf %94, %104 : vector<8x64xf32>
    %106 = arith.truncf %105 : vector<8x64xf32> to vector<8x64xbf16>
    %c0_39 = arith.constant 0 : index
    %c0_40 = arith.constant 0 : index
    %107 = vector.load %arg11[%c0_39, %c0_40] : memref<64x32xbf16, #tpu.memory_space<vmem>>, vector<64x32xbf16>
    %cst_41 = arith.constant dense<0.000000e+00> : vector<8x32xf32>
    %108 = tpu.matmul %106, %107, %cst_41 {dimension_numbers = #tpu.dot_dimension_numbers<[1], [0], [0], [1], [0, 0, 1, 1], [], []>} : vector<8x64xbf16>, vector<64x32xbf16>, vector<8x32xf32> -> vector<8x32xf32>
    %c0_42 = arith.constant 0 : index
    %c0_43 = arith.constant 0 : index
    %109 = vector.load %arg12[%c0_42, %c0_43] : memref<1x32xf32, #tpu.memory_space<vmem>>, vector<1x32xf32>
    %110 = vector.broadcast %109 : vector<1x32xf32> to vector<8x32xf32>
    %111 = arith.addf %108, %110 : vector<8x32xf32>
    %112 = arith.addf %86, %111 : vector<8x32xf32>
    %c0_44 = arith.constant 0 : index
    %c0_45 = arith.constant 0 : index
    %113 = vector.load %arg13[%c0_44, %c0_45] : memref<1x32xf32, #tpu.memory_space<vmem>>, vector<1x32xf32>
    %c0_46 = arith.constant 0 : index
    %c0_47 = arith.constant 0 : index
    %114 = vector.load %arg14[%c0_46, %c0_47] : memref<1x32xf32, #tpu.memory_space<vmem>>, vector<1x32xf32>
    %cst_48 = arith.constant dense<0.000000e+00> : vector<8xf32>
    %115 = vector.multi_reduction <add>, %112, %cst_48 [1] : vector<8x32xf32> to vector<8xf32>
    %116 = vector.shape_cast %115 : vector<8xf32> to vector<8x1xf32>
    %cst_49 = arith.constant 3.200000e+01 : f32
    %117 = vector.broadcast %cst_49 : f32 to vector<8x1xf32>
    %118 = arith.divf %116, %117 : vector<8x1xf32>
    %119 = vector.broadcast %118 : vector<8x1xf32> to vector<8x32xf32>
    %120 = arith.subf %112, %119 : vector<8x32xf32>
    %121 = arith.mulf %120, %120 : vector<8x32xf32>
    %cst_50 = arith.constant dense<0.000000e+00> : vector<8xf32>
    %122 = vector.multi_reduction <add>, %121, %cst_50 [1] : vector<8x32xf32> to vector<8xf32>
    %123 = vector.shape_cast %122 : vector<8xf32> to vector<8x1xf32>
    %cst_51 = arith.constant 3.200000e+01 : f32
    %124 = vector.broadcast %cst_51 : f32 to vector<8x1xf32>
    %125 = arith.divf %123, %124 : vector<8x1xf32>
    %126 = vector.broadcast %118 : vector<8x1xf32> to vector<8x32xf32>
    %127 = arith.subf %112, %126 : vector<8x32xf32>
    %cst_52 = arith.constant 9.99999996E-13 : f32
    %128 = vector.broadcast %cst_52 : f32 to vector<8x1xf32>
    %129 = arith.addf %125, %128 : vector<8x1xf32>
    %130 = math.rsqrt %129 : vector<8x1xf32>
    %131 = vector.broadcast %130 : vector<8x1xf32> to vector<8x32xf32>
    %132 = arith.mulf %127, %131 : vector<8x32xf32>
    %133 = vector.broadcast %113 : vector<1x32xf32> to vector<8x32xf32>
    %134 = arith.mulf %132, %133 : vector<8x32xf32>
    %135 = vector.broadcast %114 : vector<1x32xf32> to vector<8x32xf32>
    %136 = arith.addf %134, %135 : vector<8x32xf32>
    %137 = vector.extract_strided_slice %136 {offsets = [0, 0], sizes = [1, 32], strides = [1, 1]} : vector<8x32xf32> to vector<1x32xf32>
    %138 = arith.truncf %137 : vector<1x32xf32> to vector<1x32xbf16>
    %c0_53 = arith.constant 0 : index
    %c0_54 = arith.constant 0 : index
    %139 = vector.load %arg15[%c0_53, %c0_54] : memref<32x16xbf16, #tpu.memory_space<vmem>>, vector<32x16xbf16>
    %cst_55 = arith.constant dense<0.000000e+00> : vector<1x16xf32>
    %140 = tpu.matmul %138, %139, %cst_55 {dimension_numbers = #tpu.dot_dimension_numbers<[1], [0], [0], [1], [0, 0, 1, 1], [], []>} : vector<1x32xbf16>, vector<32x16xbf16>, vector<1x16xf32> -> vector<1x16xf32>
    %c0_56 = arith.constant 0 : index
    %c0_57 = arith.constant 0 : index
    %141 = vector.load %arg16[%c0_56, %c0_57] : memref<1x16xf32, #tpu.memory_space<vmem>>, vector<1x16xf32>
    %142 = arith.addf %140, %141 : vector<1x16xf32>
    %cst_58 = arith.constant 0.000000e+00 : f32
    %143 = vector.broadcast %cst_58 : f32 to vector<1x16xf32>
    %144 = arith.maximumf %142, %143 : vector<1x16xf32>
    %145 = arith.truncf %144 : vector<1x16xf32> to vector<1x16xbf16>
    %c0_59 = arith.constant 0 : index
    %c0_60 = arith.constant 0 : index
    %146 = vector.load %arg17[%c0_59, %c0_60] : memref<16x2xbf16, #tpu.memory_space<vmem>>, vector<16x2xbf16>
    %cst_61 = arith.constant dense<0.000000e+00> : vector<1x2xf32>
    %147 = tpu.matmul %145, %146, %cst_61 {dimension_numbers = #tpu.dot_dimension_numbers<[1], [0], [0], [1], [0, 0, 1, 1], [], []>} : vector<1x16xbf16>, vector<16x2xbf16>, vector<1x2xf32> -> vector<1x2xf32>
    %c0_62 = arith.constant 0 : index
    %c0_63 = arith.constant 0 : index
    %148 = vector.load %arg18[%c0_62, %c0_63] : memref<1x2xf32, #tpu.memory_space<vmem>>, vector<1x2xf32>
    %149 = arith.addf %147, %148 : vector<1x2xf32>
    %150 = arith.index_cast %arg0 : i32 to index
    %c0_64 = arith.constant 0 : index
    %151 = vector.load %arg19[%150, %c0_64] : memref<2x2xf32, #tpu.memory_space<vmem>>, vector<1x2xf32>
    tpu.vector_store %arg19[%150, %c0_64], %149 {strides = array<i32>} : memref<2x2xf32, #tpu.memory_space<vmem>>, vector<1x2xf32>,
    return
  }
  func.func @transform_0(%arg0: i32) -> (i32, i32) {
    %c0_i32 = arith.constant 0 : i32
    %c0_i32_0 = arith.constant 0 : i32
    %c0_i32_1 = arith.constant 0 : i32
    return %c0_i32, %c0_i32_0 : i32, i32
  }
  func.func @transform_1(%arg0: i32) -> (i32, i32) {
    %c0_i32 = arith.constant 0 : i32
    %c0_i32_0 = arith.constant 0 : i32
    return %arg0, %c0_i32 : i32, i32
  }
  func.func @transform_2(%arg0: i32) -> (i32, i32) {
    %c0_i32 = arith.constant 0 : i32
    %c0_i32_0 = arith.constant 0 : i32
    %c0_i32_1 = arith.constant 0 : i32
    return %c0_i32, %c0_i32_0 : i32, i32
  }
  func.func @transform_3(%arg0: i32) -> (i32, i32) {
    %c0_i32 = arith.constant 0 : i32
    %c0_i32_0 = arith.constant 0 : i32
    %c0_i32_1 = arith.constant 0 : i32
    return %c0_i32, %c0_i32_0 : i32, i32
  }
  func.func @transform_4(%arg0: i32) -> (i32, i32) {
    %c0_i32 = arith.constant 0 : i32
    %c0_i32_0 = arith.constant 0 : i32
    %c0_i32_1 = arith.constant 0 : i32
    return %c0_i32, %c0_i32_0 : i32, i32
  }
  func.func @transform_5(%arg0: i32) -> (i32, i32) {
    %c0_i32 = arith.constant 0 : i32
    %c0_i32_0 = arith.constant 0 : i32
    %c0_i32_1 = arith.constant 0 : i32
    return %c0_i32, %c0_i32_0 : i32, i32
  }
  func.func @transform_6(%arg0: i32) -> (i32, i32) {
    %c0_i32 = arith.constant 0 : i32
    %c0_i32_0 = arith.constant 0 : i32
    %c0_i32_1 = arith.constant 0 : i32
    return %c0_i32, %c0_i32_0 : i32, i32
  }
  func.func @transform_7(%arg0: i32) -> (i32, i32) {
    %c0_i32 = arith.constant 0 : i32
    %c0_i32_0 = arith.constant 0 : i32
    %c0_i32_1 = arith.constant 0 : i32
    return %c0_i32, %c0_i32_0 : i32, i32
  }
  func.func @transform_8(%arg0: i32) -> (i32, i32) {
    %c0_i32 = arith.constant 0 : i32
    %c0_i32_0 = arith.constant 0 : i32
    %c0_i32_1 = arith.constant 0 : i32
    return %c0_i32, %c0_i32_0 : i32, i32
  }
  func.func @transform_9(%arg0: i32) -> (i32, i32) {
    %c0_i32 = arith.constant 0 : i32
    %c0_i32_0 = arith.constant 0 : i32
    %c0_i32_1 = arith.constant 0 : i32
    return %c0_i32, %c0_i32_0 : i32, i32
  }
  func.func @transform_10(%arg0: i32) -> (i32, i32) {
    %c0_i32 = arith.constant 0 : i32
    %c0_i32_0 = arith.constant 0 : i32
    %c0_i32_1 = arith.constant 0 : i32
    return %c0_i32, %c0_i32_0 : i32, i32
  }
  func.func @transform_11(%arg0: i32) -> (i32, i32) {
    %c0_i32 = arith.constant 0 : i32
    %c0_i32_0 = arith.constant 0 : i32
    %c0_i32_1 = arith.constant 0 : i32
    return %c0_i32, %c0_i32_0 : i32, i32
  }
  func.func @transform_12(%arg0: i32) -> (i32, i32) {
    %c0_i32 = arith.constant 0 : i32
    %c0_i32_0 = arith.constant 0 : i32
    %c0_i32_1 = arith.constant 0 : i32
    return %c0_i32, %c0_i32_0 : i32, i32
  }
  func.func @transform_13(%arg0: i32) -> (i32, i32) {
    %c0_i32 = arith.constant 0 : i32
    %c0_i32_0 = arith.constant 0 : i32
    %c0_i32_1 = arith.constant 0 : i32
    return %c0_i32, %c0_i32_0 : i32, i32
  }
  func.func @transform_14(%arg0: i32) -> (i32, i32) {
    %c0_i32 = arith.constant 0 : i32
    %c0_i32_0 = arith.constant 0 : i32
    %c0_i32_1 = arith.constant 0 : i32
    return %c0_i32, %c0_i32_0 : i32, i32
  }
  func.func @transform_15(%arg0: i32) -> (i32, i32) {
    %c0_i32 = arith.constant 0 : i32
    %c0_i32_0 = arith.constant 0 : i32
    %c0_i32_1 = arith.constant 0 : i32
    return %c0_i32, %c0_i32_0 : i32, i32
  }
  func.func @transform_16(%arg0: i32) -> (i32, i32) {
    %c0_i32 = arith.constant 0 : i32
    %c0_i32_0 = arith.constant 0 : i32
    %c0_i32_1 = arith.constant 0 : i32
    return %c0_i32, %c0_i32_0 : i32, i32
  }
  func.func @transform_17(%arg0: i32) -> (i32, i32) {
    %c0_i32 = arith.constant 0 : i32
    %c0_i32_0 = arith.constant 0 : i32
    %c0_i32_1 = arith.constant 0 : i32
    return %c0_i32, %c0_i32_0 : i32, i32
  }
  func.func @transform_18(%arg0: i32) -> (i32, i32) {
    %c0_i32 = arith.constant 0 : i32
    %c0_i32_0 = arith.constant 0 : i32
    %c0_i32_1 = arith.constant 0 : i32
    return %c0_i32, %c0_i32_0 : i32, i32
  }
}

</mosaic_0001>

<llo_original>
// kernel: _lambda_.2
$region0: #{_lambda_.2}
  #allocation0 [shape = 'u32[]', space=smem, size = 0x4, offset = 0x4, fixed_abs, tag = 'smem constant byte address 0x4 - core index']
  #allocation1 [shape = 'u32[144,128]{1,0:T(1,128)}', space=vmem, size = 0x12000, scoped, tag = 'internal scratch']
  %s0 = inlined_call_operand.vmem [shape: f32[2,8], index: 0, kind: input, shape index: {}]
  %s1 = inlined_call_operand.vmem [shape: f32[16,32], index: 1, kind: input, shape index: {}]
  %s2 = inlined_call_operand.vmem [shape: bf16[32,96], index: 2, kind: input, shape index: {}]
  %s3 = inlined_call_operand.vmem [shape: f32[1,96], index: 3, kind: input, shape index: {}]
  %s4 = inlined_call_operand.vmem [shape: bf16[32,32], index: 4, kind: input, shape index: {}]
  %s5 = inlined_call_operand.vmem [shape: f32[1,32], index: 5, kind: input, shape index: {}, may-alias: {5,7,11,13,15}]
  %s6 = inlined_call_operand.vmem [shape: f32[1,32], index: 6, kind: input, shape index: {}, may-alias: {6,12,14}]
  %s7 = inlined_call_operand.vmem [shape: f32[1,32], index: 7, kind: input, shape index: {}, may-alias: {5,7,11,13,15}]
  %s8 = inlined_call_operand.vmem [shape: bf16[32,64], index: 8, kind: input, shape index: {}]
  %s9 = inlined_call_operand.vmem [shape: f32[1,64], index: 9, kind: input, shape index: {}]
  %s10 = inlined_call_operand.vmem [shape: bf16[64,32], index: 10, kind: input, shape index: {}]
  %s11 = inlined_call_operand.vmem [shape: f32[1,32], index: 11, kind: input, shape index: {}, may-alias: {5,7,11,13,15}]
  %s12 = inlined_call_operand.vmem [shape: f32[1,32], index: 12, kind: input, shape index: {}, may-alias: {6,12,14}]
  %s13 = inlined_call_operand.vmem [shape: f32[1,32], index: 13, kind: input, shape index: {}, may-alias: {5,7,11,13,15}]
  %s14 = inlined_call_operand.vmem [shape: f32[1,32], index: 14, kind: input, shape index: {}, may-alias: {6,12,14}]
  %s15 = inlined_call_operand.vmem [shape: f32[1,32], index: 15, kind: input, shape index: {}, may-alias: {5,7,11,13,15}]
  %s16 = inlined_call_operand.vmem [shape: f32[16,32], index: 16, kind: output, shape index: {}]
  %s17 = sld [smem:[#allocation0]]
  $region97: #{_lambda_.2} parent=0
    _
  %s19 = ssub.s32 1, %s17
  %s20 = scalar_select 0, %s19, %s17
  loop: start=0, step=1, limit=4
  $region2: #{_lambda_.2} parent=0 // loop_pre_header
    _
  $region3: #{_lambda_.2} parent=0 // loop_header
    %s22 = sphi 0, %s26
    %p23 = scmp.ge.s32.totalorder %s22, 4
    %s30 = sphi 0, %s30
    %s32 = sphi 0, %s30
    %s33 = sphi 0, %s32
    %s47 = sphi 0, %s33
    %s53 = sphi 0, %s55
    %s56 = sphi 0, %s53
    %s57 = sphi 0, %s56
    %s73 = sphi 0, %s57
    %s77 = sphi 0, %s77
    %s79 = sphi 0, %s77
    %s80 = sphi 0, %s79
    %s94 = sphi 0, %s80
    %s98 = sphi 0, %s98
    %s100 = sphi 0, %s98
    %s101 = sphi 0, %s100
    %s115 = sphi 0, %s101
    %s119 = sphi 0, %s119
    %s121 = sphi 0, %s119
    %s122 = sphi 0, %s121
    %s136 = sphi 0, %s122
    %s140 = sphi 0, %s140
    %s142 = sphi 0, %s140
    %s143 = sphi 0, %s142
    %s157 = sphi 0, %s143
    %s161 = sphi 0, %s161
    %s163 = sphi 0, %s161
    %s164 = sphi 0, %s163
    %s178 = sphi 0, %s164
    %s182 = sphi 0, %s182
    %s184 = sphi 0, %s182
    %s185 = sphi 0, %s184
    %s199 = sphi 0, %s185
    %s203 = sphi 0, %s203
    %s205 = sphi 0, %s203
    %s206 = sphi 0, %s205
    %s220 = sphi 0, %s206
    %s224 = sphi 0, %s224
    %s226 = sphi 0, %s224
    %s227 = sphi 0, %s226
    %s241 = sphi 0, %s227
    %s245 = sphi 0, %s245
    %s247 = sphi 0, %s245
    %s248 = sphi 0, %s247
    %s262 = sphi 0, %s248
    %s266 = sphi 0, %s266
    %s268 = sphi 0, %s266
    %s269 = sphi 0, %s268
    %s283 = sphi 0, %s269
    %s287 = sphi 0, %s287
    %s289 = sphi 0, %s287
    %s290 = sphi 0, %s289
    %s304 = sphi 0, %s290
    %s308 = sphi 0, %s308
    %s310 = sphi 0, %s308
    %s311 = sphi 0, %s310
    %s325 = sphi 0, %s311
    %s329 = sphi 0, %s329
    %s331 = sphi 0, %s329
    %s332 = sphi 0, %s331
    %s346 = sphi 0, %s332
    %s350 = sphi 0, %s350
    %s352 = sphi 0, %s350
    %s353 = sphi 0, %s352
    %s367 = sphi 0, %s353
    %s373 = sphi 0, %s375
    %s376 = sphi 0, %s373
    %s377 = sphi 0, %s376
    %s393 = sphi 0, %s377
  $region4: #{_lambda_.2} parent=0 // loop_header_branch
    %25 = sbr.rel (%p23) target = $region8
  $region5: #{_lambda_.2} parent=0 // loop_body
    %s27 = ssub.s32 %s22, 1
    %s28 = ssub.s32 %s22, 2
    %s29 = sadd.s32 %s22, 1
    %s31 = sadd.s32 %s30, 1
    %p34 = scmp.eq.s32.totalorder %s22, 1
    %p35 = scmp.ne.s32.totalorder %s30, %s32
    %p36 = scmp.eq.s32.totalorder %s22, 0
    %p37 = por %p35, %p36
    %p38 = scmp.ne.s32.totalorder %s30, %s32
    %p39 = scmp.eq.s32.totalorder %s27, 1
    %p40 = por %p38, %p39
    %p41 = scmp.ne.s32.totalorder %s32, %s33
    %p42 = scmp.eq.s32.totalorder %s27, 0
    %p43 = por %p41, %p42
    %p44 = scmp.ne.s32.totalorder %s32, %s33
    %p45 = scmp.eq.s32.totalorder %s28, 1
    %p46 = por %p44, %p45
    %p48 = scmp.ne.s32.totalorder %s33, %s47
    %p49 = scmp.eq.s32.totalorder %s28, 0
    %p50 = por %p48, %p49
    %s51 = ssub.s32 %s22, %s29
    %p52 = scmp.eq.s32.totalorder %s51, 0
    %s54 = sadd.s32 %s53, 1
    %s55 = scalar_select %p52, %s53, %s54
    %p58 = pneg %p52
    %p59 = scmp.eq.s32.totalorder %s22, 1
    %p60 = por %p58, %p59
    %p61 = scmp.ne.s32.totalorder %s53, %s56
    %p62 = scmp.eq.s32.totalorder %s22, 0
    %p63 = por %p61, %p62
    %p64 = scmp.ne.s32.totalorder %s53, %s56
    %p65 = scmp.eq.s32.totalorder %s27, 1
    %p66 = por %p64, %p65
    %p67 = scmp.ne.s32.totalorder %s56, %s57
    %p68 = scmp.eq.s32.totalorder %s27, 0
    %p69 = por %p67, %p68
    %p70 = scmp.ne.s32.totalorder %s56, %s57
    %p71 = scmp.eq.s32.totalorder %s28, 1
    %p72 = por %p70, %p71
    %p74 = scmp.ne.s32.totalorder %s57, %s73
    %p75 = scmp.eq.s32.totalorder %s28, 0
    %p76 = por %p74, %p75
    %s78 = sadd.s32 %s77, 1
    %p81 = scmp.eq.s32.totalorder %s22, 1
    %p82 = scmp.ne.s32.totalorder %s77, %s79
    %p83 = scmp.eq.s32.totalorder %s22, 0
    %p84 = por %p82, %p83
    %p85 = scmp.ne.s32.totalorder %s77, %s79
    %p86 = scmp.eq.s32.totalorder %s27, 1
    %p87 = por %p85, %p86
    %p88 = scmp.ne.s32.totalorder %s79, %s80
    %p89 = scmp.eq.s32.totalorder %s27, 0
    %p90 = por %p88, %p89
    %p91 = scmp.ne.s32.totalorder %s79, %s80
    %p92 = scmp.eq.s32.totalorder %s28, 1
    %p93 = por %p91, %p92
    %p95 = scmp.ne.s32.totalorder %s80, %s94
    %p96 = scmp.eq.s32.totalorder %s28, 0
    %p97 = por %p95, %p96
    %s99 = sadd.s32 %s98, 1
    %p102 = scmp.eq.s32.totalorder %s22, 1
    %p103 = scmp.ne.s32.totalorder %s98, %s100
    %p104 = scmp.eq.s32.totalorder %s22, 0
    %p105 = por %p103, %p104
    %p106 = scmp.ne.s32.totalorder %s98, %s100
    %p107 = scmp.eq.s32.totalorder %s27, 1
    %p108 = por %p106, %p107
    %p109 = scmp.ne.s32.totalorder %s100, %s101
    %p110 = scmp.eq.s32.totalorder %s27, 0
    %p111 = por %p109, %p110
    %p112 = scmp.ne.s32.totalorder %s100, %s101
    %p113 = scmp.eq.s32.totalorder %s28, 1
    %p114 = por %p112, %p113
    %p116 = scmp.ne.s32.totalorder %s101, %s115
    %p117 = scmp.eq.s32.totalorder %s28, 0
    %p118 = por %p116, %p117
    %s120 = sadd.s32 %s119, 1
    %p123 = scmp.eq.s32.totalorder %s22, 1
    %p124 = scmp.ne.s32.totalorder %s119, %s121
    %p125 = scmp.eq.s32.totalorder %s22, 0
    %p126 = por %p124, %p125
    %p127 = scmp.ne.s32.totalorder %s119, %s121
    %p128 = scmp.eq.s32.totalorder %s27, 1
    %p129 = por %p127, %p128
    %p130 = scmp.ne.s32.totalorder %s121, %s122
    %p131 = scmp.eq.s32.totalorder %s27, 0
    %p132 = por %p130, %p131
    %p133 = scmp.ne.s32.totalorder %s121, %s122
    %p134 = scmp.eq.s32.totalorder %s28, 1
    %p135 = por %p133, %p134
    %p137 = scmp.ne.s32.totalorder %s122, %s136
    %p138 = scmp.eq.s32.totalorder %s28, 0
    %p139 = por %p137, %p138
    %s141 = sadd.s32 %s140, 1
    %p144 = scmp.eq.s32.totalorder %s22, 1
    %p145 = scmp.ne.s32.totalorder %s140, %s142
    %p146 = scmp.eq.s32.totalorder %s22, 0
    %p147 = por %p145, %p146
    %p148 = scmp.ne.s32.totalorder %s140, %s142
    %p149 = scmp.eq.s32.totalorder %s27, 1
    %p150 = por %p148, %p149
    %p151 = scmp.ne.s32.totalorder %s142, %s143
    %p152 = scmp.eq.s32.totalorder %s27, 0
    %p153 = por %p151, %p152
    %p154 = scmp.ne.s32.totalorder %s142, %s143
    %p155 = scmp.eq.s32.totalorder %s28, 1
    %p156 = por %p154, %p155
    %p158 = scmp.ne.s32.totalorder %s143, %s157
    %p159 = scmp.eq.s32.totalorder %s28, 0
    %p160 = por %p158, %p159
    %s162 = sadd.s32 %s161, 1
    %p165 = scmp.eq.s32.totalorder %s22, 1
    %p166 = scmp.ne.s32.totalorder %s161, %s163
    %p167 = scmp.eq.s32.totalorder %s22, 0
    %p168 = por %p166, %p167
    %p169 = scmp.ne.s32.totalorder %s161, %s163
    %p170 = scmp.eq.s32.totalorder %s27, 1
    %p171 = por %p169, %p170
    %p172 = scmp.ne.s32.totalorder %s163, %s164
    %p173 = scmp.eq.s32.totalorder %s27, 0
    %p174 = por %p172, %p173
    %p175 = scmp.ne.s32.totalorder %s163, %s164
    %p176 = scmp.eq.s32.totalorder %s28, 1
    %p177 = por %p175, %p176
    %p179 = scmp.ne.s32.totalorder %s164, %s178
    %p180 = scmp.eq.s32.totalorder %s28, 0
    %p181 = por %p179, %p180
    %s183 = sadd.s32 %s182, 1
    %p186 = scmp.eq.s32.totalorder %s22, 1
    %p187 = scmp.ne.s32.totalorder %s182, %s184
    %p188 = scmp.eq.s32.totalorder %s22, 0
    %p189 = por %p187, %p188
    %p190 = scmp.ne.s32.totalorder %s182, %s184
    %p191 = scmp.eq.s32.totalorder %s27, 1
    %p192 = por %p190, %p191
    %p193 = scmp.ne.s32.totalorder %s184, %s185
    %p194 = scmp.eq.s32.totalorder %s27, 0
    %p195 = por %p193, %p194
    %p196 = scmp.ne.s32.totalorder %s184, %s185
    %p197 = scmp.eq.s32.totalorder %s28, 1
    %p198 = por %p196, %p197
    %p200 = scmp.ne.s32.totalorder %s185, %s199
    %p201 = scmp.eq.s32.totalorder %s28, 0
    %p202 = por %p200, %p201
    %s204 = sadd.s32 %s203, 1
    %p207 = scmp.eq.s32.totalorder %s22, 1
    %p208 = scmp.ne.s32.totalorder %s203, %s205
    %p209 = scmp.eq.s32.totalorder %s22, 0
    %p210 = por %p208, %p209
    %p211 = scmp.ne.s32.totalorder %s203, %s205
    %p212 = scmp.eq.s32.totalorder %s27, 1
    %p213 = por %p211, %p212
    %p214 = scmp.ne.s32.totalorder %s205, %s206
    %p215 = scmp.eq.s32.totalorder %s27, 0
    %p216 = por %p214, %p215
    %p217 = scmp.ne.s32.totalorder %s205, %s206
    %p218 = scmp.eq.s32.totalorder %s28, 1
    %p219 = por %p217, %p218
    %p221 = scmp.ne.s32.totalorder %s206, %s220
    %p222 = scmp.eq.s32.totalorder %s28, 0
    %p223 = por %p221, %p222
    %s225 = sadd.s32 %s224, 1
    %p228 = scmp.eq.s32.totalorder %s22, 1
    %p229 = scmp.ne.s32.totalorder %s224, %s226
    %p230 = scmp.eq.s32.totalorder %s22, 0
    %p231 = por %p229, %p230
    %p232 = scmp.ne.s32.totalorder %s224, %s226
    %p233 = scmp.eq.s32.totalorder %s27, 1
    %p234 = por %p232, %p233
    %p235 = scmp.ne.s32.totalorder %s226, %s227
    %p236 = scmp.eq.s32.totalorder %s27, 0
    %p237 = por %p235, %p236
    %p238 = scmp.ne.s32.totalorder %s226, %s227
    %p239 = scmp.eq.s32.totalorder %s28, 1
    %p240 = por %p238, %p239
    %p242 = scmp.ne.s32.totalorder %s227, %s241
    %p243 = scmp.eq.s32.totalorder %s28, 0
    %p244 = por %p242, %p243
    %s246 = sadd.s32 %s245, 1
    %p249 = scmp.eq.s32.totalorder %s22, 1
    %p250 = scmp.ne.s32.totalorder %s245, %s247
    %p251 = scmp.eq.s32.totalorder %s22, 0
    %p252 = por %p250, %p251
    %p253 = scmp.ne.s32.totalorder %s245, %s247
    %p254 = scmp.eq.s32.totalorder %s27, 1
    %p255 = por %p253, %p254
    %p256 = scmp.ne.s32.totalorder %s247, %s248
    %p257 = scmp.eq.s32.totalorder %s27, 0
    %p258 = por %p256, %p257
    %p259 = scmp.ne.s32.totalorder %s247, %s248
    %p260 = scmp.eq.s32.totalorder %s28, 1
    %p261 = por %p259, %p260
    %p263 = scmp.ne.s32.totalorder %s248, %s262
    %p264 = scmp.eq.s32.totalorder %s28, 0
    %p265 = por %p263, %p264
    %s267 = sadd.s32 %s266, 1
    %p270 = scmp.eq.s32.totalorder %s22, 1
    %p271 = scmp.ne.s32.totalorder %s266, %s268
    %p272 = scmp.eq.s32.totalorder %s22, 0
    %p273 = por %p271, %p272
    %p274 = scmp.ne.s32.totalorder %s266, %s268
    %p275 = scmp.eq.s32.totalorder %s27, 1
    %p276 = por %p274, %p275
    %p277 = scmp.ne.s32.totalorder %s268, %s269
    %p278 = scmp.eq.s32.totalorder %s27, 0
    %p279 = por %p277, %p278
    %p280 = scmp.ne.s32.totalorder %s268, %s269
    %p281 = scmp.eq.s32.totalorder %s28, 1
    %p282 = por %p280, %p281
    %p284 = scmp.ne.s32.totalorder %s269, %s283
    %p285 = scmp.eq.s32.totalorder %s28, 0
    %p286 = por %p284, %p285
    %s288 = sadd.s32 %s287, 1
    %p291 = scmp.eq.s32.totalorder %s22, 1
    %p292 = scmp.ne.s32.totalorder %s287, %s289
    %p293 = scmp.eq.s32.totalorder %s22, 0
    %p294 = por %p292, %p293
    %p295 = scmp.ne.s32.totalorder %s287, %s289
    %p296 = scmp.eq.s32.totalorder %s27, 1
    %p297 = por %p295, %p296
    %p298 = scmp.ne.s32.totalorder %s289, %s290
    %p299 = scmp.eq.s32.totalorder %s27, 0
    %p300 = por %p298, %p299
    %p301 = scmp.ne.s32.totalorder %s289, %s290
    %p302 = scmp.eq.s32.totalorder %s28, 1
    %p303 = por %p301, %p302
    %p305 = scmp.ne.s32.totalorder %s290, %s304
    %p306 = scmp.eq.s32.totalorder %s28, 0
    %p307 = por %p305, %p306
    %s309 = sadd.s32 %s308, 1
    %p312 = scmp.eq.s32.totalorder %s22, 1
    %p313 = scmp.ne.s32.totalorder %s308, %s310
    %p314 = scmp.eq.s32.totalorder %s22, 0
    %p315 = por %p313, %p314
    %p316 = scmp.ne.s32.totalorder %s308, %s310
    %p317 = scmp.eq.s32.totalorder %s27, 1
    %p318 = por %p316, %p317
    %p319 = scmp.ne.s32.totalorder %s310, %s311
    %p320 = scmp.eq.s32.totalorder %s27, 0
    %p321 = por %p319, %p320
    %p322 = scmp.ne.s32.totalorder %s310, %s311
    %p323 = scmp.eq.s32.totalorder %s28, 1
    %p324 = por %p322, %p323
    %p326 = scmp.ne.s32.totalorder %s311, %s325
    %p327 = scmp.eq.s32.totalorder %s28, 0
    %p328 = por %p326, %p327
    %s330 = sadd.s32 %s329, 1
    %p333 = scmp.eq.s32.totalorder %s22, 1
    %p334 = scmp.ne.s32.totalorder %s329, %s331
    %p335 = scmp.eq.s32.totalorder %s22, 0
    %p336 = por %p334, %p335
    %p337 = scmp.ne.s32.totalorder %s329, %s331
    %p338 = scmp.eq.s32.totalorder %s27, 1
    %p339 = por %p337, %p338
    %p340 = scmp.ne.s32.totalorder %s331, %s332
    %p341 = scmp.eq.s32.totalorder %s27, 0
    %p342 = por %p340, %p341
    %p343 = scmp.ne.s32.totalorder %s331, %s332
    %p344 = scmp.eq.s32.totalorder %s28, 1
    %p345 = por %p343, %p344
    %p347 = scmp.ne.s32.totalorder %s332, %s346
    %p348 = scmp.eq.s32.totalorder %s28, 0
    %p349 = por %p347, %p348
    %s351 = sadd.s32 %s350, 1
    %p354 = scmp.eq.s32.totalorder %s22, 1
    %p355 = scmp.ne.s32.totalorder %s350, %s352
    %p356 = scmp.eq.s32.totalorder %s22, 0
    %p357 = por %p355, %p356
    %p358 = scmp.ne.s32.totalorder %s350, %s352
    %p359 = scmp.eq.s32.totalorder %s27, 1
    %p360 = por %p358, %p359
    %p361 = scmp.ne.s32.totalorder %s352, %s353
    %p362 = scmp.eq.s32.totalorder %s27, 0
    %p363 = por %p361, %p362
    %p364 = scmp.ne.s32.totalorder %s352, %s353
    %p365 = scmp.eq.s32.totalorder %s28, 1
    %p366 = por %p364, %p365
    %p368 = scmp.ne.s32.totalorder %s353, %s367
    %p369 = scmp.eq.s32.totalorder %s28, 0
    %p370 = por %p368, %p369
    %s371 = ssub.s32 %s22, %s29
    %p372 = scmp.eq.s32.totalorder %s371, 0
    %s374 = sadd.s32 %s373, 1
    %s375 = scalar_select %p372, %s373, %s374
    %p378 = pneg %p372
    %p379 = scmp.eq.s32.totalorder %s22, 1
    %p380 = por %p378, %p379
    %p381 = scmp.ne.s32.totalorder %s373, %s376
    %p382 = scmp.eq.s32.totalorder %s22, 0
    %p383 = por %p381, %p382
    %p384 = scmp.ne.s32.totalorder %s373, %s376
    %p385 = scmp.eq.s32.totalorder %s27, 1
    %p386 = por %p384, %p385
    %p387 = scmp.ne.s32.totalorder %s376, %s377
    %p388 = scmp.eq.s32.totalorder %s27, 0
    %p389 = por %p387, %p388
    %p390 = scmp.ne.s32.totalorder %s376, %s377
    %p391 = scmp.eq.s32.totalorder %s28, 1
    %p392 = por %p390, %p391
    %p394 = scmp.ne.s32.totalorder %s377, %s393
    %p395 = scmp.eq.s32.totalorder %s28, 0
    %p396 = por %p394, %p395
    %p397 = scmp.le.s32.totalorder 1, %s22
    %p398 = scmp.lt.s32.totalorder %s22, 3
    %p399 = pnand %p397, %p398
    %p400 = pneg %p399
    // Predicated region
    $region9: #{_lambda_.2} parent=5 // pred_check
      _
    $region10: #{_lambda_.2} parent=5 // pred_check_branch
      %402 = sbr.rel (%p399) target = $region12
    $region11: #{_lambda_.2} parent=5 // pred_region
      %s403 = ssub.s32 %s22, 1
      // Predicated region
      $region13: #{_lambda_.2} parent=11 // pred_check
        %p404 = pneg %p43
      $region14: #{_lambda_.2} parent=11 // pred_check_branch
        %406 = sbr.rel (%p404) target = $region16
      $region15: #{_lambda_.2} parent=11 // pred_region
        _
      $region16: #{_lambda_.2} parent=11 // pred_fallthru
        _
      // Predicated region
      $region17: #{_lambda_.2} parent=11 // pred_check
        %p407 = pneg %p90
      $region18: #{_lambda_.2} parent=11 // pred_check_branch
        %409 = sbr.rel (%p407) target = $region20
      $region19: #{_lambda_.2} parent=11 // pred_region
        _
      $region20: #{_lambda_.2} parent=11 // pred_fallthru
        _
      // Predicated region
      $region21: #{_lambda_.2} parent=11 // pred_check
        %p410 = pneg %p111
      $region22: #{_lambda_.2} parent=11 // pred_check_branch
        %412 = sbr.rel (%p410) target = $region24
      $region23: #{_lambda_.2} parent=11 // pred_region
        _
      $region24: #{_lambda_.2} parent=11 // pred_fallthru
        _
      // Predicated region
      $region25: #{_lambda_.2} parent=11 // pred_check
        %p413 = pneg %p132
      $region26: #{_lambda_.2} parent=11 // pred_check_branch
        %415 = sbr.rel (%p413) target = $region28
      $region27: #{_lambda_.2} parent=11 // pred_region
        _
      $region28: #{_lambda_.2} parent=11 // pred_fallthru
        _
      // Predicated region
      $region29: #{_lambda_.2} parent=11 // pred_check
        %p416 = pneg %p153
      $region30: #{_lambda_.2} parent=11 // pred_check_branch
        %418 = sbr.rel (%p416) target = $region32
      $region31: #{_lambda_.2} parent=11 // pred_region
        _
      $region32: #{_lambda_.2} parent=11 // pred_fallthru
        _
      // Predicated region
      $region33: #{_lambda_.2} parent=11 // pred_check
        %p419 = pneg %p174
      $region34: #{_lambda_.2} parent=11 // pred_check_branch
        %421 = sbr.rel (%p419) target = $region36
      $region35: #{_lambda_.2} parent=11 // pred_region
        _
      $region36: #{_lambda_.2} parent=11 // pred_fallthru
        _
      // Predicated region
      $region37: #{_lambda_.2} parent=11 // pred_check
        %p422 = pneg %p195
      $region38: #{_lambda_.2} parent=11 // pred_check_branch
        %424 = sbr.rel (%p422) target = $region40
      $region39: #{_lambda_.2} parent=11 // pred_region
        _
      $region40: #{_lambda_.2} parent=11 // pred_fallthru
        _
      // Predicated region
      $region41: #{_lambda_.2} parent=11 // pred_check
        %p425 = pneg %p216
      $region42: #{_lambda_.2} parent=11 // pred_check_branch
        %427 = sbr.rel (%p425) target = $region44
      $region43: #{_lambda_.2} parent=11 // pred_region
        _
      $region44: #{_lambda_.2} parent=11 // pred_fallthru
        _
      // Predicated region
      $region45: #{_lambda_.2} parent=11 // pred_check
        %p428 = pneg %p237
      $region46: #{_lambda_.2} parent=11 // pred_check_branch
        %430 = sbr.rel (%p428) target = $region48
      $region47: #{_lambda_.2} parent=11 // pred_region
        _
      $region48: #{_lambda_.2} parent=11 // pred_fallthru
        _
      // Predicated region
      $region49: #{_lambda_.2} parent=11 // pred_check
        %p431 = pneg %p258
      $region50: #{_lambda_.2} parent=11 // pred_check_branch
        %433 = sbr.rel (%p431) target = $region52
      $region51: #{_lambda_.2} parent=11 // pred_region
        _
      $region52: #{_lambda_.2} parent=11 // pred_fallthru
        _
      // Predicated region
      $region53: #{_lambda_.2} parent=11 // pred_check
        %p434 = pneg %p279
      $region54: #{_lambda_.2} parent=11 // pred_check_branch
        %436 = sbr.rel (%p434) target = $region56
      $region55: #{_lambda_.2} parent=11 // pred_region
        _
      $region56: #{_lambda_.2} parent=11 // pred_fallthru
        _
      // Predicated region
      $region57: #{_lambda_.2} parent=11 // pred_check
        %p437 = pneg %p300
      $region58: #{_lambda_.2} parent=11 // pred_check_branch
        %439 = sbr.rel (%p437) target = $region60
      $region59: #{_lambda_.2} parent=11 // pred_region
        _
      $region60: #{_lambda_.2} parent=11 // pred_fallthru
        _
      // Predicated region
      $region61: #{_lambda_.2} parent=11 // pred_check
        %p440 = pneg %p321
      $region62: #{_lambda_.2} parent=11 // pred_check_branch
        %442 = sbr.rel (%p440) target = $region64
      $region63: #{_lambda_.2} parent=11 // pred_region
        _
      $region64: #{_lambda_.2} parent=11 // pred_fallthru
        _
      // Predicated region
      $region65: #{_lambda_.2} parent=11 // pred_check
        %p443 = pneg %p342
      $region66: #{_lambda_.2} parent=11 // pred_check_branch
        %445 = sbr.rel (%p443) target = $region68
      $region67: #{_lambda_.2} parent=11 // pred_region
        _
      $region68: #{_lambda_.2} parent=11 // pred_fallthru
        _
      // Predicated region
      $region69: #{_lambda_.2} parent=11 // pred_check
        %p446 = pneg %p363
      $region70: #{_lambda_.2} parent=11 // pred_check_branch
        %448 = sbr.rel (%p446) target = $region72
      $region71: #{_lambda_.2} parent=11 // pred_region
        _
      $region72: #{_lambda_.2} parent=11 // pred_fallthru
        _
    $region12: #{_lambda_.2} parent=5 // pred_fallthru
      _
    %p449 = scmp.lt.s32.totalorder %s22, 2
    // Predicated region
    $region73: #{_lambda_.2} parent=5 // pred_check
      %p450 = pneg %p449
    $region74: #{_lambda_.2} parent=5 // pred_check_branch
      %452 = sbr.rel (%p450) target = $region76
    $region75: #{_lambda_.2} parent=5 // pred_region
      // Predicated region
      $region77: #{_lambda_.2} parent=75 // pred_check
        %p453 = pneg %p63
      $region78: #{_lambda_.2} parent=75 // pred_check_branch
        %455 = sbr.rel (%p453) target = $region80
      $region79: #{_lambda_.2} parent=75 // pred_region
        %p456 = scmp.lt.s32.totalorder %s22, 1
        %s457 = scalar_select %p456, %s22, 1
        %s458 = smul.addr %s457, 8
        %s459 = scalar_lea.vmem %s1, %s458
      $region80: #{_lambda_.2} parent=75 // pred_fallthru
        _
    $region76: #{_lambda_.2} parent=5 // pred_fallthru
      _
    %p460 = scmp.le.s32.totalorder 1, %s22
    %p461 = scmp.lt.s32.totalorder %s22, 3
    %p462 = pnand %p460, %p461
    %p463 = pneg %p462
    // Predicated region
    $region81: #{_lambda_.2} parent=5 // pred_check
      _
    $region82: #{_lambda_.2} parent=5 // pred_check_branch
      %465 = sbr.rel (%p462) target = $region84
    $region83: #{_lambda_.2} parent=5 // pred_region
      %s466 = ssub.s32 %s22, 1
      %p467 = pneg %p43
      %p468 = pneg %p40
      %p469 = scmp.lt.s32.totalorder %s27, 1
      %s470 = scalar_select %p469, %s27, 1
      %s471 = smul.addr %s470, 8
      %s472 = scalar_lea.vmem %s1, %s471
      %p473 = pneg %p69
      %p474 = pneg %p66
      %p475 = pneg %p90
      %p476 = pneg %p87
      %p477 = pneg %p111
      %p478 = pneg %p108
      %p479 = pneg %p132
      %p480 = pneg %p129
      %p481 = pneg %p153
      %p482 = pneg %p150
      %p483 = pneg %p174
      %p484 = pneg %p171
      %p485 = pneg %p195
      %p486 = pneg %p192
      %p487 = pneg %p216
      %p488 = pneg %p213
      %p489 = pneg %p237
      %p490 = pneg %p234
      %p491 = pneg %p258
      %p492 = pneg %p255
      %p493 = pneg %p279
      %p494 = pneg %p276
      %p495 = pneg %p300
      %p496 = pneg %p297
      %p497 = pneg %p321
      %p498 = pneg %p318
      %p499 = pneg %p342
      %p500 = pneg %p339
      %p501 = pneg %p363
      %p502 = pneg %p360
      %p503 = pneg %p389
      %p504 = pneg %p386
      %p505 = scmp.lt.s32.totalorder %s27, 1
      %s506 = scalar_select %p505, %s27, 1
      %s507 = smul.addr %s506, 8
      %s508 = scalar_lea.vmem %s16, %s507
      %p509 = scmp.lt.s32.totalorder %s27, 1
      %s510 = scalar_select %p509, %s27, 1
      %s511 = smul.addr %s510, 8
      %s512 = scalar_lea.vmem %s1, %s511
      %p513 = scmp.lt.s32.totalorder %s27, 1
      %s514 = scalar_select %p513, %s27, 1
      %s515 = smul.addr %s514, 8
      %s516 = scalar_lea.vmem %s16, %s515
      %v518 = vld [vmem:[%s512] sm:$0xff]
      %v519 = vld [vmem:[%s14] sm:$0x1]
      %v520 = vld [vmem:[%s15] sm:$0x1]
      %vm521 = vcmask 261120
      %v522 = vsel %vm521, %v518, 0.0
      %523 = vadd.xlane.f32.xlu0 %v522
      %v524 = vpop.xlane.xlu0 %523
      %v525 = vrcp.pop 32.0
      %v526 = vmul.f32 %v524, %v525
      %v527 = vsub.f32 %v518, %v526
      %v528 = vmul.f32 %v527, %v527
      %v529 = vsel %vm521, %v528, 0.0
      %530 = vadd.xlane.f32.xlu0 %v529
      %v531 = vpop.xlane.xlu0 %530
      %v532 = vmul.f32 %v531, %v525
      %v533 = vadd.f32 %v532, 1e-12
      %v534 = vrsqrt.pop %v533
      %v535 = vmul.f32 %v527, %v534
      %v537 = vlaneseq
      %v538 = vshrl.u32 %v537, 7
      %v539 = vsub.s32 0, %v538
      %v540 = vrot.slane %v519, %v539
      %v542 = vmul.f32 %v535, %v540
      %v544 = vlaneseq
      %v545 = vshrl.u32 %v544, 7
      %v546 = vsub.s32 0, %v545
      %v547 = vrot.slane %v520, %v546
      %v549 = vadd.f32 %v542, %v547
      %s550 = scalar_lea.vmem %s0, %s27
      %v551 = vld [vmem:[%s550] sm:$0x1]
      %v552 = vpack.c.bf16 %v549, %v549
      %v553 = vld [vmem:[%s2] sm:$0xf]
      %v554 = vld [vmem:[%s2 + $0x4] sm:$0xf]
      %v555 = vld [vmem:[%s2 + $0x8] sm:$0xf]
      %v556 = vld [vmem:[%s2 + $0xc] sm:$0xf]
      %v557 = vld [vmem:[%s3] sm:$0x1]
      %v559 = vlaneseq
      %v560 = vshrl.u32 %v559, 7
      %v561 = vsub.s32 0, %v560
      %v562 = vrot.slane %v557, %v561
      %v568 = vunpack.c.l.b16 %v553
      %v569 = vunpack.c.l.b16 %v554
      %v570 = vunpack.c.l.b16 %v555
      %v571 = vunpack.c.l.b16 %v556
      %v572 = vpack.c.b16 %v569, %v568
      %v573 = vpack.c.b16 %v571, %v570
      %v577 = vsel %vm521, %v552, 0
      %579 = vmatprep.subr.bf16.mxu0 0
      %580 = vmatpush1.bf16.msra.mxu0 %v572
      %581 = vmatprep.subr.bf16.mxu0 0
      %582 = vmatpush1.bf16.msra.mxu0 %v573
      %583 = vmatprep.subr.bf16.mxu0 0
      %584 = vmatpush1.bf16.msra.mxu0 0
      %585 = vmatprep.subr.bf16.mxu0 0
      %586 = vmatpush1.bf16.msra.mxu0 0
      %587 = vmatprep.subr.bf16.mxu0 0
      %588 = vmatpush1.bf16.msra.mxu0 0
      %589 = vmatprep.subr.bf16.mxu0 0
      %590 = vmatpush1.bf16.msra.mxu0 0
      %591 = vmatprep.subr.bf16.mxu0 0
      %592 = vmatpush1.bf16.msra.mxu0 0
      %593 = vmatprep.subr.bf16.mxu0 0
      %594 = vmatpush1.bf16.msra.mxu0 0
      %595 = vmatprep.subr.bf16.mxu0 0
      %596 = vmatpush1.bf16.msra.mxu0 0
      %597 = vmatprep.subr.bf16.mxu0 0
      %598 = vmatpush1.bf16.msra.mxu0 0
      %599 = vmatprep.subr.bf16.mxu0 0
      %600 = vmatpush1.bf16.msra.mxu0 0
      %601 = vmatprep.subr.bf16.mxu0 0
      %602 = vmatpush1.bf16.msra.mxu0 0
      %603 = vmatprep.subr.bf16.mxu0 0
      %604 = vmatpush1.bf16.msra.mxu0 0
      %605 = vmatprep.subr.bf16.mxu0 0
      %606 = vmatpush1.bf16.msra.mxu0 0
      %607 = vmatprep.subr.bf16.mxu0 0
      %608 = vmatpush1.bf16.msra.mxu0 0
      %609 = vmatprep.subr.bf16.mxu0 0
      %610 = vmatpush1.bf16.msra.mxu0 0
      %611 = vmatprep.mubr.bf16.mxu0 0
      %612 = vmatmul.mubr.bf16.gmra.mrb[0].mxu0 %v577
      %v613 = vpop.f32.mrb[0].mxu0
      %v614 = vadd.f32 %v562, %v613
      %v615 = vpop.f32.mrb[0].mxu0
      %v616 = vpop.f32.mrb[0].mxu0
      %v617 = vpop.f32.mrb[0].mxu0
      %618 = vdwg.mxu0
      %v619 = vpack.c.bf16 %v614, %v614
      %621 = vrot.lane.b32.xlu0 %v619, 96
      %v622 = vpop.permute.xlu0 %621
      %vm623 = vcmask 130048
      %v625 = vsel %vm623, %v619, 0
      %v628 = vsel %vm623, %v622, 0
      %630 = vmatprep.subr.bf16.mxu0 0
      %631 = vmatpush1.bf16.xpose.msra.mxu0 %v628
      %632 = vmatprep.subr.bf16.mxu0 0
      %633 = vmatpush1.bf16.xpose.msra.mxu0 0
      %634 = vmatprep.subr.bf16.mxu0 0
      %635 = vmatpush1.bf16.xpose.msra.mxu0 0
      %636 = vmatprep.subr.bf16.mxu0 0
      %637 = vmatpush1.bf16.xpose.msra.mxu0 0
      %638 = vmatprep.subr.bf16.mxu0 0
      %639 = vmatpush1.bf16.xpose.msra.mxu0 0
      %640 = vmatprep.subr.bf16.mxu0 0
      %641 = vmatpush1.bf16.xpose.msra.mxu0 0
      %642 = vmatprep.subr.bf16.mxu0 0
      %643 = vmatpush1.bf16.xpose.msra.mxu0 0
      %644 = vmatprep.subr.bf16.mxu0 0
      %645 = vmatpush1.bf16.xpose.msra.mxu0 0
      %646 = vmatprep.subr.bf16.mxu0 0
      %647 = vmatpush1.bf16.xpose.msra.mxu0 0
      %648 = vmatprep.subr.bf16.mxu0 0
      %649 = vmatpush1.bf16.xpose.msra.mxu0 0
      %650 = vmatprep.subr.bf16.mxu0 0
      %651 = vmatpush1.bf16.xpose.msra.mxu0 0
      %652 = vmatprep.subr.bf16.mxu0 0
      %653 = vmatpush1.bf16.xpose.msra.mxu0 0
      %654 = vmatprep.subr.bf16.mxu0 0
      %655 = vmatpush1.bf16.xpose.msra.mxu0 0
      %656 = vmatprep.subr.bf16.mxu0 0
      %657 = vmatpush1.bf16.xpose.msra.mxu0 0
      %658 = vmatprep.subr.bf16.mxu0 0
      %659 = vmatpush1.bf16.xpose.msra.mxu0 0
      %660 = vmatprep.subr.bf16.mxu0 0
      %661 = vmatpush1.bf16.xpose.msra.mxu0 0
      %662 = vmatprep.mubr.bf16.mxu0 0
      %663 = vmatmul.mubr.bf16.gmra.mrb[0].mxu0 %v625
      %v664 = vpop.f32.mrb[0].mxu0
      %v665 = vadd.f32 0.0, %v664
      %v666 = vpop.f32.mrb[0].mxu0
      %v667 = vpop.f32.mrb[0].mxu0
      %v668 = vpop.f32.mrb[0].mxu0
      %669 = vdwg.mxu0
      %v670 = vmul.f32 %v665, 0.25
      %v671 = vlaneseq
      %v672 = vshrl.u32 %v671, 7
      %v673 = vsub.s32 0, %v672
      %v674 = vrot.slane %v551, %v673
      %v675 = vadd.f32 %v670, %v674
      %vm676 = vcmask 64512
      %v677 = vsel %vm676, %v675, -inf
      %678 = vmax.xlane.f32.xlu0 %v677
      %v679 = vpop.xlane.xlu0 %678
      %v680 = vsub.f32 %v675, %v679
      %v681 = vmul.f32 %v680, 1.442695
      %v682 = vpow.pop %v681
      %v683 = vsel %vm676, %v682, 0.0
      %684 = vadd.xlane.f32.xlu0 %v683
      %v685 = vpop.xlane.xlu0 %684
      %v686 = vpack.c.bf16 %v682, %v682
      %687 = vrot.lane.b32.xlu0 %v619, 64
      %v688 = vpop.permute.xlu0 %687
      %v690 = vsel %vm676, %v686, 0
      %vm692 = vcmask 1043456
      %v694 = vsel %vm692, %v688, 0
      %696 = vmatprep.subr.bf16.mxu0 0
      %697 = vmatpush1.bf16.msra.mxu0 %v694
      %698 = vmatprep.subr.bf16.mxu0 0
      %699 = vmatpush1.bf16.msra.mxu0 0
      %700 = vmatprep.subr.bf16.mxu0 0
      %701 = vmatpush1.bf16.msra.mxu0 0
      %702 = vmatprep.subr.bf16.mxu0 0
      %703 = vmatpush1.bf16.msra.mxu0 0
      %704 = vmatprep.subr.bf16.mxu0 0
      %705 = vmatpush1.bf16.msra.mxu0 0
      %706 = vmatprep.subr.bf16.mxu0 0
      %707 = vmatpush1.bf16.msra.mxu0 0
      %708 = vmatprep.subr.bf16.mxu0 0
      %709 = vmatpush1.bf16.msra.mxu0 0
      %710 = vmatprep.subr.bf16.mxu0 0
      %711 = vmatpush1.bf16.msra.mxu0 0
      %712 = vmatprep.subr.bf16.mxu0 0
      %713 = vmatpush1.bf16.msra.mxu0 0
      %714 = vmatprep.subr.bf16.mxu0 0
      %715 = vmatpush1.bf16.msra.mxu0 0
      %716 = vmatprep.subr.bf16.mxu0 0
      %717 = vmatpush1.bf16.msra.mxu0 0
      %718 = vmatprep.subr.bf16.mxu0 0
      %719 = vmatpush1.bf16.msra.mxu0 0
      %720 = vmatprep.subr.bf16.mxu0 0
      %721 = vmatpush1.bf16.msra.mxu0 0
      %722 = vmatprep.subr.bf16.mxu0 0
      %723 = vmatpush1.bf16.msra.mxu0 0
      %724 = vmatprep.subr.bf16.mxu0 0
      %725 = vmatpush1.bf16.msra.mxu0 0
      %726 = vmatprep.subr.bf16.mxu0 0
      %727 = vmatpush1.bf16.msra.mxu0 0
      %728 = vmatprep.mubr.bf16.mxu0 0
      %729 = vmatmul.mubr.bf16.gmra.mrb[0].mxu0 %v690
      %v730 = vpop.f32.mrb[0].mxu0
      %v731 = vadd.f32 0.0, %v730
      %v732 = vpop.f32.mrb[0].mxu0
      %v733 = vpop.f32.mrb[0].mxu0
      %v734 = vpop.f32.mrb[0].mxu0
      %735 = vdwg.mxu0
      %v736 = vrcp.pop %v685
      %v737 = vmul.f32 %v731, %v736
      %738 = vrot.lane.b32.xlu0 %v619, 112
      %v739 = vpop.permute.xlu0 %738
      %740 = vrot.lane.b32.xlu0 %v619, 80
      %v741 = vpop.permute.xlu0 %740
      %v743 = vsel %vm623, %v739, 0
      %v746 = vsel %vm623, %v741, 0
      %748 = vmatprep.subr.bf16.mxu0 0
      %749 = vmatpush1.bf16.xpose.msra.mxu0 %v746
      %750 = vmatprep.subr.bf16.mxu0 0
      %751 = vmatpush1.bf16.xpose.msra.mxu0 0
      %752 = vmatprep.subr.bf16.mxu0 0
      %753 = vmatpush1.bf16.xpose.msra.mxu0 0
      %754 = vmatprep.subr.bf16.mxu0 0
      %755 = vmatpush1.bf16.xpose.msra.mxu0 0
      %756 = vmatprep.subr.bf16.mxu0 0
      %757 = vmatpush1.bf16.xpose.msra.mxu0 0
      %758 = vmatprep.subr.bf16.mxu0 0
      %759 = vmatpush1.bf16.xpose.msra.mxu0 0
      %760 = vmatprep.subr.bf16.mxu0 0
      %761 = vmatpush1.bf16.xpose.msra.mxu0 0
      %762 = vmatprep.subr.bf16.mxu0 0
      %763 = vmatpush1.bf16.xpose.msra.mxu0 0
      %764 = vmatprep.subr.bf16.mxu0 0
      %765 = vmatpush1.bf16.xpose.msra.mxu0 0
      %766 = vmatprep.subr.bf16.mxu0 0
      %767 = vmatpush1.bf16.xpose.msra.mxu0 0
      %768 = vmatprep.subr.bf16.mxu0 0
      %769 = vmatpush1.bf16.xpose.msra.mxu0 0
      %770 = vmatprep.subr.bf16.mxu0 0
      %771 = vmatpush1.bf16.xpose.msra.mxu0 0
      %772 = vmatprep.subr.bf16.mxu0 0
      %773 = vmatpush1.bf16.xpose.msra.mxu0 0
      %774 = vmatprep.subr.bf16.mxu0 0
      %775 = vmatpush1.bf16.xpose.msra.mxu0 0
      %776 = vmatprep.subr.bf16.mxu0 0
      %777 = vmatpush1.bf16.xpose.msra.mxu0 0
      %778 = vmatprep.subr.bf16.mxu0 0
      %779 = vmatpush1.bf16.xpose.msra.mxu0 0
      %780 = vmatprep.mubr.bf16.mxu0 0
      %781 = vmatmul.mubr.bf16.gmra.mrb[0].mxu0 %v743
      %v782 = vpop.f32.mrb[0].mxu0
      %v783 = vadd.f32 0.0, %v782
      %v784 = vpop.f32.mrb[0].mxu0
      %v785 = vpop.f32.mrb[0].mxu0
      %v786 = vpop.f32.mrb[0].mxu0
      %787 = vdwg.mxu0
      %v788 = vmul.f32 %v783, 0.25
      %v789 = vadd.f32 %v788, %v674
      %v790 = vsel %vm676, %v789, -inf
      %791 = vmax.xlane.f32.xlu0 %v790
      %v792 = vpop.xlane.xlu0 %791
      %v793 = vsub.f32 %v789, %v792
      %v794 = vmul.f32 %v793, 1.442695
      %v795 = vpow.pop %v794
      %v796 = vsel %vm676, %v795, 0.0
      %797 = vadd.xlane.f32.xlu0 %v796
      %v798 = vpop.xlane.xlu0 %797
      %v799 = vpack.c.bf16 %v795, %v795
      %800 = vrot.lane.b32.xlu0 %v619, 48
      %v801 = vpop.permute.xlu0 %800
      %v803 = vsel %vm676, %v799, 0
      %v806 = vsel %vm692, %v801, 0
      %808 = vmatprep.subr.bf16.mxu0 0
      %809 = vmatpush1.bf16.msra.mxu0 %v806
      %810 = vmatprep.subr.bf16.mxu0 0
      %811 = vmatpush1.bf16.msra.mxu0 0
      %812 = vmatprep.subr.bf16.mxu0 0
      %813 = vmatpush1.bf16.msra.mxu0 0
      %814 = vmatprep.subr.bf16.mxu0 0
      %815 = vmatpush1.bf16.msra.mxu0 0
      %816 = vmatprep.subr.bf16.mxu0 0
      %817 = vmatpush1.bf16.msra.mxu0 0
      %818 = vmatprep.subr.bf16.mxu0 0
      %819 = vmatpush1.bf16.msra.mxu0 0
      %820 = vmatprep.subr.bf16.mxu0 0
      %821 = vmatpush1.bf16.msra.mxu0 0
      %822 = vmatprep.subr.bf16.mxu0 0
      %823 = vmatpush1.bf16.msra.mxu0 0
      %824 = vmatprep.subr.bf16.mxu0 0
      %825 = vmatpush1.bf16.msra.mxu0 0
      %826 = vmatprep.subr.bf16.mxu0 0
      %827 = vmatpush1.bf16.msra.mxu0 0
      %828 = vmatprep.subr.bf16.mxu0 0
      %829 = vmatpush1.bf16.msra.mxu0 0
      %830 = vmatprep.subr.bf16.mxu0 0
      %831 = vmatpush1.bf16.msra.mxu0 0
      %832 = vmatprep.subr.bf16.mxu0 0
      %833 = vmatpush1.bf16.msra.mxu0 0
      %834 = vmatprep.subr.bf16.mxu0 0
      %835 = vmatpush1.bf16.msra.mxu0 0
      %836 = vmatprep.subr.bf16.mxu0 0
      %837 = vmatpush1.bf16.msra.mxu0 0
      %838 = vmatprep.subr.bf16.mxu0 0
      %839 = vmatpush1.bf16.msra.mxu0 0
      %840 = vmatprep.mubr.bf16.mxu0 0
      %841 = vmatmul.mubr.bf16.gmra.mrb[0].mxu0 %v803
      %v842 = vpop.f32.mrb[0].mxu0
      %v843 = vadd.f32 0.0, %v842
      %v844 = vpop.f32.mrb[0].mxu0
      %v845 = vpop.f32.mrb[0].mxu0
      %v846 = vpop.f32.mrb[0].mxu0
      %847 = vdwg.mxu0
      %v848 = vrcp.pop %v798
      %v849 = vmul.f32 %v843, %v848
      %851 = vrot.lane.b32.xlu0 %v849, 16
      %v852 = vpop.permute.xlu0 %851
      %v854 = vsel %vm623, %v737, %v852
      %v855 = vpack.c.bf16 %v854, %v854
      %v856 = vld [vmem:[%s4] sm:$0xf]
      %v857 = vld [vmem:[%s4 + $0x4] sm:$0xf]
      %v858 = vld [vmem:[%s4 + $0x8] sm:$0xf]
      %v859 = vld [vmem:[%s4 + $0xc] sm:$0xf]
      %v860 = vld [vmem:[%s5] sm:$0x1]
      %v862 = vlaneseq
      %v863 = vshrl.u32 %v862, 7
      %v864 = vsub.s32 0, %v863
      %v865 = vrot.slane %v860, %v864
      %v871 = vunpack.c.l.b16 %v856
      %v872 = vunpack.c.l.b16 %v857
      %v873 = vunpack.c.l.b16 %v858
      %v874 = vunpack.c.l.b16 %v859
      %v875 = vpack.c.b16 %v872, %v871
      %v876 = vpack.c.b16 %v874, %v873
      %v880 = vsel %vm521, %v855, 0
      %882 = vmatprep.subr.bf16.mxu0 0
      %883 = vmatpush1.bf16.msra.mxu0 %v875
      %884 = vmatprep.subr.bf16.mxu0 0
      %885 = vmatpush1.bf16.msra.mxu0 %v876
      %886 = vmatprep.subr.bf16.mxu0 0
      %887 = vmatpush1.bf16.msra.mxu0 0
      %888 = vmatprep.subr.bf16.mxu0 0
      %889 = vmatpush1.bf16.msra.mxu0 0
      %890 = vmatprep.subr.bf16.mxu0 0
      %891 = vmatpush1.bf16.msra.mxu0 0
      %892 = vmatprep.subr.bf16.mxu0 0
      %893 = vmatpush1.bf16.msra.mxu0 0
      %894 = vmatprep.subr.bf16.mxu0 0
      %895 = vmatpush1.bf16.msra.mxu0 0
      %896 = vmatprep.subr.bf16.mxu0 0
      %897 = vmatpush1.bf16.msra.mxu0 0
      %898 = vmatprep.subr.bf16.mxu0 0
      %899 = vmatpush1.bf16.msra.mxu0 0
      %900 = vmatprep.subr.bf16.mxu0 0
      %901 = vmatpush1.bf16.msra.mxu0 0
      %902 = vmatprep.subr.bf16.mxu0 0
      %903 = vmatpush1.bf16.msra.mxu0 0
      %904 = vmatprep.subr.bf16.mxu0 0
      %905 = vmatpush1.bf16.msra.mxu0 0
      %906 = vmatprep.subr.bf16.mxu0 0
      %907 = vmatpush1.bf16.msra.mxu0 0
      %908 = vmatprep.subr.bf16.mxu0 0
      %909 = vmatpush1.bf16.msra.mxu0 0
      %910 = vmatprep.subr.bf16.mxu0 0
      %911 = vmatpush1.bf16.msra.mxu0 0
      %912 = vmatprep.subr.bf16.mxu0 0
      %913 = vmatpush1.bf16.msra.mxu0 0
      %914 = vmatprep.mubr.bf16.mxu0 0
      %915 = vmatmul.mubr.bf16.gmra.mrb[0].mxu0 %v880
      %v916 = vpop.f32.mrb[0].mxu0
      %v917 = vadd.f32 %v865, %v916
      %v918 = vpop.f32.mrb[0].mxu0
      %v919 = vpop.f32.mrb[0].mxu0
      %v920 = vpop.f32.mrb[0].mxu0
      %921 = vdwg.mxu0
      %v922 = vadd.f32 %v549, %v917
      %v923 = vld [vmem:[%s6] sm:$0x1]
      %v924 = vld [vmem:[%s7] sm:$0x1]
      %v925 = vsel %vm521, %v922, 0.0
      %926 = vadd.xlane.f32.xlu0 %v925
      %v927 = vpop.xlane.xlu0 %926
      %v928 = vmul.f32 %v927, %v525
      %v929 = vsub.f32 %v922, %v928
      %v930 = vmul.f32 %v929, %v929
      %v931 = vsel %vm521, %v930, 0.0
      %932 = vadd.xlane.f32.xlu0 %v931
      %v933 = vpop.xlane.xlu0 %932
      %v934 = vmul.f32 %v933, %v525
      %v935 = vadd.f32 %v934, 1e-12
      %v936 = vrsqrt.pop %v935
      %v937 = vmul.f32 %v929, %v936
      %v939 = vlaneseq
      %v940 = vshrl.u32 %v939, 7
      %v941 = vsub.s32 0, %v940
      %v942 = vrot.slane %v923, %v941
      %v944 = vmul.f32 %v937, %v942
      %v946 = vlaneseq
      %v947 = vshrl.u32 %v946, 7
      %v948 = vsub.s32 0, %v947
      %v949 = vrot.slane %v924, %v948
      %v951 = vadd.f32 %v944, %v949
      %v952 = vpack.c.bf16 %v951, %v951
      %v953 = vld [vmem:[%s8] sm:$0xf]
      %v954 = vld [vmem:[%s8 + $0x4] sm:$0xf]
      %v955 = vld [vmem:[%s8 + $0x8] sm:$0xf]
      %v956 = vld [vmem:[%s8 + $0xc] sm:$0xf]
      %v957 = vld [vmem:[%s9] sm:$0x1]
      %v959 = vlaneseq
      %v960 = vshrl.u32 %v959, 7
      %v961 = vsub.s32 0, %v960
      %v962 = vrot.slane %v957, %v961
      %v968 = vunpack.c.l.b16 %v953
      %v969 = vunpack.c.l.b16 %v954
      %v970 = vunpack.c.l.b16 %v955
      %v971 = vunpack.c.l.b16 %v956
      %v972 = vpack.c.b16 %v969, %v968
      %v973 = vpack.c.b16 %v971, %v970
      %v977 = vsel %vm521, %v952, 0
      %979 = vmatprep.subr.bf16.mxu0 0
      %980 = vmatpush1.bf16.msra.mxu0 %v972
      %981 = vmatprep.subr.bf16.mxu0 0
      %982 = vmatpush1.bf16.msra.mxu0 %v973
      %983 = vmatprep.subr.bf16.mxu0 0
      %984 = vmatpush1.bf16.msra.mxu0 0
      %985 = vmatprep.subr.bf16.mxu0 0
      %986 = vmatpush1.bf16.msra.mxu0 0
      %987 = vmatprep.subr.bf16.mxu0 0
      %988 = vmatpush1.bf16.msra.mxu0 0
      %989 = vmatprep.subr.bf16.mxu0 0
      %990 = vmatpush1.bf16.msra.mxu0 0
      %991 = vmatprep.subr.bf16.mxu0 0
      %992 = vmatpush1.bf16.msra.mxu0 0
      %993 = vmatprep.subr.bf16.mxu0 0
      %994 = vmatpush1.bf16.msra.mxu0 0
      %995 = vmatprep.subr.bf16.mxu0 0
      %996 = vmatpush1.bf16.msra.mxu0 0
      %997 = vmatprep.subr.bf16.mxu0 0
      %998 = vmatpush1.bf16.msra.mxu0 0
      %999 = vmatprep.subr.bf16.mxu0 0
      %1000 = vmatpush1.bf16.msra.mxu0 0
      %1001 = vmatprep.subr.bf16.mxu0 0
      %1002 = vmatpush1.bf16.msra.mxu0 0
      %1003 = vmatprep.subr.bf16.mxu0 0
      %1004 = vmatpush1.bf16.msra.mxu0 0
      %1005 = vmatprep.subr.bf16.mxu0 0
      %1006 = vmatpush1.bf16.msra.mxu0 0
      %1007 = vmatprep.subr.bf16.mxu0 0
      %1008 = vmatpush1.bf16.msra.mxu0 0
      %1009 = vmatprep.subr.bf16.mxu0 0
      %1010 = vmatpush1.bf16.msra.mxu0 0
      %1011 = vmatprep.mubr.bf16.mxu0 0
      %1012 = vmatmul.mubr.bf16.gmra.mrb[0].mxu0 %v977
      %v1013 = vpop.f32.mrb[0].mxu0
      %v1014 = vadd.f32 %v962, %v1013
      %v1015 = vpop.f32.mrb[0].mxu0
      %v1016 = vpop.f32.mrb[0].mxu0
      %v1017 = vpop.f32.mrb[0].mxu0
      %1018 = vdwg.mxu0
      %v1019 = vmul.f32 %v1014, 0.5
      %v1020 = vmul.f32 %v1014, 0.044715
      %v1021 = vmul.f32 %v1020, %v1014
      %v1022 = vmul.f32 %v1021, %v1014
      %v1023 = vadd.f32 %v1014, %v1022
      %v1024 = vmul.f32 %v1023, 0.7978846
      %v1025 = vtanh.pop %v1024
      %v1026 = vadd.f32 %v1025, 1.0
      %v1027 = vmul.f32 %v1019, %v1026
      %v1028 = vpack.c.bf16 %v1027, %v1027
      %v1029 = vld [vmem:[%s10] sm:$0xf]
      %v1030 = vld [vmem:[%s10 + $0x4] sm:$0xf]
      %v1031 = vld [vmem:[%s10 + $0x8] sm:$0xf]
      %v1032 = vld [vmem:[%s10 + $0xc] sm:$0xf]
      %v1033 = vld [vmem:[%s10 + $0x10] sm:$0xf]
      %v1034 = vld [vmem:[%s10 + $0x14] sm:$0xf]
      %v1035 = vld [vmem:[%s10 + $0x18] sm:$0xf]
      %v1036 = vld [vmem:[%s10 + $0x1c] sm:$0xf]
      %v1037 = vld [vmem:[%s11] sm:$0x1]
      %v1039 = vlaneseq
      %v1040 = vshrl.u32 %v1039, 7
      %v1041 = vsub.s32 0, %v1040
      %v1042 = vrot.slane %v1037, %v1041
      %v1052 = vunpack.c.l.b16 %v1029
      %v1053 = vunpack.c.l.b16 %v1030
      %v1054 = vunpack.c.l.b16 %v1031
      %v1055 = vunpack.c.l.b16 %v1032
      %v1056 = vunpack.c.l.b16 %v1033
      %v1057 = vunpack.c.l.b16 %v1034
      %v1058 = vunpack.c.l.b16 %v1035
      %v1059 = vunpack.c.l.b16 %v1036
      %v1060 = vpack.c.b16 %v1053, %v1052
      %v1061 = vpack.c.b16 %v1055, %v1054
      %v1062 = vpack.c.b16 %v1057, %v1056
      %v1063 = vpack.c.b16 %v1059, %v1058
      %vm1068 = vcmask 523264
      %v1070 = vsel %vm1068, %v1028, 0
      %1072 = vmatprep.subr.bf16.mxu0 0
      %1073 = vmatpush1.bf16.msra.mxu0 %v1060
      %1074 = vmatprep.subr.bf16.mxu0 0
      %1075 = vmatpush1.bf16.msra.mxu0 %v1061
      %1076 = vmatprep.subr.bf16.mxu0 0
      %1077 = vmatpush1.bf16.msra.mxu0 %v1062
      %1078 = vmatprep.subr.bf16.mxu0 0
      %1079 = vmatpush1.bf16.msra.mxu0 %v1063
      %1080 = vmatprep.subr.bf16.mxu0 0
      %1081 = vmatpush1.bf16.msra.mxu0 0
      %1082 = vmatprep.subr.bf16.mxu0 0
      %1083 = vmatpush1.bf16.msra.mxu0 0
      %1084 = vmatprep.subr.bf16.mxu0 0
      %1085 = vmatpush1.bf16.msra.mxu0 0
      %1086 = vmatprep.subr.bf16.mxu0 0
      %1087 = vmatpush1.bf16.msra.mxu0 0
      %1088 = vmatprep.subr.bf16.mxu0 0
      %1089 = vmatpush1.bf16.msra.mxu0 0
      %1090 = vmatprep.subr.bf16.mxu0 0
      %1091 = vmatpush1.bf16.msra.mxu0 0
      %1092 = vmatprep.subr.bf16.mxu0 0
      %1093 = vmatpush1.bf16.msra.mxu0 0
      %1094 = vmatprep.subr.bf16.mxu0 0
      %1095 = vmatpush1.bf16.msra.mxu0 0
      %1096 = vmatprep.subr.bf16.mxu0 0
      %1097 = vmatpush1.bf16.msra.mxu0 0
      %1098 = vmatprep.subr.bf16.mxu0 0
      %1099 = vmatpush1.bf16.msra.mxu0 0
      %1100 = vmatprep.subr.bf16.mxu0 0
      %1101 = vmatpush1.bf16.msra.mxu0 0
      %1102 = vmatprep.subr.bf16.mxu0 0
      %1103 = vmatpush1.bf16.msra.mxu0 0
      %1104 = vmatprep.mubr.bf16.mxu0 0
      %1105 = vmatmul.mubr.bf16.gmra.mrb[0].mxu0 %v1070
      %v1106 = vpop.f32.mrb[0].mxu0
      %v1107 = vadd.f32 %v1042, %v1106
      %v1108 = vpop.f32.mrb[0].mxu0
      %v1109 = vpop.f32.mrb[0].mxu0
      %v1110 = vpop.f32.mrb[0].mxu0
      %1111 = vdwg.mxu0
      %v1112 = vadd.f32 %v951, %v1107
      %v1113 = vld [vmem:[%s12] sm:$0x1]
      %v1114 = vld [vmem:[%s13] sm:$0x1]
      %v1115 = vsel %vm521, %v1112, 0.0
      %1116 = vadd.xlane.f32.xlu0 %v1115
      %v1117 = vpop.xlane.xlu0 %1116
      %v1118 = vmul.f32 %v1117, %v525
      %v1119 = vsub.f32 %v1112, %v1118
      %v1120 = vmul.f32 %v1119, %v1119
      %v1121 = vsel %vm521, %v1120, 0.0
      %1122 = vadd.xlane.f32.xlu0 %v1121
      %v1123 = vpop.xlane.xlu0 %1122
      %v1124 = vmul.f32 %v1123, %v525
      %v1125 = vadd.f32 %v1124, 1e-12
      %v1126 = vrsqrt.pop %v1125
      %v1127 = vmul.f32 %v1119, %v1126
      %v1129 = vlaneseq
      %v1130 = vshrl.u32 %v1129, 7
      %v1131 = vsub.s32 0, %v1130
      %v1132 = vrot.slane %v1113, %v1131
      %v1134 = vmul.f32 %v1127, %v1132
      %v1136 = vlaneseq
      %v1137 = vshrl.u32 %v1136, 7
      %v1138 = vsub.s32 0, %v1137
      %v1139 = vrot.slane %v1114, %v1138
      %v1141 = vadd.f32 %v1134, %v1139
      %1142 = vst.msk [vmem:[%s516] sm:$0xff] %vm521, %v1141
      %p1143 = scmp.lt.s32.totalorder %s27, 1
      %s1144 = scalar_select %p1143, %s27, 1
      %s1145 = smul.addr %s1144, 8
      %s1146 = scalar_lea.vmem %s16, %s1145
      // Predicated region
      $region85: #{_lambda_.2} parent=83 // pred_check
        %p1147 = pneg %p386
      $region86: #{_lambda_.2} parent=83 // pred_check_branch
        %1149 = sbr.rel (%p1147) target = $region88
      $region87: #{_lambda_.2} parent=83 // pred_region
        _
      $region88: #{_lambda_.2} parent=83 // pred_fallthru
        _
    $region84: #{_lambda_.2} parent=5 // pred_fallthru
      _
    %p1150 = scmp.le.s32.totalorder 2, %s22
    // Predicated region
    $region89: #{_lambda_.2} parent=5 // pred_check
      %p1151 = pneg %p1150
    $region90: #{_lambda_.2} parent=5 // pred_check_branch
      %1153 = sbr.rel (%p1151) target = $region92
    $region91: #{_lambda_.2} parent=5 // pred_region
      %s1154 = ssub.s32 %s22, 2
      // Predicated region
      $region93: #{_lambda_.2} parent=91 // pred_check
        %p1155 = pneg %p392
      $region94: #{_lambda_.2} parent=91 // pred_check_branch
        %1157 = sbr.rel (%p1155) target = $region96
      $region95: #{_lambda_.2} parent=91 // pred_region
        %p1158 = scmp.lt.s32.totalorder %s28, 1
        %s1159 = scalar_select %p1158, %s28, 1
        %s1160 = smul.addr %s1159, 8
        %s1161 = scalar_lea.vmem %s16, %s1160
      $region96: #{_lambda_.2} parent=91 // pred_fallthru
        _
    $region92: #{_lambda_.2} parent=5 // pred_fallthru
      _
  $region6: #{_lambda_.2} parent=0 // loop_footer
    %s26 = sadd.s32 1, %s22
  $region7: #{_lambda_.2} parent=0 // loop_footer_branch
    %21 = sbr.rel target = $region3
  $region8: #{_lambda_.2} parent=0 // loop_exit
    _

// kernel: _lambda_.3
$region0: #{_lambda_.3}
  #allocation0 [shape = 'u32[]', space=smem, size = 0x4, offset = 0x4, fixed_abs, tag = 'smem constant byte address 0x4 - core index']
  #allocation1 [shape = 'u32[144,128]{1,0:T(1,128)}', space=vmem, size = 0x12000, scoped, tag = 'internal scratch']
  %s0 = inlined_call_operand.vmem [shape: f32[2,8], index: 0, kind: input, shape index: {}]
  %s1 = inlined_call_operand.vmem [shape: f32[16,32], index: 1, kind: input, shape index: {}]
  %s2 = inlined_call_operand.vmem [shape: bf16[32,96], index: 2, kind: input, shape index: {}]
  %s3 = inlined_call_operand.vmem [shape: f32[1,96], index: 3, kind: input, shape index: {}]
  %s4 = inlined_call_operand.vmem [shape: bf16[32,32], index: 4, kind: input, shape index: {}]
  %s5 = inlined_call_operand.vmem [shape: f32[1,32], index: 5, kind: input, shape index: {}, may-alias: {5,7,11,13}]
  %s6 = inlined_call_operand.vmem [shape: f32[1,32], index: 6, kind: input, shape index: {}, may-alias: {6,12}]
  %s7 = inlined_call_operand.vmem [shape: f32[1,32], index: 7, kind: input, shape index: {}, may-alias: {5,7,11,13}]
  %s8 = inlined_call_operand.vmem [shape: bf16[32,64], index: 8, kind: input, shape index: {}]
  %s9 = inlined_call_operand.vmem [shape: f32[1,64], index: 9, kind: input, shape index: {}]
  %s10 = inlined_call_operand.vmem [shape: bf16[64,32], index: 10, kind: input, shape index: {}]
  %s11 = inlined_call_operand.vmem [shape: f32[1,32], index: 11, kind: input, shape index: {}, may-alias: {5,7,11,13}]
  %s12 = inlined_call_operand.vmem [shape: f32[1,32], index: 12, kind: input, shape index: {}, may-alias: {6,12}]
  %s13 = inlined_call_operand.vmem [shape: f32[1,32], index: 13, kind: input, shape index: {}, may-alias: {5,7,11,13}]
  %s14 = inlined_call_operand.vmem [shape: bf16[32,16], index: 14, kind: input, shape index: {}]
  %s15 = inlined_call_operand.vmem [shape: f32[1,16], index: 15, kind: input, shape index: {}]
  %s16 = inlined_call_operand.vmem [shape: bf16[16,2], index: 16, kind: input, shape index: {}]
  %s17 = inlined_call_operand.vmem [shape: f32[1,2], index: 17, kind: input, shape index: {}]
  %s18 = inlined_call_operand.hbm [shape: f32[2,2], index: 18, kind: output, shape index: {}]
  %s19 = sld [smem:[#allocation0]]
  $region105: #{_lambda_.3} parent=0
    _
  %s21 = ssub.s32 1, %s19
  %s22 = scalar_select 0, %s21, %s19
  $region1: #{_lambda_.3} parent=0
    #allocation2 [shape = 'u8[1024]{0}', space=vmem, size = 0x400, scoped, tag = 'output window, operand 0, single buffered']
    #allocation3 [shape = 's32[2]{0}', space=sflag, size = 0x8, scoped, tag = 'scoped memory for _lambda_.3']
    %23 = vsyncpa [#allocation3], 0
    loop: start=0, step=1, limit=4
    $region2: #{_lambda_.3} parent=1 // loop_pre_header
      _
    $region3: #{_lambda_.3} parent=1 // loop_header
      %s25 = sphi 0, %s29
      %p26 = scmp.ge.s32.totalorder %s25, 4
      %s33 = sphi 0, %s33
      %s35 = sphi 0, %s33
      %s36 = sphi 0, %s35
      %s50 = sphi 0, %s36
      %s56 = sphi 0, %s58
      %s59 = sphi 0, %s56
      %s60 = sphi 0, %s59
      %s76 = sphi 0, %s60
      %s80 = sphi 0, %s80
      %s82 = sphi 0, %s80
      %s83 = sphi 0, %s82
      %s97 = sphi 0, %s83
      %s101 = sphi 0, %s101
      %s103 = sphi 0, %s101
      %s104 = sphi 0, %s103
      %s118 = sphi 0, %s104
      %s122 = sphi 0, %s122
      %s124 = sphi 0, %s122
      %s125 = sphi 0, %s124
      %s139 = sphi 0, %s125
      %s143 = sphi 0, %s143
      %s145 = sphi 0, %s143
      %s146 = sphi 0, %s145
      %s160 = sphi 0, %s146
      %s164 = sphi 0, %s164
      %s166 = sphi 0, %s164
      %s167 = sphi 0, %s166
      %s181 = sphi 0, %s167
      %s185 = sphi 0, %s185
      %s187 = sphi 0, %s185
      %s188 = sphi 0, %s187
      %s202 = sphi 0, %s188
      %s206 = sphi 0, %s206
      %s208 = sphi 0, %s206
      %s209 = sphi 0, %s208
      %s223 = sphi 0, %s209
      %s227 = sphi 0, %s227
      %s229 = sphi 0, %s227
      %s230 = sphi 0, %s229
      %s244 = sphi 0, %s230
      %s248 = sphi 0, %s248
      %s250 = sphi 0, %s248
      %s251 = sphi 0, %s250
      %s265 = sphi 0, %s251
      %s269 = sphi 0, %s269
      %s271 = sphi 0, %s269
      %s272 = sphi 0, %s271
      %s286 = sphi 0, %s272
      %s290 = sphi 0, %s290
      %s292 = sphi 0, %s290
      %s293 = sphi 0, %s292
      %s307 = sphi 0, %s293
      %s311 = sphi 0, %s311
      %s313 = sphi 0, %s311
      %s314 = sphi 0, %s313
      %s328 = sphi 0, %s314
      %s332 = sphi 0, %s332
      %s334 = sphi 0, %s332
      %s335 = sphi 0, %s334
      %s349 = sphi 0, %s335
      %s353 = sphi 0, %s353
      %s355 = sphi 0, %s353
      %s356 = sphi 0, %s355
      %s370 = sphi 0, %s356
      %s374 = sphi 0, %s374
      %s376 = sphi 0, %s374
      %s377 = sphi 0, %s376
      %s391 = sphi 0, %s377
      %s395 = sphi 0, %s395
      %s397 = sphi 0, %s395
      %s398 = sphi 0, %s397
      %s412 = sphi 0, %s398
      %s416 = sphi 0, %s416
      %s418 = sphi 0, %s416
      %s419 = sphi 0, %s418
      %s433 = sphi 0, %s419
    $region4: #{_lambda_.3} parent=1 // loop_header_branch
      %28 = sbr.rel (%p26) target = $region8
    $region5: #{_lambda_.3} parent=1 // loop_body
      %s30 = ssub.s32 %s25, 1
      %s31 = ssub.s32 %s25, 2
      %s32 = sadd.s32 %s25, 1
      %s34 = sadd.s32 %s33, 1
      %p37 = scmp.eq.s32.totalorder %s25, 1
      %p38 = scmp.ne.s32.totalorder %s33, %s35
      %p39 = scmp.eq.s32.totalorder %s25, 0
      %p40 = por %p38, %p39
      %p41 = scmp.ne.s32.totalorder %s33, %s35
      %p42 = scmp.eq.s32.totalorder %s30, 1
      %p43 = por %p41, %p42
      %p44 = scmp.ne.s32.totalorder %s35, %s36
      %p45 = scmp.eq.s32.totalorder %s30, 0
      %p46 = por %p44, %p45
      %p47 = scmp.ne.s32.totalorder %s35, %s36
      %p48 = scmp.eq.s32.totalorder %s31, 1
      %p49 = por %p47, %p48
      %p51 = scmp.ne.s32.totalorder %s36, %s50
      %p52 = scmp.eq.s32.totalorder %s31, 0
      %p53 = por %p51, %p52
      %s54 = ssub.s32 %s25, %s32
      %p55 = scmp.eq.s32.totalorder %s54, 0
      %s57 = sadd.s32 %s56, 1
      %s58 = scalar_select %p55, %s56, %s57
      %p61 = pneg %p55
      %p62 = scmp.eq.s32.totalorder %s25, 1
      %p63 = por %p61, %p62
      %p64 = scmp.ne.s32.totalorder %s56, %s59
      %p65 = scmp.eq.s32.totalorder %s25, 0
      %p66 = por %p64, %p65
      %p67 = scmp.ne.s32.totalorder %s56, %s59
      %p68 = scmp.eq.s32.totalorder %s30, 1
      %p69 = por %p67, %p68
      %p70 = scmp.ne.s32.totalorder %s59, %s60
      %p71 = scmp.eq.s32.totalorder %s30, 0
      %p72 = por %p70, %p71
      %p73 = scmp.ne.s32.totalorder %s59, %s60
      %p74 = scmp.eq.s32.totalorder %s31, 1
      %p75 = por %p73, %p74
      %p77 = scmp.ne.s32.totalorder %s60, %s76
      %p78 = scmp.eq.s32.totalorder %s31, 0
      %p79 = por %p77, %p78
      %s81 = sadd.s32 %s80, 1
      %p84 = scmp.eq.s32.totalorder %s25, 1
      %p85 = scmp.ne.s32.totalorder %s80, %s82
      %p86 = scmp.eq.s32.totalorder %s25, 0
      %p87 = por %p85, %p86
      %p88 = scmp.ne.s32.totalorder %s80, %s82
      %p89 = scmp.eq.s32.totalorder %s30, 1
      %p90 = por %p88, %p89
      %p91 = scmp.ne.s32.totalorder %s82, %s83
      %p92 = scmp.eq.s32.totalorder %s30, 0
      %p93 = por %p91, %p92
      %p94 = scmp.ne.s32.totalorder %s82, %s83
      %p95 = scmp.eq.s32.totalorder %s31, 1
      %p96 = por %p94, %p95
      %p98 = scmp.ne.s32.totalorder %s83, %s97
      %p99 = scmp.eq.s32.totalorder %s31, 0
      %p100 = por %p98, %p99
      %s102 = sadd.s32 %s101, 1
      %p105 = scmp.eq.s32.totalorder %s25, 1
      %p106 = scmp.ne.s32.totalorder %s101, %s103
      %p107 = scmp.eq.s32.totalorder %s25, 0
      %p108 = por %p106, %p107
      %p109 = scmp.ne.s32.totalorder %s101, %s103
      %p110 = scmp.eq.s32.totalorder %s30, 1
      %p111 = por %p109, %p110
      %p112 = scmp.ne.s32.totalorder %s103, %s104
      %p113 = scmp.eq.s32.totalorder %s30, 0
      %p114 = por %p112, %p113
      %p115 = scmp.ne.s32.totalorder %s103, %s104
      %p116 = scmp.eq.s32.totalorder %s31, 1
      %p117 = por %p115, %p116
      %p119 = scmp.ne.s32.totalorder %s104, %s118
      %p120 = scmp.eq.s32.totalorder %s31, 0
      %p121 = por %p119, %p120
      %s123 = sadd.s32 %s122, 1
      %p126 = scmp.eq.s32.totalorder %s25, 1
      %p127 = scmp.ne.s32.totalorder %s122, %s124
      %p128 = scmp.eq.s32.totalorder %s25, 0
      %p129 = por %p127, %p128
      %p130 = scmp.ne.s32.totalorder %s122, %s124
      %p131 = scmp.eq.s32.totalorder %s30, 1
      %p132 = por %p130, %p131
      %p133 = scmp.ne.s32.totalorder %s124, %s125
      %p134 = scmp.eq.s32.totalorder %s30, 0
      %p135 = por %p133, %p134
      %p136 = scmp.ne.s32.totalorder %s124, %s125
      %p137 = scmp.eq.s32.totalorder %s31, 1
      %p138 = por %p136, %p137
      %p140 = scmp.ne.s32.totalorder %s125, %s139
      %p141 = scmp.eq.s32.totalorder %s31, 0
      %p142 = por %p140, %p141
      %s144 = sadd.s32 %s143, 1
      %p147 = scmp.eq.s32.totalorder %s25, 1
      %p148 = scmp.ne.s32.totalorder %s143, %s145
      %p149 = scmp.eq.s32.totalorder %s25, 0
      %p150 = por %p148, %p149
      %p151 = scmp.ne.s32.totalorder %s143, %s145
      %p152 = scmp.eq.s32.totalorder %s30, 1
      %p153 = por %p151, %p152
      %p154 = scmp.ne.s32.totalorder %s145, %s146
      %p155 = scmp.eq.s32.totalorder %s30, 0
      %p156 = por %p154, %p155
      %p157 = scmp.ne.s32.totalorder %s145, %s146
      %p158 = scmp.eq.s32.totalorder %s31, 1
      %p159 = por %p157, %p158
      %p161 = scmp.ne.s32.totalorder %s146, %s160
      %p162 = scmp.eq.s32.totalorder %s31, 0
      %p163 = por %p161, %p162
      %s165 = sadd.s32 %s164, 1
      %p168 = scmp.eq.s32.totalorder %s25, 1
      %p169 = scmp.ne.s32.totalorder %s164, %s166
      %p170 = scmp.eq.s32.totalorder %s25, 0
      %p171 = por %p169, %p170
      %p172 = scmp.ne.s32.totalorder %s164, %s166
      %p173 = scmp.eq.s32.totalorder %s30, 1
      %p174 = por %p172, %p173
      %p175 = scmp.ne.s32.totalorder %s166, %s167
      %p176 = scmp.eq.s32.totalorder %s30, 0
      %p177 = por %p175, %p176
      %p178 = scmp.ne.s32.totalorder %s166, %s167
      %p179 = scmp.eq.s32.totalorder %s31, 1
      %p180 = por %p178, %p179
      %p182 = scmp.ne.s32.totalorder %s167, %s181
      %p183 = scmp.eq.s32.totalorder %s31, 0
      %p184 = por %p182, %p183
      %s186 = sadd.s32 %s185, 1
      %p189 = scmp.eq.s32.totalorder %s25, 1
      %p190 = scmp.ne.s32.totalorder %s185, %s187
      %p191 = scmp.eq.s32.totalorder %s25, 0
      %p192 = por %p190, %p191
      %p193 = scmp.ne.s32.totalorder %s185, %s187
      %p194 = scmp.eq.s32.totalorder %s30, 1
      %p195 = por %p193, %p194
      %p196 = scmp.ne.s32.totalorder %s187, %s188
      %p197 = scmp.eq.s32.totalorder %s30, 0
      %p198 = por %p196, %p197
      %p199 = scmp.ne.s32.totalorder %s187, %s188
      %p200 = scmp.eq.s32.totalorder %s31, 1
      %p201 = por %p199, %p200
      %p203 = scmp.ne.s32.totalorder %s188, %s202
      %p204 = scmp.eq.s32.totalorder %s31, 0
      %p205 = por %p203, %p204
      %s207 = sadd.s32 %s206, 1
      %p210 = scmp.eq.s32.totalorder %s25, 1
      %p211 = scmp.ne.s32.totalorder %s206, %s208
      %p212 = scmp.eq.s32.totalorder %s25, 0
      %p213 = por %p211, %p212
      %p214 = scmp.ne.s32.totalorder %s206, %s208
      %p215 = scmp.eq.s32.totalorder %s30, 1
      %p216 = por %p214, %p215
      %p217 = scmp.ne.s32.totalorder %s208, %s209
      %p218 = scmp.eq.s32.totalorder %s30, 0
      %p219 = por %p217, %p218
      %p220 = scmp.ne.s32.totalorder %s208, %s209
      %p221 = scmp.eq.s32.totalorder %s31, 1
      %p222 = por %p220, %p221
      %p224 = scmp.ne.s32.totalorder %s209, %s223
      %p225 = scmp.eq.s32.totalorder %s31, 0
      %p226 = por %p224, %p225
      %s228 = sadd.s32 %s227, 1
      %p231 = scmp.eq.s32.totalorder %s25, 1
      %p232 = scmp.ne.s32.totalorder %s227, %s229
      %p233 = scmp.eq.s32.totalorder %s25, 0
      %p234 = por %p232, %p233
      %p235 = scmp.ne.s32.totalorder %s227, %s229
      %p236 = scmp.eq.s32.totalorder %s30, 1
      %p237 = por %p235, %p236
      %p238 = scmp.ne.s32.totalorder %s229, %s230
      %p239 = scmp.eq.s32.totalorder %s30, 0
      %p240 = por %p238, %p239
      %p241 = scmp.ne.s32.totalorder %s229, %s230
      %p242 = scmp.eq.s32.totalorder %s31, 1
      %p243 = por %p241, %p242
      %p245 = scmp.ne.s32.totalorder %s230, %s244
      %p246 = scmp.eq.s32.totalorder %s31, 0
      %p247 = por %p245, %p246
      %s249 = sadd.s32 %s248, 1
      %p252 = scmp.eq.s32.totalorder %s25, 1
      %p253 = scmp.ne.s32.totalorder %s248, %s250
      %p254 = scmp.eq.s32.totalorder %s25, 0
      %p255 = por %p253, %p254
      %p256 = scmp.ne.s32.totalorder %s248, %s250
      %p257 = scmp.eq.s32.totalorder %s30, 1
      %p258 = por %p256, %p257
      %p259 = scmp.ne.s32.totalorder %s250, %s251
      %p260 = scmp.eq.s32.totalorder %s30, 0
      %p261 = por %p259, %p260
      %p262 = scmp.ne.s32.totalorder %s250, %s251
      %p263 = scmp.eq.s32.totalorder %s31, 1
      %p264 = por %p262, %p263
      %p266 = scmp.ne.s32.totalorder %s251, %s265
      %p267 = scmp.eq.s32.totalorder %s31, 0
      %p268 = por %p266, %p267
      %s270 = sadd.s32 %s269, 1
      %p273 = scmp.eq.s32.totalorder %s25, 1
      %p274 = scmp.ne.s32.totalorder %s269, %s271
      %p275 = scmp.eq.s32.totalorder %s25, 0
      %p276 = por %p274, %p275
      %p277 = scmp.ne.s32.totalorder %s269, %s271
      %p278 = scmp.eq.s32.totalorder %s30, 1
      %p279 = por %p277, %p278
      %p280 = scmp.ne.s32.totalorder %s271, %s272
      %p281 = scmp.eq.s32.totalorder %s30, 0
      %p282 = por %p280, %p281
      %p283 = scmp.ne.s32.totalorder %s271, %s272
      %p284 = scmp.eq.s32.totalorder %s31, 1
      %p285 = por %p283, %p284
      %p287 = scmp.ne.s32.totalorder %s272, %s286
      %p288 = scmp.eq.s32.totalorder %s31, 0
      %p289 = por %p287, %p288
      %s291 = sadd.s32 %s290, 1
      %p294 = scmp.eq.s32.totalorder %s25, 1
      %p295 = scmp.ne.s32.totalorder %s290, %s292
      %p296 = scmp.eq.s32.totalorder %s25, 0
      %p297 = por %p295, %p296
      %p298 = scmp.ne.s32.totalorder %s290, %s292
      %p299 = scmp.eq.s32.totalorder %s30, 1
      %p300 = por %p298, %p299
      %p301 = scmp.ne.s32.totalorder %s292, %s293
      %p302 = scmp.eq.s32.totalorder %s30, 0
      %p303 = por %p301, %p302
      %p304 = scmp.ne.s32.totalorder %s292, %s293
      %p305 = scmp.eq.s32.totalorder %s31, 1
      %p306 = por %p304, %p305
      %p308 = scmp.ne.s32.totalorder %s293, %s307
      %p309 = scmp.eq.s32.totalorder %s31, 0
      %p310 = por %p308, %p309
      %s312 = sadd.s32 %s311, 1
      %p315 = scmp.eq.s32.totalorder %s25, 1
      %p316 = scmp.ne.s32.totalorder %s311, %s313
      %p317 = scmp.eq.s32.totalorder %s25, 0
      %p318 = por %p316, %p317
      %p319 = scmp.ne.s32.totalorder %s311, %s313
      %p320 = scmp.eq.s32.totalorder %s30, 1
      %p321 = por %p319, %p320
      %p322 = scmp.ne.s32.totalorder %s313, %s314
      %p323 = scmp.eq.s32.totalorder %s30, 0
      %p324 = por %p322, %p323
      %p325 = scmp.ne.s32.totalorder %s313, %s314
      %p326 = scmp.eq.s32.totalorder %s31, 1
      %p327 = por %p325, %p326
      %p329 = scmp.ne.s32.totalorder %s314, %s328
      %p330 = scmp.eq.s32.totalorder %s31, 0
      %p331 = por %p329, %p330
      %s333 = sadd.s32 %s332, 1
      %p336 = scmp.eq.s32.totalorder %s25, 1
      %p337 = scmp.ne.s32.totalorder %s332, %s334
      %p338 = scmp.eq.s32.totalorder %s25, 0
      %p339 = por %p337, %p338
      %p340 = scmp.ne.s32.totalorder %s332, %s334
      %p341 = scmp.eq.s32.totalorder %s30, 1
      %p342 = por %p340, %p341
      %p343 = scmp.ne.s32.totalorder %s334, %s335
      %p344 = scmp.eq.s32.totalorder %s30, 0
      %p345 = por %p343, %p344
      %p346 = scmp.ne.s32.totalorder %s334, %s335
      %p347 = scmp.eq.s32.totalorder %s31, 1
      %p348 = por %p346, %p347
      %p350 = scmp.ne.s32.totalorder %s335, %s349
      %p351 = scmp.eq.s32.totalorder %s31, 0
      %p352 = por %p350, %p351
      %s354 = sadd.s32 %s353, 1
      %p357 = scmp.eq.s32.totalorder %s25, 1
      %p358 = scmp.ne.s32.totalorder %s353, %s355
      %p359 = scmp.eq.s32.totalorder %s25, 0
      %p360 = por %p358, %p359
      %p361 = scmp.ne.s32.totalorder %s353, %s355
      %p362 = scmp.eq.s32.totalorder %s30, 1
      %p363 = por %p361, %p362
      %p364 = scmp.ne.s32.totalorder %s355, %s356
      %p365 = scmp.eq.s32.totalorder %s30, 0
      %p366 = por %p364, %p365
      %p367 = scmp.ne.s32.totalorder %s355, %s356
      %p368 = scmp.eq.s32.totalorder %s31, 1
      %p369 = por %p367, %p368
      %p371 = scmp.ne.s32.totalorder %s356, %s370
      %p372 = scmp.eq.s32.totalorder %s31, 0
      %p373 = por %p371, %p372
      %s375 = sadd.s32 %s374, 1
      %p378 = scmp.eq.s32.totalorder %s25, 1
      %p379 = scmp.ne.s32.totalorder %s374, %s376
      %p380 = scmp.eq.s32.totalorder %s25, 0
      %p381 = por %p379, %p380
      %p382 = scmp.ne.s32.totalorder %s374, %s376
      %p383 = scmp.eq.s32.totalorder %s30, 1
      %p384 = por %p382, %p383
      %p385 = scmp.ne.s32.totalorder %s376, %s377
      %p386 = scmp.eq.s32.totalorder %s30, 0
      %p387 = por %p385, %p386
      %p388 = scmp.ne.s32.totalorder %s376, %s377
      %p389 = scmp.eq.s32.totalorder %s31, 1
      %p390 = por %p388, %p389
      %p392 = scmp.ne.s32.totalorder %s377, %s391
      %p393 = scmp.eq.s32.totalorder %s31, 0
      %p394 = por %p392, %p393
      %s396 = sadd.s32 %s395, 1
      %p399 = scmp.eq.s32.totalorder %s25, 1
      %p400 = scmp.ne.s32.totalorder %s395, %s397
      %p401 = scmp.eq.s32.totalorder %s25, 0
      %p402 = por %p400, %p401
      %p403 = scmp.ne.s32.totalorder %s395, %s397
      %p404 = scmp.eq.s32.totalorder %s30, 1
      %p405 = por %p403, %p404
      %p406 = scmp.ne.s32.totalorder %s397, %s398
      %p407 = scmp.eq.s32.totalorder %s30, 0
      %p408 = por %p406, %p407
      %p409 = scmp.ne.s32.totalorder %s397, %s398
      %p410 = scmp.eq.s32.totalorder %s31, 1
      %p411 = por %p409, %p410
      %p413 = scmp.ne.s32.totalorder %s398, %s412
      %p414 = scmp.eq.s32.totalorder %s31, 0
      %p415 = por %p413, %p414
      %s417 = sadd.s32 %s416, 1
      %p420 = scmp.eq.s32.totalorder %s25, 1
      %p421 = scmp.ne.s32.totalorder %s416, %s418
      %p422 = scmp.eq.s32.totalorder %s25, 0
      %p423 = por %p421, %p422
      %p424 = scmp.ne.s32.totalorder %s416, %s418
      %p425 = scmp.eq.s32.totalorder %s30, 1
      %p426 = por %p424, %p425
      %p427 = scmp.ne.s32.totalorder %s418, %s419
      %p428 = scmp.eq.s32.totalorder %s30, 0
      %p429 = por %p427, %p428
      %p430 = scmp.ne.s32.totalorder %s418, %s419
      %p431 = scmp.eq.s32.totalorder %s31, 1
      %p432 = por %p430, %p431
      %p434 = scmp.ne.s32.totalorder %s419, %s433
      %p435 = scmp.eq.s32.totalorder %s31, 0
      %p436 = por %p434, %p435
      %p437 = scmp.le.s32.totalorder 1, %s25
      %p438 = scmp.lt.s32.totalorder %s25, 3
      %p439 = pnand %p437, %p438
      %p440 = pneg %p439
      // Predicated region
      $region9: #{_lambda_.3} parent=5 // pred_check
        _
      $region10: #{_lambda_.3} parent=5 // pred_check_branch
        %442 = sbr.rel (%p439) target = $region12
      $region11: #{_lambda_.3} parent=5 // pred_region
        %s443 = ssub.s32 %s25, 1
        // Predicated region
        $region13: #{_lambda_.3} parent=11 // pred_check
          %p444 = pneg %p46
        $region14: #{_lambda_.3} parent=11 // pred_check_branch
          %446 = sbr.rel (%p444) target = $region16
        $region15: #{_lambda_.3} parent=11 // pred_region
          _
        $region16: #{_lambda_.3} parent=11 // pred_fallthru
          _
        // Predicated region
        $region17: #{_lambda_.3} parent=11 // pred_check
          %p447 = pneg %p93
        $region18: #{_lambda_.3} parent=11 // pred_check_branch
          %449 = sbr.rel (%p447) target = $region20
        $region19: #{_lambda_.3} parent=11 // pred_region
          _
        $region20: #{_lambda_.3} parent=11 // pred_fallthru
          _
        // Predicated region
        $region21: #{_lambda_.3} parent=11 // pred_check
          %p450 = pneg %p114
        $region22: #{_lambda_.3} parent=11 // pred_check_branch
          %452 = sbr.rel (%p450) target = $region24
        $region23: #{_lambda_.3} parent=11 // pred_region
          _
        $region24: #{_lambda_.3} parent=11 // pred_fallthru
          _
        // Predicated region
        $region25: #{_lambda_.3} parent=11 // pred_check
          %p453 = pneg %p135
        $region26: #{_lambda_.3} parent=11 // pred_check_branch
          %455 = sbr.rel (%p453) target = $region28
        $region27: #{_lambda_.3} parent=11 // pred_region
          _
        $region28: #{_lambda_.3} parent=11 // pred_fallthru
          _
        // Predicated region
        $region29: #{_lambda_.3} parent=11 // pred_check
          %p456 = pneg %p156
        $region30: #{_lambda_.3} parent=11 // pred_check_branch
          %458 = sbr.rel (%p456) target = $region32
        $region31: #{_lambda_.3} parent=11 // pred_region
          _
        $region32: #{_lambda_.3} parent=11 // pred_fallthru
          _
        // Predicated region
        $region33: #{_lambda_.3} parent=11 // pred_check
          %p459 = pneg %p177
        $region34: #{_lambda_.3} parent=11 // pred_check_branch
          %461 = sbr.rel (%p459) target = $region36
        $region35: #{_lambda_.3} parent=11 // pred_region
          _
        $region36: #{_lambda_.3} parent=11 // pred_fallthru
          _
        // Predicated region
        $region37: #{_lambda_.3} parent=11 // pred_check
          %p462 = pneg %p198
        $region38: #{_lambda_.3} parent=11 // pred_check_branch
          %464 = sbr.rel (%p462) target = $region40
        $region39: #{_lambda_.3} parent=11 // pred_region
          _
        $region40: #{_lambda_.3} parent=11 // pred_fallthru
          _
        // Predicated region
        $region41: #{_lambda_.3} parent=11 // pred_check
          %p465 = pneg %p219
        $region42: #{_lambda_.3} parent=11 // pred_check_branch
          %467 = sbr.rel (%p465) target = $region44
        $region43: #{_lambda_.3} parent=11 // pred_region
          _
        $region44: #{_lambda_.3} parent=11 // pred_fallthru
          _
        // Predicated region
        $region45: #{_lambda_.3} parent=11 // pred_check
          %p468 = pneg %p240
        $region46: #{_lambda_.3} parent=11 // pred_check_branch
          %470 = sbr.rel (%p468) target = $region48
        $region47: #{_lambda_.3} parent=11 // pred_region
          _
        $region48: #{_lambda_.3} parent=11 // pred_fallthru
          _
        // Predicated region
        $region49: #{_lambda_.3} parent=11 // pred_check
          %p471 = pneg %p261
        $region50: #{_lambda_.3} parent=11 // pred_check_branch
          %473 = sbr.rel (%p471) target = $region52
        $region51: #{_lambda_.3} parent=11 // pred_region
          _
        $region52: #{_lambda_.3} parent=11 // pred_fallthru
          _
        // Predicated region
        $region53: #{_lambda_.3} parent=11 // pred_check
          %p474 = pneg %p282
        $region54: #{_lambda_.3} parent=11 // pred_check_branch
          %476 = sbr.rel (%p474) target = $region56
        $region55: #{_lambda_.3} parent=11 // pred_region
          _
        $region56: #{_lambda_.3} parent=11 // pred_fallthru
          _
        // Predicated region
        $region57: #{_lambda_.3} parent=11 // pred_check
          %p477 = pneg %p303
        $region58: #{_lambda_.3} parent=11 // pred_check_branch
          %479 = sbr.rel (%p477) target = $region60
        $region59: #{_lambda_.3} parent=11 // pred_region
          _
        $region60: #{_lambda_.3} parent=11 // pred_fallthru
          _
        // Predicated region
        $region61: #{_lambda_.3} parent=11 // pred_check
          %p480 = pneg %p324
        $region62: #{_lambda_.3} parent=11 // pred_check_branch
          %482 = sbr.rel (%p480) target = $region64
        $region63: #{_lambda_.3} parent=11 // pred_region
          _
        $region64: #{_lambda_.3} parent=11 // pred_fallthru
          _
        // Predicated region
        $region65: #{_lambda_.3} parent=11 // pred_check
          %p483 = pneg %p345
        $region66: #{_lambda_.3} parent=11 // pred_check_branch
          %485 = sbr.rel (%p483) target = $region68
        $region67: #{_lambda_.3} parent=11 // pred_region
          _
        $region68: #{_lambda_.3} parent=11 // pred_fallthru
          _
        // Predicated region
        $region69: #{_lambda_.3} parent=11 // pred_check
          %p486 = pneg %p366
        $region70: #{_lambda_.3} parent=11 // pred_check_branch
          %488 = sbr.rel (%p486) target = $region72
        $region71: #{_lambda_.3} parent=11 // pred_region
          _
        $region72: #{_lambda_.3} parent=11 // pred_fallthru
          _
        // Predicated region
        $region73: #{_lambda_.3} parent=11 // pred_check
          %p489 = pneg %p387
        $region74: #{_lambda_.3} parent=11 // pred_check_branch
          %491 = sbr.rel (%p489) target = $region76
        $region75: #{_lambda_.3} parent=11 // pred_region
          _
        $region76: #{_lambda_.3} parent=11 // pred_fallthru
          _
        // Predicated region
        $region77: #{_lambda_.3} parent=11 // pred_check
          %p492 = pneg %p408
        $region78: #{_lambda_.3} parent=11 // pred_check_branch
          %494 = sbr.rel (%p492) target = $region80
        $region79: #{_lambda_.3} parent=11 // pred_region
          _
        $region80: #{_lambda_.3} parent=11 // pred_fallthru
          _
      $region12: #{_lambda_.3} parent=5 // pred_fallthru
        _
      %p495 = scmp.lt.s32.totalorder %s25, 2
      // Predicated region
      $region81: #{_lambda_.3} parent=5 // pred_check
        %p496 = pneg %p495
      $region82: #{_lambda_.3} parent=5 // pred_check_branch
        %498 = sbr.rel (%p496) target = $region84
      $region83: #{_lambda_.3} parent=5 // pred_region
        // Predicated region
        $region85: #{_lambda_.3} parent=83 // pred_check
          %p499 = pneg %p66
        $region86: #{_lambda_.3} parent=83 // pred_check_branch
          %501 = sbr.rel (%p499) target = $region88
        $region87: #{_lambda_.3} parent=83 // pred_region
          %p502 = scmp.lt.s32.totalorder %s25, 1
          %s503 = scalar_select %p502, %s25, 1
          %s504 = smul.addr %s503, 8
          %s505 = scalar_lea.vmem %s1, %s504
        $region88: #{_lambda_.3} parent=83 // pred_fallthru
          _
      $region84: #{_lambda_.3} parent=5 // pred_fallthru
        _
      %p506 = scmp.le.s32.totalorder 1, %s25
      %p507 = scmp.lt.s32.totalorder %s25, 3
      %p508 = pnand %p506, %p507
      %p509 = pneg %p508
      // Predicated region
      $region89: #{_lambda_.3} parent=5 // pred_check
        _
      $region90: #{_lambda_.3} parent=5 // pred_check_branch
        %511 = sbr.rel (%p508) target = $region92
      $region91: #{_lambda_.3} parent=5 // pred_region
        %s512 = ssub.s32 %s25, 1
        %p513 = pneg %p46
        %p514 = pneg %p43
        %p515 = scmp.lt.s32.totalorder %s30, 1
        %s516 = scalar_select %p515, %s30, 1
        %s517 = smul.addr %s516, 8
        %s518 = scalar_lea.vmem %s1, %s517
        %p519 = pneg %p72
        %p520 = pneg %p69
        %p521 = pneg %p93
        %p522 = pneg %p90
        %p523 = pneg %p114
        %p524 = pneg %p111
        %p525 = pneg %p135
        %p526 = pneg %p132
        %p527 = pneg %p156
        %p528 = pneg %p153
        %p529 = pneg %p177
        %p530 = pneg %p174
        %p531 = pneg %p198
        %p532 = pneg %p195
        %p533 = pneg %p219
        %p534 = pneg %p216
        %p535 = pneg %p240
        %p536 = pneg %p237
        %p537 = pneg %p261
        %p538 = pneg %p258
        %p539 = pneg %p282
        %p540 = pneg %p279
        %p541 = pneg %p303
        %p542 = pneg %p300
        %p543 = pneg %p324
        %p544 = pneg %p321
        %p545 = pneg %p345
        %p546 = pneg %p342
        %p547 = pneg %p366
        %p548 = pneg %p363
        %p549 = pneg %p387
        %p550 = pneg %p384
        %p551 = pneg %p408
        %p552 = pneg %p405
        %p553 = pneg %p429
        %p554 = pneg %p426
        %p555 = scmp.lt.s32.totalorder %s30, 1
        %s556 = scalar_select %p555, %s30, 1
        %s557 = smul.addr %s556, 8
        %s558 = scalar_lea.vmem %s1, %s557
        %v560 = vld [vmem:[%s558] sm:$0xff]
        %s561 = scalar_lea.vmem %s0, %s30
        %v562 = vld [vmem:[%s561] sm:$0x1]
        %v563 = vpack.c.bf16 %v560, %v560
        %v564 = vld [vmem:[%s2] sm:$0xf]
        %v565 = vld [vmem:[%s2 + $0x4] sm:$0xf]
        %v566 = vld [vmem:[%s2 + $0x8] sm:$0xf]
        %v567 = vld [vmem:[%s2 + $0xc] sm:$0xf]
        %v568 = vld [vmem:[%s3] sm:$0x1]
        %v570 = vlaneseq
        %v571 = vshrl.u32 %v570, 7
        %v572 = vsub.s32 0, %v571
        %v573 = vrot.slane %v568, %v572
        %v579 = vunpack.c.l.b16 %v564
        %v580 = vunpack.c.l.b16 %v565
        %v581 = vunpack.c.l.b16 %v566
        %v582 = vunpack.c.l.b16 %v567
        %v583 = vpack.c.b16 %v580, %v579
        %v584 = vpack.c.b16 %v582, %v581
        %vm587 = vcmask 261120
        %v589 = vsel %vm587, %v563, 0
        %591 = vmatprep.subr.bf16.mxu0 0
        %592 = vmatpush1.bf16.msra.mxu0 %v583
        %593 = vmatprep.subr.bf16.mxu0 0
        %594 = vmatpush1.bf16.msra.mxu0 %v584
        %595 = vmatprep.subr.bf16.mxu0 0
        %596 = vmatpush1.bf16.msra.mxu0 0
        %597 = vmatprep.subr.bf16.mxu0 0
        %598 = vmatpush1.bf16.msra.mxu0 0
        %599 = vmatprep.subr.bf16.mxu0 0
        %600 = vmatpush1.bf16.msra.mxu0 0
        %601 = vmatprep.subr.bf16.mxu0 0
        %602 = vmatpush1.bf16.msra.mxu0 0
        %603 = vmatprep.subr.bf16.mxu0 0
        %604 = vmatpush1.bf16.msra.mxu0 0
        %605 = vmatprep.subr.bf16.mxu0 0
        %606 = vmatpush1.bf16.msra.mxu0 0
        %607 = vmatprep.subr.bf16.mxu0 0
        %608 = vmatpush1.bf16.msra.mxu0 0
        %609 = vmatprep.subr.bf16.mxu0 0
        %610 = vmatpush1.bf16.msra.mxu0 0
        %611 = vmatprep.subr.bf16.mxu0 0
        %612 = vmatpush1.bf16.msra.mxu0 0
        %613 = vmatprep.subr.bf16.mxu0 0
        %614 = vmatpush1.bf16.msra.mxu0 0
        %615 = vmatprep.subr.bf16.mxu0 0
        %616 = vmatpush1.bf16.msra.mxu0 0
        %617 = vmatprep.subr.bf16.mxu0 0
        %618 = vmatpush1.bf16.msra.mxu0 0
        %619 = vmatprep.subr.bf16.mxu0 0
        %620 = vmatpush1.bf16.msra.mxu0 0
        %621 = vmatprep.subr.bf16.mxu0 0
        %622 = vmatpush1.bf16.msra.mxu0 0
        %623 = vmatprep.mubr.bf16.mxu0 0
        %624 = vmatmul.mubr.bf16.gmra.mrb[0].mxu0 %v589
        %v625 = vpop.f32.mrb[0].mxu0
        %v626 = vadd.f32 %v573, %v625
        %v627 = vpop.f32.mrb[0].mxu0
        %v628 = vpop.f32.mrb[0].mxu0
        %v629 = vpop.f32.mrb[0].mxu0
        %630 = vdwg.mxu0
        %v631 = vpack.c.bf16 %v626, %v626
        %633 = vrot.lane.b32.xlu0 %v631, 96
        %v634 = vpop.permute.xlu0 %633
        %vm635 = vcmask 130048
        %v637 = vsel %vm635, %v631, 0
        %v640 = vsel %vm635, %v634, 0
        %642 = vmatprep.subr.bf16.mxu0 0
        %643 = vmatpush1.bf16.xpose.msra.mxu0 %v640
        %644 = vmatprep.subr.bf16.mxu0 0
        %645 = vmatpush1.bf16.xpose.msra.mxu0 0
        %646 = vmatprep.subr.bf16.mxu0 0
        %647 = vmatpush1.bf16.xpose.msra.mxu0 0
        %648 = vmatprep.subr.bf16.mxu0 0
        %649 = vmatpush1.bf16.xpose.msra.mxu0 0
        %650 = vmatprep.subr.bf16.mxu0 0
        %651 = vmatpush1.bf16.xpose.msra.mxu0 0
        %652 = vmatprep.subr.bf16.mxu0 0
        %653 = vmatpush1.bf16.xpose.msra.mxu0 0
        %654 = vmatprep.subr.bf16.mxu0 0
        %655 = vmatpush1.bf16.xpose.msra.mxu0 0
        %656 = vmatprep.subr.bf16.mxu0 0
        %657 = vmatpush1.bf16.xpose.msra.mxu0 0
        %658 = vmatprep.subr.bf16.mxu0 0
        %659 = vmatpush1.bf16.xpose.msra.mxu0 0
        %660 = vmatprep.subr.bf16.mxu0 0
        %661 = vmatpush1.bf16.xpose.msra.mxu0 0
        %662 = vmatprep.subr.bf16.mxu0 0
        %663 = vmatpush1.bf16.xpose.msra.mxu0 0
        %664 = vmatprep.subr.bf16.mxu0 0
        %665 = vmatpush1.bf16.xpose.msra.mxu0 0
        %666 = vmatprep.subr.bf16.mxu0 0
        %667 = vmatpush1.bf16.xpose.msra.mxu0 0
        %668 = vmatprep.subr.bf16.mxu0 0
        %669 = vmatpush1.bf16.xpose.msra.mxu0 0
        %670 = vmatprep.subr.bf16.mxu0 0
        %671 = vmatpush1.bf16.xpose.msra.mxu0 0
        %672 = vmatprep.subr.bf16.mxu0 0
        %673 = vmatpush1.bf16.xpose.msra.mxu0 0
        %674 = vmatprep.mubr.bf16.mxu0 0
        %675 = vmatmul.mubr.bf16.gmra.mrb[0].mxu0 %v637
        %v676 = vpop.f32.mrb[0].mxu0
        %v677 = vadd.f32 0.0, %v676
        %v678 = vpop.f32.mrb[0].mxu0
        %v679 = vpop.f32.mrb[0].mxu0
        %v680 = vpop.f32.mrb[0].mxu0
        %681 = vdwg.mxu0
        %v682 = vmul.f32 %v677, 0.25
        %v683 = vlaneseq
        %v684 = vshrl.u32 %v683, 7
        %v685 = vsub.s32 0, %v684
        %v686 = vrot.slane %v562, %v685
        %v687 = vadd.f32 %v682, %v686
        %vm688 = vcmask 64512
        %v689 = vsel %vm688, %v687, -inf
        %690 = vmax.xlane.f32.xlu0 %v689
        %v691 = vpop.xlane.xlu0 %690
        %v692 = vsub.f32 %v687, %v691
        %v693 = vmul.f32 %v692, 1.442695
        %v694 = vpow.pop %v693
        %v695 = vsel %vm688, %v694, 0.0
        %696 = vadd.xlane.f32.xlu0 %v695
        %v697 = vpop.xlane.xlu0 %696
        %v698 = vpack.c.bf16 %v694, %v694
        %699 = vrot.lane.b32.xlu0 %v631, 64
        %v700 = vpop.permute.xlu0 %699
        %v702 = vsel %vm688, %v698, 0
        %vm704 = vcmask 1043456
        %v706 = vsel %vm704, %v700, 0
        %708 = vmatprep.subr.bf16.mxu0 0
        %709 = vmatpush1.bf16.msra.mxu0 %v706
        %710 = vmatprep.subr.bf16.mxu0 0
        %711 = vmatpush1.bf16.msra.mxu0 0
        %712 = vmatprep.subr.bf16.mxu0 0
        %713 = vmatpush1.bf16.msra.mxu0 0
        %714 = vmatprep.subr.bf16.mxu0 0
        %715 = vmatpush1.bf16.msra.mxu0 0
        %716 = vmatprep.subr.bf16.mxu0 0
        %717 = vmatpush1.bf16.msra.mxu0 0
        %718 = vmatprep.subr.bf16.mxu0 0
        %719 = vmatpush1.bf16.msra.mxu0 0
        %720 = vmatprep.subr.bf16.mxu0 0
        %721 = vmatpush1.bf16.msra.mxu0 0
        %722 = vmatprep.subr.bf16.mxu0 0
        %723 = vmatpush1.bf16.msra.mxu0 0
        %724 = vmatprep.subr.bf16.mxu0 0
        %725 = vmatpush1.bf16.msra.mxu0 0
        %726 = vmatprep.subr.bf16.mxu0 0
        %727 = vmatpush1.bf16.msra.mxu0 0
        %728 = vmatprep.subr.bf16.mxu0 0
        %729 = vmatpush1.bf16.msra.mxu0 0
        %730 = vmatprep.subr.bf16.mxu0 0
        %731 = vmatpush1.bf16.msra.mxu0 0
        %732 = vmatprep.subr.bf16.mxu0 0
        %733 = vmatpush1.bf16.msra.mxu0 0
        %734 = vmatprep.subr.bf16.mxu0 0
        %735 = vmatpush1.bf16.msra.mxu0 0
        %736 = vmatprep.subr.bf16.mxu0 0
        %737 = vmatpush1.bf16.msra.mxu0 0
        %738 = vmatprep.subr.bf16.mxu0 0
        %739 = vmatpush1.bf16.msra.mxu0 0
        %740 = vmatprep.mubr.bf16.mxu0 0
        %741 = vmatmul.mubr.bf16.gmra.mrb[0].mxu0 %v702
        %v742 = vpop.f32.mrb[0].mxu0
        %v743 = vadd.f32 0.0, %v742
        %v744 = vpop.f32.mrb[0].mxu0
        %v745 = vpop.f32.mrb[0].mxu0
        %v746 = vpop.f32.mrb[0].mxu0
        %747 = vdwg.mxu0
        %v748 = vrcp.pop %v697
        %v749 = vmul.f32 %v743, %v748
        %750 = vrot.lane.b32.xlu0 %v631, 112
        %v751 = vpop.permute.xlu0 %750
        %752 = vrot.lane.b32.xlu0 %v631, 80
        %v753 = vpop.permute.xlu0 %752
        %v755 = vsel %vm635, %v751, 0
        %v758 = vsel %vm635, %v753, 0
        %760 = vmatprep.subr.bf16.mxu0 0
        %761 = vmatpush1.bf16.xpose.msra.mxu0 %v758
        %762 = vmatprep.subr.bf16.mxu0 0
        %763 = vmatpush1.bf16.xpose.msra.mxu0 0
        %764 = vmatprep.subr.bf16.mxu0 0
        %765 = vmatpush1.bf16.xpose.msra.mxu0 0
        %766 = vmatprep.subr.bf16.mxu0 0
        %767 = vmatpush1.bf16.xpose.msra.mxu0 0
        %768 = vmatprep.subr.bf16.mxu0 0
        %769 = vmatpush1.bf16.xpose.msra.mxu0 0
        %770 = vmatprep.subr.bf16.mxu0 0
        %771 = vmatpush1.bf16.xpose.msra.mxu0 0
        %772 = vmatprep.subr.bf16.mxu0 0
        %773 = vmatpush1.bf16.xpose.msra.mxu0 0
        %774 = vmatprep.subr.bf16.mxu0 0
        %775 = vmatpush1.bf16.xpose.msra.mxu0 0
        %776 = vmatprep.subr.bf16.mxu0 0
        %777 = vmatpush1.bf16.xpose.msra.mxu0 0
        %778 = vmatprep.subr.bf16.mxu0 0
        %779 = vmatpush1.bf16.xpose.msra.mxu0 0
        %780 = vmatprep.subr.bf16.mxu0 0
        %781 = vmatpush1.bf16.xpose.msra.mxu0 0
        %782 = vmatprep.subr.bf16.mxu0 0
        %783 = vmatpush1.bf16.xpose.msra.mxu0 0
        %784 = vmatprep.subr.bf16.mxu0 0
        %785 = vmatpush1.bf16.xpose.msra.mxu0 0
        %786 = vmatprep.subr.bf16.mxu0 0
        %787 = vmatpush1.bf16.xpose.msra.mxu0 0
        %788 = vmatprep.subr.bf16.mxu0 0
        %789 = vmatpush1.bf16.xpose.msra.mxu0 0
        %790 = vmatprep.subr.bf16.mxu0 0
        %791 = vmatpush1.bf16.xpose.msra.mxu0 0
        %792 = vmatprep.mubr.bf16.mxu0 0
        %793 = vmatmul.mubr.bf16.gmra.mrb[0].mxu0 %v755
        %v794 = vpop.f32.mrb[0].mxu0
        %v795 = vadd.f32 0.0, %v794
        %v796 = vpop.f32.mrb[0].mxu0
        %v797 = vpop.f32.mrb[0].mxu0
        %v798 = vpop.f32.mrb[0].mxu0
        %799 = vdwg.mxu0
        %v800 = vmul.f32 %v795, 0.25
        %v801 = vadd.f32 %v800, %v686
        %v802 = vsel %vm688, %v801, -inf
        %803 = vmax.xlane.f32.xlu0 %v802
        %v804 = vpop.xlane.xlu0 %803
        %v805 = vsub.f32 %v801, %v804
        %v806 = vmul.f32 %v805, 1.442695
        %v807 = vpow.pop %v806
        %v808 = vsel %vm688, %v807, 0.0
        %809 = vadd.xlane.f32.xlu0 %v808
        %v810 = vpop.xlane.xlu0 %809
        %v811 = vpack.c.bf16 %v807, %v807
        %812 = vrot.lane.b32.xlu0 %v631, 48
        %v813 = vpop.permute.xlu0 %812
        %v815 = vsel %vm688, %v811, 0
        %v818 = vsel %vm704, %v813, 0
        %820 = vmatprep.subr.bf16.mxu0 0
        %821 = vmatpush1.bf16.msra.mxu0 %v818
        %822 = vmatprep.subr.bf16.mxu0 0
        %823 = vmatpush1.bf16.msra.mxu0 0
        %824 = vmatprep.subr.bf16.mxu0 0
        %825 = vmatpush1.bf16.msra.mxu0 0
        %826 = vmatprep.subr.bf16.mxu0 0
        %827 = vmatpush1.bf16.msra.mxu0 0
        %828 = vmatprep.subr.bf16.mxu0 0
        %829 = vmatpush1.bf16.msra.mxu0 0
        %830 = vmatprep.subr.bf16.mxu0 0
        %831 = vmatpush1.bf16.msra.mxu0 0
        %832 = vmatprep.subr.bf16.mxu0 0
        %833 = vmatpush1.bf16.msra.mxu0 0
        %834 = vmatprep.subr.bf16.mxu0 0
        %835 = vmatpush1.bf16.msra.mxu0 0
        %836 = vmatprep.subr.bf16.mxu0 0
        %837 = vmatpush1.bf16.msra.mxu0 0
        %838 = vmatprep.subr.bf16.mxu0 0
        %839 = vmatpush1.bf16.msra.mxu0 0
        %840 = vmatprep.subr.bf16.mxu0 0
        %841 = vmatpush1.bf16.msra.mxu0 0
        %842 = vmatprep.subr.bf16.mxu0 0
        %843 = vmatpush1.bf16.msra.mxu0 0
        %844 = vmatprep.subr.bf16.mxu0 0
        %845 = vmatpush1.bf16.msra.mxu0 0
        %846 = vmatprep.subr.bf16.mxu0 0
        %847 = vmatpush1.bf16.msra.mxu0 0
        %848 = vmatprep.subr.bf16.mxu0 0
        %849 = vmatpush1.bf16.msra.mxu0 0
        %850 = vmatprep.subr.bf16.mxu0 0
        %851 = vmatpush1.bf16.msra.mxu0 0
        %852 = vmatprep.mubr.bf16.mxu0 0
        %853 = vmatmul.mubr.bf16.gmra.mrb[0].mxu0 %v815
        %v854 = vpop.f32.mrb[0].mxu0
        %v855 = vadd.f32 0.0, %v854
        %v856 = vpop.f32.mrb[0].mxu0
        %v857 = vpop.f32.mrb[0].mxu0
        %v858 = vpop.f32.mrb[0].mxu0
        %859 = vdwg.mxu0
        %v860 = vrcp.pop %v810
        %v861 = vmul.f32 %v855, %v860
        %863 = vrot.lane.b32.xlu0 %v861, 16
        %v864 = vpop.permute.xlu0 %863
        %v866 = vsel %vm635, %v749, %v864
        %v867 = vpack.c.bf16 %v866, %v866
        %v868 = vld [vmem:[%s4] sm:$0xf]
        %v869 = vld [vmem:[%s4 + $0x4] sm:$0xf]
        %v870 = vld [vmem:[%s4 + $0x8] sm:$0xf]
        %v871 = vld [vmem:[%s4 + $0xc] sm:$0xf]
        %v872 = vld [vmem:[%s5] sm:$0x1]
        %v874 = vlaneseq
        %v875 = vshrl.u32 %v874, 7
        %v876 = vsub.s32 0, %v875
        %v877 = vrot.slane %v872, %v876
        %v883 = vunpack.c.l.b16 %v868
        %v884 = vunpack.c.l.b16 %v869
        %v885 = vunpack.c.l.b16 %v870
        %v886 = vunpack.c.l.b16 %v871
        %v887 = vpack.c.b16 %v884, %v883
        %v888 = vpack.c.b16 %v886, %v885
        %v892 = vsel %vm587, %v867, 0
        %894 = vmatprep.subr.bf16.mxu0 0
        %895 = vmatpush1.bf16.msra.mxu0 %v887
        %896 = vmatprep.subr.bf16.mxu0 0
        %897 = vmatpush1.bf16.msra.mxu0 %v888
        %898 = vmatprep.subr.bf16.mxu0 0
        %899 = vmatpush1.bf16.msra.mxu0 0
        %900 = vmatprep.subr.bf16.mxu0 0
        %901 = vmatpush1.bf16.msra.mxu0 0
        %902 = vmatprep.subr.bf16.mxu0 0
        %903 = vmatpush1.bf16.msra.mxu0 0
        %904 = vmatprep.subr.bf16.mxu0 0
        %905 = vmatpush1.bf16.msra.mxu0 0
        %906 = vmatprep.subr.bf16.mxu0 0
        %907 = vmatpush1.bf16.msra.mxu0 0
        %908 = vmatprep.subr.bf16.mxu0 0
        %909 = vmatpush1.bf16.msra.mxu0 0
        %910 = vmatprep.subr.bf16.mxu0 0
        %911 = vmatpush1.bf16.msra.mxu0 0
        %912 = vmatprep.subr.bf16.mxu0 0
        %913 = vmatpush1.bf16.msra.mxu0 0
        %914 = vmatprep.subr.bf16.mxu0 0
        %915 = vmatpush1.bf16.msra.mxu0 0
        %916 = vmatprep.subr.bf16.mxu0 0
        %917 = vmatpush1.bf16.msra.mxu0 0
        %918 = vmatprep.subr.bf16.mxu0 0
        %919 = vmatpush1.bf16.msra.mxu0 0
        %920 = vmatprep.subr.bf16.mxu0 0
        %921 = vmatpush1.bf16.msra.mxu0 0
        %922 = vmatprep.subr.bf16.mxu0 0
        %923 = vmatpush1.bf16.msra.mxu0 0
        %924 = vmatprep.subr.bf16.mxu0 0
        %925 = vmatpush1.bf16.msra.mxu0 0
        %926 = vmatprep.mubr.bf16.mxu0 0
        %927 = vmatmul.mubr.bf16.gmra.mrb[0].mxu0 %v892
        %v928 = vpop.f32.mrb[0].mxu0
        %v929 = vadd.f32 %v877, %v928
        %v930 = vpop.f32.mrb[0].mxu0
        %v931 = vpop.f32.mrb[0].mxu0
        %v932 = vpop.f32.mrb[0].mxu0
        %933 = vdwg.mxu0
        %v934 = vadd.f32 %v560, %v929
        %v935 = vld [vmem:[%s6] sm:$0x1]
        %v936 = vld [vmem:[%s7] sm:$0x1]
        %v937 = vsel %vm587, %v934, 0.0
        %938 = vadd.xlane.f32.xlu0 %v937
        %v939 = vpop.xlane.xlu0 %938
        %v940 = vrcp.pop 32.0
        %v941 = vmul.f32 %v939, %v940
        %v942 = vsub.f32 %v934, %v941
        %v943 = vmul.f32 %v942, %v942
        %v944 = vsel %vm587, %v943, 0.0
        %945 = vadd.xlane.f32.xlu0 %v944
        %v946 = vpop.xlane.xlu0 %945
        %v947 = vmul.f32 %v946, %v940
        %v948 = vadd.f32 %v947, 1e-12
        %v949 = vrsqrt.pop %v948
        %v950 = vmul.f32 %v942, %v949
        %v952 = vlaneseq
        %v953 = vshrl.u32 %v952, 7
        %v954 = vsub.s32 0, %v953
        %v955 = vrot.slane %v935, %v954
        %v957 = vmul.f32 %v950, %v955
        %v959 = vlaneseq
        %v960 = vshrl.u32 %v959, 7
        %v961 = vsub.s32 0, %v960
        %v962 = vrot.slane %v936, %v961
        %v964 = vadd.f32 %v957, %v962
        %v965 = vpack.c.bf16 %v964, %v964
        %v966 = vld [vmem:[%s8] sm:$0xf]
        %v967 = vld [vmem:[%s8 + $0x4] sm:$0xf]
        %v968 = vld [vmem:[%s8 + $0x8] sm:$0xf]
        %v969 = vld [vmem:[%s8 + $0xc] sm:$0xf]
        %v970 = vld [vmem:[%s9] sm:$0x1]
        %v972 = vlaneseq
        %v973 = vshrl.u32 %v972, 7
        %v974 = vsub.s32 0, %v973
        %v975 = vrot.slane %v970, %v974
        %v981 = vunpack.c.l.b16 %v966
        %v982 = vunpack.c.l.b16 %v967
        %v983 = vunpack.c.l.b16 %v968
        %v984 = vunpack.c.l.b16 %v969
        %v985 = vpack.c.b16 %v982, %v981
        %v986 = vpack.c.b16 %v984, %v983
        %v990 = vsel %vm587, %v965, 0
        %992 = vmatprep.subr.bf16.mxu0 0
        %993 = vmatpush1.bf16.msra.mxu0 %v985
        %994 = vmatprep.subr.bf16.mxu0 0
        %995 = vmatpush1.bf16.msra.mxu0 %v986
        %996 = vmatprep.subr.bf16.mxu0 0
        %997 = vmatpush1.bf16.msra.mxu0 0
        %998 = vmatprep.subr.bf16.mxu0 0
        %999 = vmatpush1.bf16.msra.mxu0 0
        %1000 = vmatprep.subr.bf16.mxu0 0
        %1001 = vmatpush1.bf16.msra.mxu0 0
        %1002 = vmatprep.subr.bf16.mxu0 0
        %1003 = vmatpush1.bf16.msra.mxu0 0
        %1004 = vmatprep.subr.bf16.mxu0 0
        %1005 = vmatpush1.bf16.msra.mxu0 0
        %1006 = vmatprep.subr.bf16.mxu0 0
        %1007 = vmatpush1.bf16.msra.mxu0 0
        %1008 = vmatprep.subr.bf16.mxu0 0
        %1009 = vmatpush1.bf16.msra.mxu0 0
        %1010 = vmatprep.subr.bf16.mxu0 0
        %1011 = vmatpush1.bf16.msra.mxu0 0
        %1012 = vmatprep.subr.bf16.mxu0 0
        %1013 = vmatpush1.bf16.msra.mxu0 0
        %1014 = vmatprep.subr.bf16.mxu0 0
        %1015 = vmatpush1.bf16.msra.mxu0 0
        %1016 = vmatprep.subr.bf16.mxu0 0
        %1017 = vmatpush1.bf16.msra.mxu0 0
        %1018 = vmatprep.subr.bf16.mxu0 0
        %1019 = vmatpush1.bf16.msra.mxu0 0
        %1020 = vmatprep.subr.bf16.mxu0 0
        %1021 = vmatpush1.bf16.msra.mxu0 0
        %1022 = vmatprep.subr.bf16.mxu0 0
        %1023 = vmatpush1.bf16.msra.mxu0 0
        %1024 = vmatprep.mubr.bf16.mxu0 0
        %1025 = vmatmul.mubr.bf16.gmra.mrb[0].mxu0 %v990
        %v1026 = vpop.f32.mrb[0].mxu0
        %v1027 = vadd.f32 %v975, %v1026
        %v1028 = vpop.f32.mrb[0].mxu0
        %v1029 = vpop.f32.mrb[0].mxu0
        %v1030 = vpop.f32.mrb[0].mxu0
        %1031 = vdwg.mxu0
        %v1032 = vmul.f32 %v1027, 0.5
        %v1033 = vmul.f32 %v1027, 0.044715
        %v1034 = vmul.f32 %v1033, %v1027
        %v1035 = vmul.f32 %v1034, %v1027
        %v1036 = vadd.f32 %v1027, %v1035
        %v1037 = vmul.f32 %v1036, 0.7978846
        %v1038 = vtanh.pop %v1037
        %v1039 = vadd.f32 %v1038, 1.0
        %v1040 = vmul.f32 %v1032, %v1039
        %v1041 = vpack.c.bf16 %v1040, %v1040
        %v1042 = vld [vmem:[%s10] sm:$0xf]
        %v1043 = vld [vmem:[%s10 + $0x4] sm:$0xf]
        %v1044 = vld [vmem:[%s10 + $0x8] sm:$0xf]
        %v1045 = vld [vmem:[%s10 + $0xc] sm:$0xf]
        %v1046 = vld [vmem:[%s10 + $0x10] sm:$0xf]
        %v1047 = vld [vmem:[%s10 + $0x14] sm:$0xf]
        %v1048 = vld [vmem:[%s10 + $0x18] sm:$0xf]
        %v1049 = vld [vmem:[%s10 + $0x1c] sm:$0xf]
        %v1050 = vld [vmem:[%s11] sm:$0x1]
        %v1052 = vlaneseq
        %v1053 = vshrl.u32 %v1052, 7
        %v1054 = vsub.s32 0, %v1053
        %v1055 = vrot.slane %v1050, %v1054
        %v1065 = vunpack.c.l.b16 %v1042
        %v1066 = vunpack.c.l.b16 %v1043
        %v1067 = vunpack.c.l.b16 %v1044
        %v1068 = vunpack.c.l.b16 %v1045
        %v1069 = vunpack.c.l.b16 %v1046
        %v1070 = vunpack.c.l.b16 %v1047
        %v1071 = vunpack.c.l.b16 %v1048
        %v1072 = vunpack.c.l.b16 %v1049
        %v1073 = vpack.c.b16 %v1066, %v1065
        %v1074 = vpack.c.b16 %v1068, %v1067
        %v1075 = vpack.c.b16 %v1070, %v1069
        %v1076 = vpack.c.b16 %v1072, %v1071
        %vm1081 = vcmask 523264
        %v1083 = vsel %vm1081, %v1041, 0
        %1085 = vmatprep.subr.bf16.mxu0 0
        %1086 = vmatpush1.bf16.msra.mxu0 %v1073
        %1087 = vmatprep.subr.bf16.mxu0 0
        %1088 = vmatpush1.bf16.msra.mxu0 %v1074
        %1089 = vmatprep.subr.bf16.mxu0 0
        %1090 = vmatpush1.bf16.msra.mxu0 %v1075
        %1091 = vmatprep.subr.bf16.mxu0 0
        %1092 = vmatpush1.bf16.msra.mxu0 %v1076
        %1093 = vmatprep.subr.bf16.mxu0 0
        %1094 = vmatpush1.bf16.msra.mxu0 0
        %1095 = vmatprep.subr.bf16.mxu0 0
        %1096 = vmatpush1.bf16.msra.mxu0 0
        %1097 = vmatprep.subr.bf16.mxu0 0
        %1098 = vmatpush1.bf16.msra.mxu0 0
        %1099 = vmatprep.subr.bf16.mxu0 0
        %1100 = vmatpush1.bf16.msra.mxu0 0
        %1101 = vmatprep.subr.bf16.mxu0 0
        %1102 = vmatpush1.bf16.msra.mxu0 0
        %1103 = vmatprep.subr.bf16.mxu0 0
        %1104 = vmatpush1.bf16.msra.mxu0 0
        %1105 = vmatprep.subr.bf16.mxu0 0
        %1106 = vmatpush1.bf16.msra.mxu0 0
        %1107 = vmatprep.subr.bf16.mxu0 0
        %1108 = vmatpush1.bf16.msra.mxu0 0
        %1109 = vmatprep.subr.bf16.mxu0 0
        %1110 = vmatpush1.bf16.msra.mxu0 0
        %1111 = vmatprep.subr.bf16.mxu0 0
        %1112 = vmatpush1.bf16.msra.mxu0 0
        %1113 = vmatprep.subr.bf16.mxu0 0
        %1114 = vmatpush1.bf16.msra.mxu0 0
        %1115 = vmatprep.subr.bf16.mxu0 0
        %1116 = vmatpush1.bf16.msra.mxu0 0
        %1117 = vmatprep.mubr.bf16.mxu0 0
        %1118 = vmatmul.mubr.bf16.gmra.mrb[0].mxu0 %v1083
        %v1119 = vpop.f32.mrb[0].mxu0
        %v1120 = vadd.f32 %v1055, %v1119
        %v1121 = vpop.f32.mrb[0].mxu0
        %v1122 = vpop.f32.mrb[0].mxu0
        %v1123 = vpop.f32.mrb[0].mxu0
        %1124 = vdwg.mxu0
        %v1125 = vadd.f32 %v964, %v1120
        %v1126 = vld [vmem:[%s12] sm:$0x1]
        %v1127 = vld [vmem:[%s13] sm:$0x1]
        %v1128 = vsel %vm587, %v1125, 0.0
        %1129 = vadd.xlane.f32.xlu0 %v1128
        %v1130 = vpop.xlane.xlu0 %1129
        %v1131 = vmul.f32 %v1130, %v940
        %v1132 = vsub.f32 %v1125, %v1131
        %v1133 = vmul.f32 %v1132, %v1132
        %v1134 = vsel %vm587, %v1133, 0.0
        %1135 = vadd.xlane.f32.xlu0 %v1134
        %v1136 = vpop.xlane.xlu0 %1135
        %v1137 = vmul.f32 %v1136, %v940
        %v1138 = vadd.f32 %v1137, 1e-12
        %v1139 = vrsqrt.pop %v1138
        %v1140 = vmul.f32 %v1132, %v1139
        %v1142 = vlaneseq
        %v1143 = vshrl.u32 %v1142, 7
        %v1144 = vsub.s32 0, %v1143
        %v1145 = vrot.slane %v1126, %v1144
        %v1147 = vmul.f32 %v1140, %v1145
        %v1149 = vlaneseq
        %v1150 = vshrl.u32 %v1149, 7
        %v1151 = vsub.s32 0, %v1150
        %v1152 = vrot.slane %v1127, %v1151
        %v1154 = vadd.f32 %v1147, %v1152
        %v1155 = vpack.c.bf16 %v1154, %v1154
        %v1156 = vld [vmem:[%s14] sm:$0xf]
        %v1157 = vld [vmem:[%s14 + $0x4] sm:$0xf]
        %v1158 = vld [vmem:[%s14 + $0x8] sm:$0xf]
        %v1159 = vld [vmem:[%s14 + $0xc] sm:$0xf]
        %v1160 = vld [vmem:[%s15] sm:$0x1]
        %v1165 = vunpack.c.l.b16 %v1156
        %v1166 = vunpack.c.l.b16 %v1157
        %v1167 = vunpack.c.l.b16 %v1158
        %v1168 = vunpack.c.l.b16 %v1159
        %v1169 = vpack.c.b16 %v1166, %v1165
        %v1170 = vpack.c.b16 %v1168, %v1167
        %v1174 = vsel %vm587, %v1155, 0
        %1176 = vmatprep.subr.bf16.mxu0 0
        %1177 = vmatpush1.bf16.msra.mxu0 %v1169
        %1178 = vmatprep.subr.bf16.mxu0 0
        %1179 = vmatpush1.bf16.msra.mxu0 %v1170
        %1180 = vmatprep.subr.bf16.mxu0 0
        %1181 = vmatpush1.bf16.msra.mxu0 0
        %1182 = vmatprep.subr.bf16.mxu0 0
        %1183 = vmatpush1.bf16.msra.mxu0 0
        %1184 = vmatprep.subr.bf16.mxu0 0
        %1185 = vmatpush1.bf16.msra.mxu0 0
        %1186 = vmatprep.subr.bf16.mxu0 0
        %1187 = vmatpush1.bf16.msra.mxu0 0
        %1188 = vmatprep.subr.bf16.mxu0 0
        %1189 = vmatpush1.bf16.msra.mxu0 0
        %1190 = vmatprep.subr.bf16.mxu0 0
        %1191 = vmatpush1.bf16.msra.mxu0 0
        %1192 = vmatprep.subr.bf16.mxu0 0
        %1193 = vmatpush1.bf16.msra.mxu0 0
        %1194 = vmatprep.subr.bf16.mxu0 0
        %1195 = vmatpush1.bf16.msra.mxu0 0
        %1196 = vmatprep.subr.bf16.mxu0 0
        %1197 = vmatpush1.bf16.msra.mxu0 0
        %1198 = vmatprep.subr.bf16.mxu0 0
        %1199 = vmatpush1.bf16.msra.mxu0 0
        %1200 = vmatprep.subr.bf16.mxu0 0
        %1201 = vmatpush1.bf16.msra.mxu0 0
        %1202 = vmatprep.subr.bf16.mxu0 0
        %1203 = vmatpush1.bf16.msra.mxu0 0
        %1204 = vmatprep.subr.bf16.mxu0 0
        %1205 = vmatpush1.bf16.msra.mxu0 0
        %1206 = vmatprep.subr.bf16.mxu0 0
        %1207 = vmatpush1.bf16.msra.mxu0 0
        %1208 = vmatprep.mubr.bf16.mxu0 0
        %1209 = vmatmul.mubr.bf16.gmra.mrb[0].mxu0 %v1174
        %v1210 = vpop.f32.mrb[0].mxu0
        %v1211 = vadd.f32 %v1160, %v1210
        %v1212 = vpop.f32.mrb[0].mxu0
        %v1213 = vpop.f32.mrb[0].mxu0
        %v1214 = vpop.f32.mrb[0].mxu0
        %1215 = vdwg.mxu0
        %v1216 = vmax.f32 %v1211, 0.0
        %v1217 = vpack.c.bf16 %v1216, %v1216
        %v1218 = vld [vmem:[%s16] sm:$0xf]
        %v1219 = vld [vmem:[%s16 + $0x4] sm:$0xf]
        %v1220 = vld [vmem:[%s17] sm:$0x1]
        %v1223 = vunpack.c.l.b16 %v1218
        %v1224 = vunpack.c.l.b16 %v1219
        %v1225 = vpack.c.b16 %v1224, %v1223
        %v1228 = vsel %vm635, %v1217, 0
        %1230 = vmatprep.subr.bf16.mxu0 0
        %1231 = vmatpush1.bf16.msra.mxu0 %v1225
        %1232 = vmatprep.subr.bf16.mxu0 0
        %1233 = vmatpush1.bf16.msra.mxu0 0
        %1234 = vmatprep.subr.bf16.mxu0 0
        %1235 = vmatpush1.bf16.msra.mxu0 0
        %1236 = vmatprep.subr.bf16.mxu0 0
        %1237 = vmatpush1.bf16.msra.mxu0 0
        %1238 = vmatprep.subr.bf16.mxu0 0
        %1239 = vmatpush1.bf16.msra.mxu0 0
        %1240 = vmatprep.subr.bf16.mxu0 0
        %1241 = vmatpush1.bf16.msra.mxu0 0
        %1242 = vmatprep.subr.bf16.mxu0 0
        %1243 = vmatpush1.bf16.msra.mxu0 0
        %1244 = vmatprep.subr.bf16.mxu0 0
        %1245 = vmatpush1.bf16.msra.mxu0 0
        %1246 = vmatprep.subr.bf16.mxu0 0
        %1247 = vmatpush1.bf16.msra.mxu0 0
        %1248 = vmatprep.subr.bf16.mxu0 0
        %1249 = vmatpush1.bf16.msra.mxu0 0
        %1250 = vmatprep.subr.bf16.mxu0 0
        %1251 = vmatpush1.bf16.msra.mxu0 0
        %1252 = vmatprep.subr.bf16.mxu0 0
        %1253 = vmatpush1.bf16.msra.mxu0 0
        %1254 = vmatprep.subr.bf16.mxu0 0
        %1255 = vmatpush1.bf16.msra.mxu0 0
        %1256 = vmatprep.subr.bf16.mxu0 0
        %1257 = vmatpush1.bf16.msra.mxu0 0
        %1258 = vmatprep.subr.bf16.mxu0 0
        %1259 = vmatpush1.bf16.msra.mxu0 0
        %1260 = vmatprep.subr.bf16.mxu0 0
        %1261 = vmatpush1.bf16.msra.mxu0 0
        %1262 = vmatprep.mubr.bf16.mxu0 0
        %1263 = vmatmul.mubr.bf16.gmra.mrb[0].mxu0 %v1228
        %v1264 = vpop.f32.mrb[0].mxu0
        %v1265 = vadd.f32 %v1220, %v1264
        %v1266 = vpop.f32.mrb[0].mxu0
        %v1267 = vpop.f32.mrb[0].mxu0
        %v1268 = vpop.f32.mrb[0].mxu0
        %1269 = vdwg.mxu0
        %s1270 = scalar_lea.vmem [#allocation2], %s30
        %vm1271 = vcmask 8192
        %1272 = vst.msk [vmem:[%s1270] sm:$0x1] %vm1271, %v1265
        // Predicated region
        $region93: #{_lambda_.3} parent=91 // pred_check
          %p1273 = pneg %p426
        $region94: #{_lambda_.3} parent=91 // pred_check_branch
          %1275 = sbr.rel (%p1273) target = $region96
        $region95: #{_lambda_.3} parent=91 // pred_region
          %s1277 = ssub.s32 32, 32
          %1278 = vsyncadd [#allocation3], %s1277
          %s1280 = sshll.u32 [#allocation2], 4
          %s1281 = int_to_ptr.vmem [resolvable:$true] %s1280
          %1283 = dma.vmem_to_hbm [thread:$0]  %s1281, 32, %s18, [#allocation3]
        $region96: #{_lambda_.3} parent=91 // pred_fallthru
          _
        // Predicated region
        $region97: #{_lambda_.3} parent=91 // pred_check
          %p1284 = pneg %p426
        $region98: #{_lambda_.3} parent=91 // pred_check_branch
          %1286 = sbr.rel (%p1284) target = $region100
        $region99: #{_lambda_.3} parent=91 // pred_region
          %1287 = dma.done [#allocation3], 32
        $region100: #{_lambda_.3} parent=91 // pred_fallthru
          _
      $region92: #{_lambda_.3} parent=5 // pred_fallthru
        _
      %p1288 = scmp.le.s32.totalorder 2, %s25
      // Predicated region
      $region101: #{_lambda_.3} parent=5 // pred_check
        %p1289 = pneg %p1288
      $region102: #{_lambda_.3} parent=5 // pred_check_branch
        %1291 = sbr.rel (%p1289) target = $region104
      $region103: #{_lambda_.3} parent=5 // pred_region
        %s1292 = ssub.s32 %s25, 2
      $region104: #{_lambda_.3} parent=5 // pred_fallthru
        _
    $region6: #{_lambda_.3} parent=1 // loop_footer
      %s29 = sadd.s32 1, %s25
    $region7: #{_lambda_.3} parent=1 // loop_footer_branch
      %24 = sbr.rel target = $region3
    $region8: #{_lambda_.3} parent=1 // loop_exit
      _
    %1293 = vsyncpa [#allocation3], 1
    %s1294 = scalar_lea.sflag [#allocation3], 1
    %1295 = vsyncpa %s1294, 1

</llo_original>
